<compile_context>
chip_gen: v5e
topology: v5e:2x2
jax: 0.10.0
libtpu: 0.0.40
codegen_flags: <defaults>
</compile_context>

<pallas_src>
import jax
import jax.numpy as jnp
from jax.experimental import pallas as pl
from jax.experimental.pallas import tpu as pltpu


def _round_up(a, b):
    return ((a + b - 1) // b) * b


def _pos_embed_kernel(const_ref, pts_ref, out_ref):
    # const_ref: (3, 2F) resident f32 table
    #   row 0: cy[j] = scale/dim_t[j]    for j <  F (y half), 0 otherwise
    #   row 1: cx[j] = scale/dim_t[j-F]  for j >= F (x half), 0 otherwise
    #   row 2: phase[j] = 0 (even j -> sin) or pi/2 (odd j -> cos = sin(a+pi/2))
    # pts_ref: (tn, C) block of the points; column 0 = x, column 1 = y.
    x = pts_ref[:, 0:1]                 # (tn, 1)
    y = pts_ref[:, 1:2]                 # (tn, 1)
    cy = const_ref[0:1, :]              # (1, 2F)
    cx = const_ref[1:2, :]
    ph = const_ref[2:3, :]
    angle = y * cy + x * cx + ph        # exact f32 VPU math (2 mul + 2 add / elem)
    out_ref[...] = jnp.sin(angle).astype(out_ref.dtype)


def position_embedding_points(points, num_pos_feats=64, scale=100,
                              temperature=100000.0, tile_n=4096,
                              out_dtype=jnp.float32,
                              vmem_tile_budget_bytes=12 * 1024 * 1024):
    """Pallas TPU implementation of PositionEmbeddingPoints.forward.

    points: (N, C) array with C >= 2; column 0 = x, column 1 = y.
    Returns (N, 2*num_pos_feats) of `out_dtype` = concat([pos_y, pos_x], axis=1).
    (The PyTorch module scales the input tensor in place; that side effect is
    intentionally not replicated — only the returned value matches.)
    """
    N, C = points.shape
    assert C >= 2, "points must have at least 2 columns (x, y)"
    assert num_pos_feats % 2 == 0, "num_pos_feats must be even"
    two_f = 2 * num_pos_feats

    pts = points.astype(jnp.float32)     # no column slice: avoids an extra XLA pass

    # ---- per-lane constant table, computed once outside the kernel ----------
    s = jnp.float32(1.0 if scale is None else scale)
    j = jnp.arange(num_pos_feats, dtype=jnp.float32)
    dim_t = jnp.float32(temperature) ** (2.0 * jnp.floor(j / 2.0) / num_pos_feats)
    inv = s / dim_t                                       # scale folded in
    phase_half = jnp.where(jnp.arange(num_pos_feats) % 2 == 0,
                           0.0, jnp.pi / 2.0).astype(jnp.float32)
    zeros_f = jnp.zeros((num_pos_feats,), jnp.float32)
    cy = jnp.concatenate([inv, zeros_f])                  # y coeff on first F lanes
    cx = jnp.concatenate([zeros_f, inv])                  # x coeff on last F lanes
    ph = jnp.concatenate([phase_half, phase_half])
    const = jnp.stack([cy, cx, ph], axis=0)               # (3, 2F) f32

    # ---- row-tile selection --------------------------------------------------
    ROW = 16                                   # covers f32 (8) and bf16 (16) sublane tiling
    lane_pad = lambda n: _round_up(max(int(n), 1), 128)
    out_row_bytes = lane_pad(two_f) * jnp.dtype(out_dtype).itemsize
    in_row_bytes = lane_pad(C) * 4             # (tn, C) block is lane-padded in VMEM
    per_row = 2 * (out_row_bytes + in_row_bytes)          # double-buffered in + out
    tn_budget = max(ROW, (vmem_tile_budget_bytes // per_row) // ROW * ROW)
    tn_two_steps = _round_up(pl.cdiv(N, 2), ROW)          # keep >= 2 grid steps (v7x)
    tn = max(ROW, min(_round_up(int(tile_n), ROW), tn_budget, tn_two_steps))
    grid = (pl.cdiv(N, tn),)                              # partial last block is masked

    out = pl.pallas_call(
        _pos_embed_kernel,
        out_shape=jax.ShapeDtypeStruct((N, two_f), out_dtype),
        grid_spec=pltpu.PrefetchScalarGridSpec(
            num_scalar_prefetch=0,
            grid=grid,
            in_specs=[
                pl.BlockSpec((3, two_f), lambda i: (0, 0)),   # resident constants
                pl.BlockSpec((tn, C), lambda i: (i, 0)),      # point coordinates
            ],
            out_specs=pl.BlockSpec((tn, two_f), lambda i: (i, 0)),
        ),
        compiler_params=pltpu.CompilerParams(
            dimension_semantics=("parallel",),     # shard row tiles across TCs (v7x)
            vmem_limit_bytes=32 * 1024 * 1024),    # lift v5e's 16 MiB default
    )(const, pts)
    return out


def _reference(points, num_pos_feats=64, scale=100, temperature=100000.0):
    """Pure-JAX reference mirroring the PyTorch forward exactly."""
    x_embed = points[:, 0]
    y_embed = points[:, 1]
    if scale is not None:
        x_embed = x_embed * scale
        y_embed = y_embed * scale
    dim_t = jnp.arange(num_pos_feats, dtype=jnp.float32)
    dim_t = temperature ** (2.0 * (dim_t // 2) / num_pos_feats)
    pos_x = x_embed[:, None] / dim_t[None, :]
    pos_y = y_embed[:, None] / dim_t[None, :]
    pos_x = jnp.stack((jnp.sin(pos_x[:, 0::2]), jnp.cos(pos_x[:, 1::2])),
                      axis=2).reshape(points.shape[0], -1)
    pos_y = jnp.stack((jnp.sin(pos_y[:, 0::2]), jnp.cos(pos_y[:, 1::2])),
                      axis=2).reshape(points.shape[0], -1)
    return jnp.concatenate((pos_y, pos_x), axis=1)


if __name__ == "__main__":
    key = jax.random.PRNGKey(0)

    # Primary config: module defaults (F=64 -> lane-dense 128-wide output),
    # small N with extra columns to exercise the in-kernel column selection
    # and a multi-step grid (2 row tiles of 160).
    N, C = 320, 4
    num_pos_feats = 64
    points = jax.random.uniform(key, (N, C), dtype=jnp.float32)

    out = position_embedding_points(points, num_pos_feats=num_pos_feats)
    out = jax.block_until_ready(out)
    ref = _reference(points, num_pos_feats=num_pos_feats)
    assert out.shape == (N, 2 * num_pos_feats)
    assert jnp.allclose(out, ref, atol=2e-4, rtol=2e-4), "mismatch vs reference"

    # Secondary config: N not a multiple of the row tile and 2F not a multiple
    # of 128 -> exercises masked row writeback and masked lane stores
    # (no padded output + no post-kernel slice).
    N2, F2 = 50, 48
    pts_b = jax.random.uniform(jax.random.PRNGKey(1), (N2, 2), dtype=jnp.float32)
    out_b = jax.block_until_ready(
        position_embedding_points(pts_b, num_pos_feats=F2))
    ref_b = _reference(pts_b, num_pos_feats=F2)
    assert out_b.shape == (N2, 2 * F2)
    assert jnp.allclose(out_b, ref_b, atol=2e-4, rtol=2e-4), "mismatch (odd sizes)"

    print("KERNEL_OK")
</pallas_src>

<mosaic_0001>
module attributes {stable_mosaic.version = 11 : i64} {
  func.func @_pos_embed_kernel(%arg0: i32, %arg1: memref<3x128xf32, #tpu.memory_space<vmem>>, %arg2: memref<160x4xf32, #tpu.memory_space<vmem>>, %arg3: memref<160x128xf32, #tpu.memory_space<vmem>>) attributes {dimension_semantics = [#tpu.dimension_semantics<parallel>], iteration_bounds = array<i64: 2>, scalar_prefetch = 0 : i64, scratch_operands = 0 : i64, tpu.core_type = #tpu.core_type<tc>, window_params = [{pipeline_mode = #tpu.pipeline_mode<synchronous>, transform_indices = @transform_0, window_bounds = array<i64: 3, 128>}, {transform_indices = @transform_1, window_bounds = array<i64: 160, 4>}, {transform_indices = @transform_2, window_bounds = array<i64: 160, 128>}]} {
    %c0 = arith.constant 0 : index
    %c0_0 = arith.constant 0 : index
    %0 = vector.load %arg2[%c0, %c0_0] : memref<160x4xf32, #tpu.memory_space<vmem>>, vector<160x1xf32>
    %c0_1 = arith.constant 0 : index
    %c1 = arith.constant 1 : index
    %1 = vector.load %arg2[%c0_1, %c1] : memref<160x4xf32, #tpu.memory_space<vmem>>, vector<160x1xf32>
    %c0_2 = arith.constant 0 : index
    %c0_3 = arith.constant 0 : index
    %2 = vector.load %arg1[%c0_2, %c0_3] : memref<3x128xf32, #tpu.memory_space<vmem>>, vector<1x128xf32>
    %c1_4 = arith.constant 1 : index
    %c0_5 = arith.constant 0 : index
    %3 = vector.load %arg1[%c1_4, %c0_5] : memref<3x128xf32, #tpu.memory_space<vmem>>, vector<1x128xf32>
    %c2 = arith.constant 2 : index
    %c0_6 = arith.constant 0 : index
    %4 = vector.load %arg1[%c2, %c0_6] : memref<3x128xf32, #tpu.memory_space<vmem>>, vector<1x128xf32>
    %5 = vector.broadcast %1 : vector<160x1xf32> to vector<160x128xf32>
    %6 = vector.broadcast %2 : vector<1x128xf32> to vector<160x128xf32>
    %7 = arith.mulf %5, %6 : vector<160x128xf32>
    %8 = vector.broadcast %0 : vector<160x1xf32> to vector<160x128xf32>
    %9 = vector.broadcast %3 : vector<1x128xf32> to vector<160x128xf32>
    %10 = arith.mulf %8, %9 : vector<160x128xf32>
    %11 = arith.addf %7, %10 : vector<160x128xf32>
    %12 = vector.broadcast %4 : vector<1x128xf32> to vector<160x128xf32>
    %13 = arith.addf %11, %12 : vector<160x128xf32>
    %14 = math.sin %13 : vector<160x128xf32>
    %c0_7 = arith.constant 0 : index
    %c0_8 = arith.constant 0 : index
    %15 = vector.load %arg3[%c0_7, %c0_8] : memref<160x128xf32, #tpu.memory_space<vmem>>, vector<160x128xf32>
    tpu.vector_store %arg3[%c0_7, %c0_8], %14 {strides = array<i32>} : memref<160x128xf32, #tpu.memory_space<vmem>>, vector<160x128xf32>,
    return
  }
  func.func @transform_0(%arg0: i32) -> (i32, i32) {
    %c0_i32 = arith.constant 0 : i32
    %c0_i32_0 = arith.constant 0 : i32
    %c0_i32_1 = arith.constant 0 : i32
    return %c0_i32, %c0_i32_0 : i32, i32
  }
  func.func @transform_1(%arg0: i32) -> (i32, i32) {
    %c0_i32 = arith.constant 0 : i32
    %c0_i32_0 = arith.constant 0 : i32
    return %arg0, %c0_i32 : i32, i32
  }
  func.func @transform_2(%arg0: i32) -> (i32, i32) {
    %c0_i32 = arith.constant 0 : i32
    %c0_i32_0 = arith.constant 0 : i32
    return %arg0, %c0_i32 : i32, i32
  }
}

</mosaic_0001>

<llo_original>
// kernel: tpu_custom_call.1
$region0: #{tpu_custom_call.1}
  #allocation0 [shape = 'u32[]', space=smem, size = 0x4, offset = 0x4, fixed_abs, tag = 'smem constant byte address 0x4 - core index']
  #allocation1 [shape = 'u32[72,128]{1,0:T(1,128)}', space=vmem, size = 0x9000, scoped, tag = 'internal scratch']
  %s0 = inlined_call_operand.vmem [shape: f32[3,128], index: 0, kind: input, shape index: {}]
  %s1 = inlined_call_operand.vmem [shape: f32[320,4], index: 1, kind: input, shape index: {}]
  %s2 = inlined_call_operand.hbm [shape: f32[320,128], index: 2, kind: output, shape index: {}]
  %s3 = sld [smem:[#allocation0]]
  $region41: #{tpu_custom_call.1} parent=0
    _
  %s5 = ssub.s32 1, %s3
  %s6 = scalar_select 0, %s5, %s3
  $region1: #{tpu_custom_call.1} parent=0
    #allocation2 [shape = 'u8[163840]{0}', space=vmem, size = 0x28000, scoped, tag = 'output window, operand 0']
    #allocation3 [shape = 's32[2]{0}', space=sflag, size = 0x8, scoped, tag = 'scoped memory for tpu_custom_call.1']
    %7 = vsyncpa [#allocation3], 0
    %s8 = scalar_lea.sflag [#allocation3], 1
    %9 = vsyncpa %s8, 0
    loop: start=0, step=1, limit=4
    $region2: #{tpu_custom_call.1} parent=1 // loop_pre_header
      _
    $region3: #{tpu_custom_call.1} parent=1 // loop_header
      %s11 = sphi 0, %s15
      %p12 = scmp.ge.s32.totalorder %s11, 4
      %s19 = sphi 0, %s19
      %s21 = sphi 0, %s19
      %s22 = sphi 0, %s21
      %s36 = sphi 0, %s22
      %s42 = sphi 0, %s44
      %s45 = sphi 0, %s42
      %s46 = sphi 0, %s45
      %s62 = sphi 0, %s46
      %s68 = sphi 0, %s70
      %s71 = sphi 0, %s68
      %s72 = sphi 0, %s71
      %s88 = sphi 0, %s72
    $region4: #{tpu_custom_call.1} parent=1 // loop_header_branch
      %14 = sbr.rel (%p12) target = $region8
    $region5: #{tpu_custom_call.1} parent=1 // loop_body
      %s16 = ssub.s32 %s11, 1
      %s17 = ssub.s32 %s11, 2
      %s18 = sadd.s32 %s11, 1
      %s20 = sadd.s32 %s19, 1
      %p23 = scmp.eq.s32.totalorder %s11, 1
      %p24 = scmp.ne.s32.totalorder %s19, %s21
      %p25 = scmp.eq.s32.totalorder %s11, 0
      %p26 = por %p24, %p25
      %p27 = scmp.ne.s32.totalorder %s19, %s21
      %p28 = scmp.eq.s32.totalorder %s16, 1
      %p29 = por %p27, %p28
      %p30 = scmp.ne.s32.totalorder %s21, %s22
      %p31 = scmp.eq.s32.totalorder %s16, 0
      %p32 = por %p30, %p31
      %p33 = scmp.ne.s32.totalorder %s21, %s22
      %p34 = scmp.eq.s32.totalorder %s17, 1
      %p35 = por %p33, %p34
      %p37 = scmp.ne.s32.totalorder %s22, %s36
      %p38 = scmp.eq.s32.totalorder %s17, 0
      %p39 = por %p37, %p38
      %s40 = ssub.s32 %s11, %s18
      %p41 = scmp.eq.s32.totalorder %s40, 0
      %s43 = sadd.s32 %s42, 1
      %s44 = scalar_select %p41, %s42, %s43
      %p47 = pneg %p41
      %p48 = scmp.eq.s32.totalorder %s11, 1
      %p49 = por %p47, %p48
      %p50 = scmp.ne.s32.totalorder %s42, %s45
      %p51 = scmp.eq.s32.totalorder %s11, 0
      %p52 = por %p50, %p51
      %p53 = scmp.ne.s32.totalorder %s42, %s45
      %p54 = scmp.eq.s32.totalorder %s16, 1
      %p55 = por %p53, %p54
      %p56 = scmp.ne.s32.totalorder %s45, %s46
      %p57 = scmp.eq.s32.totalorder %s16, 0
      %p58 = por %p56, %p57
      %p59 = scmp.ne.s32.totalorder %s45, %s46
      %p60 = scmp.eq.s32.totalorder %s17, 1
      %p61 = por %p59, %p60
      %p63 = scmp.ne.s32.totalorder %s46, %s62
      %p64 = scmp.eq.s32.totalorder %s17, 0
      %p65 = por %p63, %p64
      %s66 = ssub.s32 %s11, %s18
      %p67 = scmp.eq.s32.totalorder %s66, 0
      %s69 = sadd.s32 %s68, 1
      %s70 = scalar_select %p67, %s68, %s69
      %p73 = pneg %p67
      %p74 = scmp.eq.s32.totalorder %s11, 1
      %p75 = por %p73, %p74
      %p76 = scmp.ne.s32.totalorder %s68, %s71
      %p77 = scmp.eq.s32.totalorder %s11, 0
      %p78 = por %p76, %p77
      %p79 = scmp.ne.s32.totalorder %s68, %s71
      %p80 = scmp.eq.s32.totalorder %s16, 1
      %p81 = por %p79, %p80
      %p82 = scmp.ne.s32.totalorder %s71, %s72
      %p83 = scmp.eq.s32.totalorder %s16, 0
      %p84 = por %p82, %p83
      %p85 = scmp.ne.s32.totalorder %s71, %s72
      %p86 = scmp.eq.s32.totalorder %s17, 1
      %p87 = por %p85, %p86
      %p89 = scmp.ne.s32.totalorder %s72, %s88
      %p90 = scmp.eq.s32.totalorder %s17, 0
      %p91 = por %p89, %p90
      %p92 = scmp.le.s32.totalorder 1, %s11
      %p93 = scmp.lt.s32.totalorder %s11, 3
      %p94 = pnand %p92, %p93
      %p95 = pneg %p94
      // Predicated region
      $region9: #{tpu_custom_call.1} parent=5 // pred_check
        _
      $region10: #{tpu_custom_call.1} parent=5 // pred_check_branch
        %97 = sbr.rel (%p94) target = $region12
      $region11: #{tpu_custom_call.1} parent=5 // pred_region
        %s98 = ssub.s32 %s11, 1
        // Predicated region
        $region13: #{tpu_custom_call.1} parent=11 // pred_check
          %p99 = pneg %p32
        $region14: #{tpu_custom_call.1} parent=11 // pred_check_branch
          %101 = sbr.rel (%p99) target = $region16
        $region15: #{tpu_custom_call.1} parent=11 // pred_region
          _
        $region16: #{tpu_custom_call.1} parent=11 // pred_fallthru
          _
      $region12: #{tpu_custom_call.1} parent=5 // pred_fallthru
        _
      %p102 = scmp.lt.s32.totalorder %s11, 2
      // Predicated region
      $region17: #{tpu_custom_call.1} parent=5 // pred_check
        %p103 = pneg %p102
      $region18: #{tpu_custom_call.1} parent=5 // pred_check_branch
        %105 = sbr.rel (%p103) target = $region20
      $region19: #{tpu_custom_call.1} parent=5 // pred_region
        // Predicated region
        $region21: #{tpu_custom_call.1} parent=19 // pred_check
          %p106 = pneg %p52
        $region22: #{tpu_custom_call.1} parent=19 // pred_check_branch
          %108 = sbr.rel (%p106) target = $region24
        $region23: #{tpu_custom_call.1} parent=19 // pred_region
          %s109 = smul.u32 20, %s11
          %p110 = scmp.lt.s32.totalorder %s109, 39
          %s111 = scalar_select %p110, %s109, 39
          %s112 = smul.addr %s111, 8
          %s113 = scalar_lea.vmem %s1, %s112
          %s114 = smul.u32 20, %s11
        $region24: #{tpu_custom_call.1} parent=19 // pred_fallthru
          _
      $region20: #{tpu_custom_call.1} parent=5 // pred_fallthru
        _
      %p115 = scmp.le.s32.totalorder 1, %s11
      %p116 = scmp.lt.s32.totalorder %s11, 3
      %p117 = pnand %p115, %p116
      %p118 = pneg %p117
      // Predicated region
      $region25: #{tpu_custom_call.1} parent=5 // pred_check
        _
      $region26: #{tpu_custom_call.1} parent=5 // pred_check_branch
        %120 = sbr.rel (%p117) target = $region28
      $region27: #{tpu_custom_call.1} parent=5 // pred_region
        %s121 = ssub.s32 %s11, 1
        %p122 = pneg %p32
        %p123 = pneg %p29
        %s124 = smul.u32 20, %s16
        %p125 = scmp.lt.s32.totalorder %s124, 39
        %s126 = scalar_select %p125, %s124, 39
        %s127 = smul.addr %s126, 8
        %s128 = scalar_lea.vmem %s1, %s127
        %p129 = pneg %p58
        %p130 = pneg %p55
        %p131 = pneg %p84
        %p132 = pneg %p81
        %s133 = sand.u32 %s71, 1
        %s134 = scalar_lea.sflag [#allocation3], %s133
        %s135 = sand.u32 %s71, 1
        %s136 = smul.addr %s135, 160
        %s137 = scalar_lea.vmem [#allocation2], %s136
        %s138 = smul.u32 20, %s16
        %p139 = scmp.lt.s32.totalorder %s138, 39
        %s140 = scalar_select %p139, %s138, 39
        %s141 = smul.addr %s140, 8
        %s142 = scalar_lea.vmem %s1, %s141
        %s143 = smul.u32 20, %s16
        %s144 = smul.u32 20, %s16
        %v145 = vld [vmem:[%s142] sm:$0xff]
        %v146 = vld [vmem:[%s142 + $0x8] sm:$0xff]
        %v147 = vld [vmem:[%s142 + $0x10] sm:$0xff]
        %v148 = vld [vmem:[%s142 + $0x18] sm:$0xff]
        %v149 = vld [vmem:[%s142 + $0x20] sm:$0xff]
        %v150 = vld [vmem:[%s142 + $0x28] sm:$0xff]
        %v151 = vld [vmem:[%s142 + $0x30] sm:$0xff]
        %v152 = vld [vmem:[%s142 + $0x38] sm:$0xff]
        %v153 = vld [vmem:[%s142 + $0x40] sm:$0xff]
        %v154 = vld [vmem:[%s142 + $0x48] sm:$0xff]
        %v155 = vld [vmem:[%s142 + $0x50] sm:$0xff]
        %v156 = vld [vmem:[%s142 + $0x58] sm:$0xff]
        %v157 = vld [vmem:[%s142 + $0x60] sm:$0xff]
        %v158 = vld [vmem:[%s142 + $0x68] sm:$0xff]
        %v159 = vld [vmem:[%s142 + $0x70] sm:$0xff]
        %v160 = vld [vmem:[%s142 + $0x78] sm:$0xff]
        %v161 = vld [vmem:[%s142 + $0x80] sm:$0xff]
        %v162 = vld [vmem:[%s142 + $0x88] sm:$0xff]
        %v163 = vld [vmem:[%s142 + $0x90] sm:$0xff]
        %v164 = vld [vmem:[%s142 + $0x98] sm:$0xff]
        %v165 = vld [vmem:[%s0] sm:$0x1]
        %v166 = vld [vmem:[%s0 + $0x1] sm:$0x1]
        %v167 = vld [vmem:[%s0 + $0x2] sm:$0x1]
        %169 = vset.pattern.permute.xlu0 1
        %170 = vperm.xlu0 %169, %v145
        %v171 = vpop.permute.xlu0 %170
        %174 = vset.pattern.permute.xlu0 1
        %175 = vperm.xlu0 %174, %v146
        %v176 = vpop.permute.xlu0 %175
        %179 = vset.pattern.permute.xlu0 1
        %180 = vperm.xlu0 %179, %v147
        %v181 = vpop.permute.xlu0 %180
        %184 = vset.pattern.permute.xlu0 1
        %185 = vperm.xlu0 %184, %v148
        %v186 = vpop.permute.xlu0 %185
        %189 = vset.pattern.permute.xlu0 1
        %190 = vperm.xlu0 %189, %v149
        %v191 = vpop.permute.xlu0 %190
        %194 = vset.pattern.permute.xlu0 1
        %195 = vperm.xlu0 %194, %v150
        %v196 = vpop.permute.xlu0 %195
        %199 = vset.pattern.permute.xlu0 1
        %200 = vperm.xlu0 %199, %v151
        %v201 = vpop.permute.xlu0 %200
        %204 = vset.pattern.permute.xlu0 1
        %205 = vperm.xlu0 %204, %v152
        %v206 = vpop.permute.xlu0 %205
        %209 = vset.pattern.permute.xlu0 1
        %210 = vperm.xlu0 %209, %v153
        %v211 = vpop.permute.xlu0 %210
        %214 = vset.pattern.permute.xlu0 1
        %215 = vperm.xlu0 %214, %v154
        %v216 = vpop.permute.xlu0 %215
        %219 = vset.pattern.permute.xlu0 1
        %220 = vperm.xlu0 %219, %v155
        %v221 = vpop.permute.xlu0 %220
        %224 = vset.pattern.permute.xlu0 1
        %225 = vperm.xlu0 %224, %v156
        %v226 = vpop.permute.xlu0 %225
        %229 = vset.pattern.permute.xlu0 1
        %230 = vperm.xlu0 %229, %v157
        %v231 = vpop.permute.xlu0 %230
        %234 = vset.pattern.permute.xlu0 1
        %235 = vperm.xlu0 %234, %v158
        %v236 = vpop.permute.xlu0 %235
        %239 = vset.pattern.permute.xlu0 1
        %240 = vperm.xlu0 %239, %v159
        %v241 = vpop.permute.xlu0 %240
        %244 = vset.pattern.permute.xlu0 1
        %245 = vperm.xlu0 %244, %v160
        %v246 = vpop.permute.xlu0 %245
        %249 = vset.pattern.permute.xlu0 1
        %250 = vperm.xlu0 %249, %v161
        %v251 = vpop.permute.xlu0 %250
        %254 = vset.pattern.permute.xlu0 1
        %255 = vperm.xlu0 %254, %v162
        %v256 = vpop.permute.xlu0 %255
        %259 = vset.pattern.permute.xlu0 1
        %260 = vperm.xlu0 %259, %v163
        %v261 = vpop.permute.xlu0 %260
        %264 = vset.pattern.permute.xlu0 1
        %265 = vperm.xlu0 %264, %v164
        %v266 = vpop.permute.xlu0 %265
        %v268 = vperm.slane %v165, 0
        %v269 = vmul.f32 %v171, %v268
        %v270 = vmul.f32 %v176, %v268
        %v271 = vmul.f32 %v181, %v268
        %v272 = vmul.f32 %v186, %v268
        %v273 = vmul.f32 %v191, %v268
        %v274 = vmul.f32 %v196, %v268
        %v275 = vmul.f32 %v201, %v268
        %v276 = vmul.f32 %v206, %v268
        %v277 = vmul.f32 %v211, %v268
        %v278 = vmul.f32 %v216, %v268
        %v279 = vmul.f32 %v221, %v268
        %v280 = vmul.f32 %v226, %v268
        %v281 = vmul.f32 %v231, %v268
        %v282 = vmul.f32 %v236, %v268
        %v283 = vmul.f32 %v241, %v268
        %v284 = vmul.f32 %v246, %v268
        %v285 = vmul.f32 %v251, %v268
        %v286 = vmul.f32 %v256, %v268
        %v287 = vmul.f32 %v261, %v268
        %v288 = vmul.f32 %v266, %v268
        %289 = vset.pattern.permute.xlu0 0
        %290 = vperm.xlu0 %289, %v145
        %v291 = vpop.permute.xlu0 %290
        %293 = vset.pattern.permute.xlu0 0
        %294 = vperm.xlu0 %293, %v146
        %v295 = vpop.permute.xlu0 %294
        %297 = vset.pattern.permute.xlu0 0
        %298 = vperm.xlu0 %297, %v147
        %v299 = vpop.permute.xlu0 %298
        %301 = vset.pattern.permute.xlu0 0
        %302 = vperm.xlu0 %301, %v148
        %v303 = vpop.permute.xlu0 %302
        %305 = vset.pattern.permute.xlu0 0
        %306 = vperm.xlu0 %305, %v149
        %v307 = vpop.permute.xlu0 %306
        %309 = vset.pattern.permute.xlu0 0
        %310 = vperm.xlu0 %309, %v150
        %v311 = vpop.permute.xlu0 %310
        %313 = vset.pattern.permute.xlu0 0
        %314 = vperm.xlu0 %313, %v151
        %v315 = vpop.permute.xlu0 %314
        %317 = vset.pattern.permute.xlu0 0
        %318 = vperm.xlu0 %317, %v152
        %v319 = vpop.permute.xlu0 %318
        %321 = vset.pattern.permute.xlu0 0
        %322 = vperm.xlu0 %321, %v153
        %v323 = vpop.permute.xlu0 %322
        %325 = vset.pattern.permute.xlu0 0
        %326 = vperm.xlu0 %325, %v154
        %v327 = vpop.permute.xlu0 %326
        %329 = vset.pattern.permute.xlu0 0
        %330 = vperm.xlu0 %329, %v155
        %v331 = vpop.permute.xlu0 %330
        %333 = vset.pattern.permute.xlu0 0
        %334 = vperm.xlu0 %333, %v156
        %v335 = vpop.permute.xlu0 %334
        %337 = vset.pattern.permute.xlu0 0
        %338 = vperm.xlu0 %337, %v157
        %v339 = vpop.permute.xlu0 %338
        %341 = vset.pattern.permute.xlu0 0
        %342 = vperm.xlu0 %341, %v158
        %v343 = vpop.permute.xlu0 %342
        %345 = vset.pattern.permute.xlu0 0
        %346 = vperm.xlu0 %345, %v159
        %v347 = vpop.permute.xlu0 %346
        %349 = vset.pattern.permute.xlu0 0
        %350 = vperm.xlu0 %349, %v160
        %v351 = vpop.permute.xlu0 %350
        %353 = vset.pattern.permute.xlu0 0
        %354 = vperm.xlu0 %353, %v161
        %v355 = vpop.permute.xlu0 %354
        %357 = vset.pattern.permute.xlu0 0
        %358 = vperm.xlu0 %357, %v162
        %v359 = vpop.permute.xlu0 %358
        %361 = vset.pattern.permute.xlu0 0
        %362 = vperm.xlu0 %361, %v163
        %v363 = vpop.permute.xlu0 %362
        %365 = vset.pattern.permute.xlu0 0
        %366 = vperm.xlu0 %365, %v164
        %v367 = vpop.permute.xlu0 %366
        %v369 = vperm.slane %v166, 0
        %v370 = vmul.f32 %v291, %v369
        %v371 = vmul.f32 %v295, %v369
        %v372 = vmul.f32 %v299, %v369
        %v373 = vmul.f32 %v303, %v369
        %v374 = vmul.f32 %v307, %v369
        %v375 = vmul.f32 %v311, %v369
        %v376 = vmul.f32 %v315, %v369
        %v377 = vmul.f32 %v319, %v369
        %v378 = vmul.f32 %v323, %v369
        %v379 = vmul.f32 %v327, %v369
        %v380 = vmul.f32 %v331, %v369
        %v381 = vmul.f32 %v335, %v369
        %v382 = vmul.f32 %v339, %v369
        %v383 = vmul.f32 %v343, %v369
        %v384 = vmul.f32 %v347, %v369
        %v385 = vmul.f32 %v351, %v369
        %v386 = vmul.f32 %v355, %v369
        %v387 = vmul.f32 %v359, %v369
        %v388 = vmul.f32 %v363, %v369
        %v389 = vmul.f32 %v367, %v369
        %v390 = vadd.f32 %v269, %v370
        %v391 = vadd.f32 %v270, %v371
        %v392 = vadd.f32 %v271, %v372
        %v393 = vadd.f32 %v272, %v373
        %v394 = vadd.f32 %v273, %v374
        %v395 = vadd.f32 %v274, %v375
        %v396 = vadd.f32 %v275, %v376
        %v397 = vadd.f32 %v276, %v377
        %v398 = vadd.f32 %v277, %v378
        %v399 = vadd.f32 %v278, %v379
        %v400 = vadd.f32 %v279, %v380
        %v401 = vadd.f32 %v280, %v381
        %v402 = vadd.f32 %v281, %v382
        %v403 = vadd.f32 %v282, %v383
        %v404 = vadd.f32 %v283, %v384
        %v405 = vadd.f32 %v284, %v385
        %v406 = vadd.f32 %v285, %v386
        %v407 = vadd.f32 %v286, %v387
        %v408 = vadd.f32 %v287, %v388
        %v409 = vadd.f32 %v288, %v389
        %v410 = vperm.slane %v167, 0
        %v411 = vadd.f32 %v390, %v410
        %v412 = vadd.f32 %v391, %v410
        %v413 = vadd.f32 %v392, %v410
        %v414 = vadd.f32 %v393, %v410
        %v415 = vadd.f32 %v394, %v410
        %v416 = vadd.f32 %v395, %v410
        %v417 = vadd.f32 %v396, %v410
        %v418 = vadd.f32 %v397, %v410
        %v419 = vadd.f32 %v398, %v410
        %v420 = vadd.f32 %v399, %v410
        %v421 = vadd.f32 %v400, %v410
        %v422 = vadd.f32 %v401, %v410
        %v423 = vadd.f32 %v402, %v410
        %v424 = vadd.f32 %v403, %v410
        %v425 = vadd.f32 %v404, %v410
        %v426 = vadd.f32 %v405, %v410
        %v427 = vadd.f32 %v406, %v410
        %v428 = vadd.f32 %v407, %v410
        %v429 = vadd.f32 %v408, %v410
        %v430 = vadd.f32 %v409, %v410
        %v431 = vand.u32 2147483647, %v411
        %vm432 = vcmp.le.f32.partialorder %v431, 0.7853982
        %vm433 = vcmp.lt.s32.totalorder %v411, 0
        %v434 = vand.u32 %v411, 2139095040
        %v435 = vshrl.u32 %v434, 23
        %v436 = vsub.s32 %v435, 127
        %v437 = vand.u32 2147483647, %v411
        %v438 = vand.u32 %v437, 8388607
        %v439 = vor.u32 %v438, 8388608
        %v440 = vsub.s32 0, %v439
        %v441 = vadd.s32 %v436, 1
        %vm442 = vcmp.gt.s32.totalorder %v441, 0
        %v443 = vsel %vm442, %v441, 0
        %v444 = vshrl.u32 %v443, 5
        %v445 = vand.u32 %v443, 31
        %v446 = vsub.s32 32, %v445
        %v447 = vshrl.u32 683565275, %v446
        %v448 = vshll.u32 683565275, %v445
        %v449 = vshrl.u32 2475754826, %v446
        %v450 = vor.u32 %v448, %v449
        %v451 = vshll.u32 2475754826, %v445
        %v452 = vshrl.u32 2131351028, %v446
        %v453 = vor.u32 %v451, %v452
        %v454 = vshll.u32 2131351028, %v445
        %v455 = vshrl.u32 2102212464, %v446
        %v456 = vor.u32 %v454, %v455
        %v457 = vshll.u32 2102212464, %v445
        %v458 = vshrl.u32 920167782, %v446
        %v459 = vor.u32 %v457, %v458
        %v460 = vshll.u32 920167782, %v445
        %v461 = vshrl.u32 1326507024, %v446
        %v462 = vor.u32 %v460, %v461
        %vm463 = vcmp.lt.s32.totalorder %v444, 1
        %vm464 = vcmp.lt.s32.totalorder %v444, 2
        %vm465 = vcmp.lt.s32.totalorder %v444, 3
        %vm466 = vcmp.lt.s32.totalorder %v444, 4
        %v467 = vsel %vm463, %v447, %v450
        %v468 = vsel %vm466, %v456, 2102212464
        %v469 = vsel %vm465, %v453, %v468
        %v470 = vsel %vm464, %v467, %v469
        %v471 = vsel %vm463, %v450, %v453
        %v472 = vsel %vm466, %v459, 920167782
        %v473 = vsel %vm465, %v456, %v472
        %v474 = vsel %vm464, %v471, %v473
        %v475 = vsel %vm463, %v453, %v456
        %v476 = vsel %vm466, %v462, 1326507024
        %v477 = vsel %vm465, %v459, %v476
        %v478 = vsel %vm464, %v475, %v477
        %v479 = vshll.u32 %v439, 8
        %v480 = vand.u32 %v479, 65535
        %v481 = vshrl.u32 %v479, 16
        %v482 = vand.u32 %v478, 65535
        %v483 = vshrl.u32 %v478, 16
        %v484 = vmul.u32 %v480, %v482
        %v485 = vmul.u32 %v480, %v483
        %v486 = vmul.u32 %v481, %v482
        %v487 = vmul.u32 %v481, %v483
        %v488 = vshll.u32 %v485, 16
        %v489 = vshrl.u32 %v485, 16
        %v490 = vshll.u32 %v486, 16
        %v491 = vshrl.u32 %v486, 16
        %vm492 = vc.u32 %v484, %v488
        %v493 = vsel %vm492, 1, 0
        %v494 = vadd.s32 %v484, %v488
        %v495 = vadd.s32 %v487, %v493
        %vm496 = vc.u32 %v494, %v490
        %v497 = vsel %vm496, 1, 0
        %v498 = vadd.s32 %v494, %v490
        %v499 = vadd.s32 %v495, %v497
        %v500 = vadd.s32 %v499, %v489
        %v501 = vadd.s32 %v500, %v491
        %v502 = vand.u32 %v479, 65535
        %v503 = vshrl.u32 %v479, 16
        %v504 = vand.u32 %v474, 65535
        %v505 = vshrl.u32 %v474, 16
        %v506 = vmul.u32 %v502, %v504
        %v507 = vmul.u32 %v502, %v505
        %v508 = vmul.u32 %v503, %v504
        %v509 = vmul.u32 %v503, %v505
        %v510 = vshll.u32 %v507, 16
        %v511 = vshrl.u32 %v507, 16
        %v512 = vshll.u32 %v508, 16
        %v513 = vshrl.u32 %v508, 16
        %vm514 = vc.u32 %v506, %v510
        %v515 = vsel %vm514, 1, 0
        %v516 = vadd.s32 %v506, %v510
        %v517 = vadd.s32 %v509, %v515
        %vm518 = vc.u32 %v516, %v512
        %v519 = vsel %vm518, 1, 0
        %v520 = vadd.s32 %v516, %v512
        %v521 = vadd.s32 %v517, %v519
        %v522 = vadd.s32 %v521, %v511
        %v523 = vadd.s32 %v522, %v513
        %v524 = vmul.u32 %v479, %v470
        %v525 = vadd.s32 %v501, %v520
        %vm526 = vc.u32 %v501, %v520
        %v527 = vadd.s32 %v523, 1
        %v528 = vsel %vm526, %v527, %v523
        %v529 = vadd.s32 %v524, %v528
        %v530 = vadd.s32 %v529, 536870912
        %v531 = vshrl.u32 %v530, 30
        %v532 = vshll.u32 %v531, 30
        %v533 = vsub.s32 %v529, %v532
        %vm534 = vcmp.lt.s32.totalorder %v533, 0
        %v535 = vsub.s32 0, %v533
        %v536 = vsel %vm534, %v535, %v533
        %v537 = vclz %v536
        %v538 = vsub.s32 %v537, 2
        %vm539 = vcmp.gt.s32.totalorder 0, %v538
        %v540 = vsel %vm539, 0, %v538
        %v541 = vsub.s32 32, %v540
        %v542 = vshll.u32 %v533, %v540
        %v543 = vshrl.u32 %v525, %v541
        %v544 = vor.u32 %v542, %v543
        %v545 = vsub.s32 4294967266, %v540
        %v546 = vadd.s32 %v545, 127
        %v547 = vshll.u32 %v546, 23
        %v548 = vor.u32 4788187, %v547
        %v549 = vand.u32 2147483647, %v548
        %v551 = vcvt.s32.f32 %v544
        %v552 = vmul.f32 %v551, %v549
        %v553 = vxor.u32 %v552, 2147483648
        %v554 = vsel %vm433, %v553, %v552
        %v555 = vsub.s32 4, %v531
        %v556 = vsel %vm433, %v555, %v531
        %v557 = vsel %vm432, %v411, %v554
        %v558 = vsel %vm432, 0, %v556
        %v559 = vmul.f32 %v557, %v557
        %v560 = vmul.f32 %v559, -0.001358992
        %v561 = vadd.f32 %v560, 0.041655596
        %v562 = vmul.f32 %v559, %v561
        %v563 = vadd.f32 %v562, -0.4999988
        %v564 = vmul.f32 %v559, %v563
        %v565 = vadd.f32 1.0, %v564
        %v566 = vmul.f32 %v557, %v557
        %v567 = vmul.f32 %v566, -0.00019511016
        %v568 = vadd.f32 %v567, 0.008332121
        %v569 = vmul.f32 %v566, %v568
        %v570 = vadd.f32 %v569, -0.16666654
        %v571 = vmul.f32 %v566, %v570
        %v572 = vadd.f32 %v571, 1.0
        %v573 = vmul.f32 %v572, %v557
        %vm574 = vweird.f32 %v411
        %v575 = vadd.s32 %v558, 3
        %v576 = vand.u32 %v575, 3
        %vm577 = vcmp.lt.s32.totalorder %v576, 2
        %vm578 = vcmp.eq.s32.totalorder %v576, 0
        %v579 = vxor.u32 %v573, 2147483648
        %v580 = vsel %vm578, %v565, %v579
        %vm581 = vcmp.eq.s32.totalorder %v576, 2
        %v582 = vxor.u32 %v565, 2147483648
        %v583 = vsel %vm581, %v582, %v573
        %v584 = vsel %vm577, %v580, %v583
        %v585 = vsel %vm574, nan, %v584
        %v586 = vand.u32 2147483647, %v412
        %vm587 = vcmp.le.f32.partialorder %v586, 0.7853982
        %vm588 = vcmp.lt.s32.totalorder %v412, 0
        %v589 = vand.u32 %v412, 2139095040
        %v590 = vshrl.u32 %v589, 23
        %v591 = vsub.s32 %v590, 127
        %v592 = vand.u32 2147483647, %v412
        %v593 = vand.u32 %v592, 8388607
        %v594 = vor.u32 %v593, 8388608
        %v595 = vsub.s32 0, %v594
        %v596 = vadd.s32 %v591, 1
        %vm597 = vcmp.gt.s32.totalorder %v596, 0
        %v598 = vsel %vm597, %v596, 0
        %v599 = vshrl.u32 %v598, 5
        %v600 = vand.u32 %v598, 31
        %v601 = vsub.s32 32, %v600
        %v602 = vshrl.u32 683565275, %v601
        %v603 = vshll.u32 683565275, %v600
        %v604 = vshrl.u32 2475754826, %v601
        %v605 = vor.u32 %v603, %v604
        %v606 = vshll.u32 2475754826, %v600
        %v607 = vshrl.u32 2131351028, %v601
        %v608 = vor.u32 %v606, %v607
        %v609 = vshll.u32 2131351028, %v600
        %v610 = vshrl.u32 2102212464, %v601
        %v611 = vor.u32 %v609, %v610
        %v612 = vshll.u32 2102212464, %v600
        %v613 = vshrl.u32 920167782, %v601
        %v614 = vor.u32 %v612, %v613
        %v615 = vshll.u32 920167782, %v600
        %v616 = vshrl.u32 1326507024, %v601
        %v617 = vor.u32 %v615, %v616
        %vm618 = vcmp.lt.s32.totalorder %v599, 1
        %vm619 = vcmp.lt.s32.totalorder %v599, 2
        %vm620 = vcmp.lt.s32.totalorder %v599, 3
        %vm621 = vcmp.lt.s32.totalorder %v599, 4
        %v622 = vsel %vm618, %v602, %v605
        %v623 = vsel %vm621, %v611, 2102212464
        %v624 = vsel %vm620, %v608, %v623
        %v625 = vsel %vm619, %v622, %v624
        %v626 = vsel %vm618, %v605, %v608
        %v627 = vsel %vm621, %v614, 920167782
        %v628 = vsel %vm620, %v611, %v627
        %v629 = vsel %vm619, %v626, %v628
        %v630 = vsel %vm618, %v608, %v611
        %v631 = vsel %vm621, %v617, 1326507024
        %v632 = vsel %vm620, %v614, %v631
        %v633 = vsel %vm619, %v630, %v632
        %v634 = vshll.u32 %v594, 8
        %v635 = vand.u32 %v634, 65535
        %v636 = vshrl.u32 %v634, 16
        %v637 = vand.u32 %v633, 65535
        %v638 = vshrl.u32 %v633, 16
        %v639 = vmul.u32 %v635, %v637
        %v640 = vmul.u32 %v635, %v638
        %v641 = vmul.u32 %v636, %v637
        %v642 = vmul.u32 %v636, %v638
        %v643 = vshll.u32 %v640, 16
        %v644 = vshrl.u32 %v640, 16
        %v645 = vshll.u32 %v641, 16
        %v646 = vshrl.u32 %v641, 16
        %vm647 = vc.u32 %v639, %v643
        %v648 = vsel %vm647, 1, 0
        %v649 = vadd.s32 %v639, %v643
        %v650 = vadd.s32 %v642, %v648
        %vm651 = vc.u32 %v649, %v645
        %v652 = vsel %vm651, 1, 0
        %v653 = vadd.s32 %v649, %v645
        %v654 = vadd.s32 %v650, %v652
        %v655 = vadd.s32 %v654, %v644
        %v656 = vadd.s32 %v655, %v646
        %v657 = vand.u32 %v634, 65535
        %v658 = vshrl.u32 %v634, 16
        %v659 = vand.u32 %v629, 65535
        %v660 = vshrl.u32 %v629, 16
        %v661 = vmul.u32 %v657, %v659
        %v662 = vmul.u32 %v657, %v660
        %v663 = vmul.u32 %v658, %v659
        %v664 = vmul.u32 %v658, %v660
        %v665 = vshll.u32 %v662, 16
        %v666 = vshrl.u32 %v662, 16
        %v667 = vshll.u32 %v663, 16
        %v668 = vshrl.u32 %v663, 16
        %vm669 = vc.u32 %v661, %v665
        %v670 = vsel %vm669, 1, 0
        %v671 = vadd.s32 %v661, %v665
        %v672 = vadd.s32 %v664, %v670
        %vm673 = vc.u32 %v671, %v667
        %v674 = vsel %vm673, 1, 0
        %v675 = vadd.s32 %v671, %v667
        %v676 = vadd.s32 %v672, %v674
        %v677 = vadd.s32 %v676, %v666
        %v678 = vadd.s32 %v677, %v668
        %v679 = vmul.u32 %v634, %v625
        %v680 = vadd.s32 %v656, %v675
        %vm681 = vc.u32 %v656, %v675
        %v682 = vadd.s32 %v678, 1
        %v683 = vsel %vm681, %v682, %v678
        %v684 = vadd.s32 %v679, %v683
        %v685 = vadd.s32 %v684, 536870912
        %v686 = vshrl.u32 %v685, 30
        %v687 = vshll.u32 %v686, 30
        %v688 = vsub.s32 %v684, %v687
        %vm689 = vcmp.lt.s32.totalorder %v688, 0
        %v690 = vsub.s32 0, %v688
        %v691 = vsel %vm689, %v690, %v688
        %v692 = vclz %v691
        %v693 = vsub.s32 %v692, 2
        %vm694 = vcmp.gt.s32.totalorder 0, %v693
        %v695 = vsel %vm694, 0, %v693
        %v696 = vsub.s32 32, %v695
        %v697 = vshll.u32 %v688, %v695
        %v698 = vshrl.u32 %v680, %v696
        %v699 = vor.u32 %v697, %v698
        %v700 = vsub.s32 4294967266, %v695
        %v701 = vadd.s32 %v700, 127
        %v702 = vshll.u32 %v701, 23
        %v703 = vor.u32 4788187, %v702
        %v704 = vand.u32 2147483647, %v703
        %v706 = vcvt.s32.f32 %v699
        %v707 = vmul.f32 %v706, %v704
        %v708 = vxor.u32 %v707, 2147483648
        %v709 = vsel %vm588, %v708, %v707
        %v710 = vsub.s32 4, %v686
        %v711 = vsel %vm588, %v710, %v686
        %v712 = vsel %vm587, %v412, %v709
        %v713 = vsel %vm587, 0, %v711
        %v714 = vmul.f32 %v712, %v712
        %v715 = vmul.f32 %v714, -0.001358992
        %v716 = vadd.f32 %v715, 0.041655596
        %v717 = vmul.f32 %v714, %v716
        %v718 = vadd.f32 %v717, -0.4999988
        %v719 = vmul.f32 %v714, %v718
        %v720 = vadd.f32 1.0, %v719
        %v721 = vmul.f32 %v712, %v712
        %v722 = vmul.f32 %v721, -0.00019511016
        %v723 = vadd.f32 %v722, 0.008332121
        %v724 = vmul.f32 %v721, %v723
        %v725 = vadd.f32 %v724, -0.16666654
        %v726 = vmul.f32 %v721, %v725
        %v727 = vadd.f32 %v726, 1.0
        %v728 = vmul.f32 %v727, %v712
        %vm729 = vweird.f32 %v412
        %v730 = vadd.s32 %v713, 3
        %v731 = vand.u32 %v730, 3
        %vm732 = vcmp.lt.s32.totalorder %v731, 2
        %vm733 = vcmp.eq.s32.totalorder %v731, 0
        %v734 = vxor.u32 %v728, 2147483648
        %v735 = vsel %vm733, %v720, %v734
        %vm736 = vcmp.eq.s32.totalorder %v731, 2
        %v737 = vxor.u32 %v720, 2147483648
        %v738 = vsel %vm736, %v737, %v728
        %v739 = vsel %vm732, %v735, %v738
        %v740 = vsel %vm729, nan, %v739
        %v741 = vand.u32 2147483647, %v413
        %vm742 = vcmp.le.f32.partialorder %v741, 0.7853982
        %vm743 = vcmp.lt.s32.totalorder %v413, 0
        %v744 = vand.u32 %v413, 2139095040
        %v745 = vshrl.u32 %v744, 23
        %v746 = vsub.s32 %v745, 127
        %v747 = vand.u32 2147483647, %v413
        %v748 = vand.u32 %v747, 8388607
        %v749 = vor.u32 %v748, 8388608
        %v750 = vsub.s32 0, %v749
        %v751 = vadd.s32 %v746, 1
        %vm752 = vcmp.gt.s32.totalorder %v751, 0
        %v753 = vsel %vm752, %v751, 0
        %v754 = vshrl.u32 %v753, 5
        %v755 = vand.u32 %v753, 31
        %v756 = vsub.s32 32, %v755
        %v757 = vshrl.u32 683565275, %v756
        %v758 = vshll.u32 683565275, %v755
        %v759 = vshrl.u32 2475754826, %v756
        %v760 = vor.u32 %v758, %v759
        %v761 = vshll.u32 2475754826, %v755
        %v762 = vshrl.u32 2131351028, %v756
        %v763 = vor.u32 %v761, %v762
        %v764 = vshll.u32 2131351028, %v755
        %v765 = vshrl.u32 2102212464, %v756
        %v766 = vor.u32 %v764, %v765
        %v767 = vshll.u32 2102212464, %v755
        %v768 = vshrl.u32 920167782, %v756
        %v769 = vor.u32 %v767, %v768
        %v770 = vshll.u32 920167782, %v755
        %v771 = vshrl.u32 1326507024, %v756
        %v772 = vor.u32 %v770, %v771
        %vm773 = vcmp.lt.s32.totalorder %v754, 1
        %vm774 = vcmp.lt.s32.totalorder %v754, 2
        %vm775 = vcmp.lt.s32.totalorder %v754, 3
        %vm776 = vcmp.lt.s32.totalorder %v754, 4
        %v777 = vsel %vm773, %v757, %v760
        %v778 = vsel %vm776, %v766, 2102212464
        %v779 = vsel %vm775, %v763, %v778
        %v780 = vsel %vm774, %v777, %v779
        %v781 = vsel %vm773, %v760, %v763
        %v782 = vsel %vm776, %v769, 920167782
        %v783 = vsel %vm775, %v766, %v782
        %v784 = vsel %vm774, %v781, %v783
        %v785 = vsel %vm773, %v763, %v766
        %v786 = vsel %vm776, %v772, 1326507024
        %v787 = vsel %vm775, %v769, %v786
        %v788 = vsel %vm774, %v785, %v787
        %v789 = vshll.u32 %v749, 8
        %v790 = vand.u32 %v789, 65535
        %v791 = vshrl.u32 %v789, 16
        %v792 = vand.u32 %v788, 65535
        %v793 = vshrl.u32 %v788, 16
        %v794 = vmul.u32 %v790, %v792
        %v795 = vmul.u32 %v790, %v793
        %v796 = vmul.u32 %v791, %v792
        %v797 = vmul.u32 %v791, %v793
        %v798 = vshll.u32 %v795, 16
        %v799 = vshrl.u32 %v795, 16
        %v800 = vshll.u32 %v796, 16
        %v801 = vshrl.u32 %v796, 16
        %vm802 = vc.u32 %v794, %v798
        %v803 = vsel %vm802, 1, 0
        %v804 = vadd.s32 %v794, %v798
        %v805 = vadd.s32 %v797, %v803
        %vm806 = vc.u32 %v804, %v800
        %v807 = vsel %vm806, 1, 0
        %v808 = vadd.s32 %v804, %v800
        %v809 = vadd.s32 %v805, %v807
        %v810 = vadd.s32 %v809, %v799
        %v811 = vadd.s32 %v810, %v801
        %v812 = vand.u32 %v789, 65535
        %v813 = vshrl.u32 %v789, 16
        %v814 = vand.u32 %v784, 65535
        %v815 = vshrl.u32 %v784, 16
        %v816 = vmul.u32 %v812, %v814
        %v817 = vmul.u32 %v812, %v815
        %v818 = vmul.u32 %v813, %v814
        %v819 = vmul.u32 %v813, %v815
        %v820 = vshll.u32 %v817, 16
        %v821 = vshrl.u32 %v817, 16
        %v822 = vshll.u32 %v818, 16
        %v823 = vshrl.u32 %v818, 16
        %vm824 = vc.u32 %v816, %v820
        %v825 = vsel %vm824, 1, 0
        %v826 = vadd.s32 %v816, %v820
        %v827 = vadd.s32 %v819, %v825
        %vm828 = vc.u32 %v826, %v822
        %v829 = vsel %vm828, 1, 0
        %v830 = vadd.s32 %v826, %v822
        %v831 = vadd.s32 %v827, %v829
        %v832 = vadd.s32 %v831, %v821
        %v833 = vadd.s32 %v832, %v823
        %v834 = vmul.u32 %v789, %v780
        %v835 = vadd.s32 %v811, %v830
        %vm836 = vc.u32 %v811, %v830
        %v837 = vadd.s32 %v833, 1
        %v838 = vsel %vm836, %v837, %v833
        %v839 = vadd.s32 %v834, %v838
        %v840 = vadd.s32 %v839, 536870912
        %v841 = vshrl.u32 %v840, 30
        %v842 = vshll.u32 %v841, 30
        %v843 = vsub.s32 %v839, %v842
        %vm844 = vcmp.lt.s32.totalorder %v843, 0
        %v845 = vsub.s32 0, %v843
        %v846 = vsel %vm844, %v845, %v843
        %v847 = vclz %v846
        %v848 = vsub.s32 %v847, 2
        %vm849 = vcmp.gt.s32.totalorder 0, %v848
        %v850 = vsel %vm849, 0, %v848
        %v851 = vsub.s32 32, %v850
        %v852 = vshll.u32 %v843, %v850
        %v853 = vshrl.u32 %v835, %v851
        %v854 = vor.u32 %v852, %v853
        %v855 = vsub.s32 4294967266, %v850
        %v856 = vadd.s32 %v855, 127
        %v857 = vshll.u32 %v856, 23
        %v858 = vor.u32 4788187, %v857
        %v859 = vand.u32 2147483647, %v858
        %v861 = vcvt.s32.f32 %v854
        %v862 = vmul.f32 %v861, %v859
        %v863 = vxor.u32 %v862, 2147483648
        %v864 = vsel %vm743, %v863, %v862
        %v865 = vsub.s32 4, %v841
        %v866 = vsel %vm743, %v865, %v841
        %v867 = vsel %vm742, %v413, %v864
        %v868 = vsel %vm742, 0, %v866
        %v869 = vmul.f32 %v867, %v867
        %v870 = vmul.f32 %v869, -0.001358992
        %v871 = vadd.f32 %v870, 0.041655596
        %v872 = vmul.f32 %v869, %v871
        %v873 = vadd.f32 %v872, -0.4999988
        %v874 = vmul.f32 %v869, %v873
        %v875 = vadd.f32 1.0, %v874
        %v876 = vmul.f32 %v867, %v867
        %v877 = vmul.f32 %v876, -0.00019511016
        %v878 = vadd.f32 %v877, 0.008332121
        %v879 = vmul.f32 %v876, %v878
        %v880 = vadd.f32 %v879, -0.16666654
        %v881 = vmul.f32 %v876, %v880
        %v882 = vadd.f32 %v881, 1.0
        %v883 = vmul.f32 %v882, %v867
        %vm884 = vweird.f32 %v413
        %v885 = vadd.s32 %v868, 3
        %v886 = vand.u32 %v885, 3
        %vm887 = vcmp.lt.s32.totalorder %v886, 2
        %vm888 = vcmp.eq.s32.totalorder %v886, 0
        %v889 = vxor.u32 %v883, 2147483648
        %v890 = vsel %vm888, %v875, %v889
        %vm891 = vcmp.eq.s32.totalorder %v886, 2
        %v892 = vxor.u32 %v875, 2147483648
        %v893 = vsel %vm891, %v892, %v883
        %v894 = vsel %vm887, %v890, %v893
        %v895 = vsel %vm884, nan, %v894
        %v896 = vand.u32 2147483647, %v414
        %vm897 = vcmp.le.f32.partialorder %v896, 0.7853982
        %vm898 = vcmp.lt.s32.totalorder %v414, 0
        %v899 = vand.u32 %v414, 2139095040
        %v900 = vshrl.u32 %v899, 23
        %v901 = vsub.s32 %v900, 127
        %v902 = vand.u32 2147483647, %v414
        %v903 = vand.u32 %v902, 8388607
        %v904 = vor.u32 %v903, 8388608
        %v905 = vsub.s32 0, %v904
        %v906 = vadd.s32 %v901, 1
        %vm907 = vcmp.gt.s32.totalorder %v906, 0
        %v908 = vsel %vm907, %v906, 0
        %v909 = vshrl.u32 %v908, 5
        %v910 = vand.u32 %v908, 31
        %v911 = vsub.s32 32, %v910
        %v912 = vshrl.u32 683565275, %v911
        %v913 = vshll.u32 683565275, %v910
        %v914 = vshrl.u32 2475754826, %v911
        %v915 = vor.u32 %v913, %v914
        %v916 = vshll.u32 2475754826, %v910
        %v917 = vshrl.u32 2131351028, %v911
        %v918 = vor.u32 %v916, %v917
        %v919 = vshll.u32 2131351028, %v910
        %v920 = vshrl.u32 2102212464, %v911
        %v921 = vor.u32 %v919, %v920
        %v922 = vshll.u32 2102212464, %v910
        %v923 = vshrl.u32 920167782, %v911
        %v924 = vor.u32 %v922, %v923
        %v925 = vshll.u32 920167782, %v910
        %v926 = vshrl.u32 1326507024, %v911
        %v927 = vor.u32 %v925, %v926
        %vm928 = vcmp.lt.s32.totalorder %v909, 1
        %vm929 = vcmp.lt.s32.totalorder %v909, 2
        %vm930 = vcmp.lt.s32.totalorder %v909, 3
        %vm931 = vcmp.lt.s32.totalorder %v909, 4
        %v932 = vsel %vm928, %v912, %v915
        %v933 = vsel %vm931, %v921, 2102212464
        %v934 = vsel %vm930, %v918, %v933
        %v935 = vsel %vm929, %v932, %v934
        %v936 = vsel %vm928, %v915, %v918
        %v937 = vsel %vm931, %v924, 920167782
        %v938 = vsel %vm930, %v921, %v937
        %v939 = vsel %vm929, %v936, %v938
        %v940 = vsel %vm928, %v918, %v921
        %v941 = vsel %vm931, %v927, 1326507024
        %v942 = vsel %vm930, %v924, %v941
        %v943 = vsel %vm929, %v940, %v942
        %v944 = vshll.u32 %v904, 8
        %v945 = vand.u32 %v944, 65535
        %v946 = vshrl.u32 %v944, 16
        %v947 = vand.u32 %v943, 65535
        %v948 = vshrl.u32 %v943, 16
        %v949 = vmul.u32 %v945, %v947
        %v950 = vmul.u32 %v945, %v948
        %v951 = vmul.u32 %v946, %v947
        %v952 = vmul.u32 %v946, %v948
        %v953 = vshll.u32 %v950, 16
        %v954 = vshrl.u32 %v950, 16
        %v955 = vshll.u32 %v951, 16
        %v956 = vshrl.u32 %v951, 16
        %vm957 = vc.u32 %v949, %v953
        %v958 = vsel %vm957, 1, 0
        %v959 = vadd.s32 %v949, %v953
        %v960 = vadd.s32 %v952, %v958
        %vm961 = vc.u32 %v959, %v955
        %v962 = vsel %vm961, 1, 0
        %v963 = vadd.s32 %v959, %v955
        %v964 = vadd.s32 %v960, %v962
        %v965 = vadd.s32 %v964, %v954
        %v966 = vadd.s32 %v965, %v956
        %v967 = vand.u32 %v944, 65535
        %v968 = vshrl.u32 %v944, 16
        %v969 = vand.u32 %v939, 65535
        %v970 = vshrl.u32 %v939, 16
        %v971 = vmul.u32 %v967, %v969
        %v972 = vmul.u32 %v967, %v970
        %v973 = vmul.u32 %v968, %v969
        %v974 = vmul.u32 %v968, %v970
        %v975 = vshll.u32 %v972, 16
        %v976 = vshrl.u32 %v972, 16
        %v977 = vshll.u32 %v973, 16
        %v978 = vshrl.u32 %v973, 16
        %vm979 = vc.u32 %v971, %v975
        %v980 = vsel %vm979, 1, 0
        %v981 = vadd.s32 %v971, %v975
        %v982 = vadd.s32 %v974, %v980
        %vm983 = vc.u32 %v981, %v977
        %v984 = vsel %vm983, 1, 0
        %v985 = vadd.s32 %v981, %v977
        %v986 = vadd.s32 %v982, %v984
        %v987 = vadd.s32 %v986, %v976
        %v988 = vadd.s32 %v987, %v978
        %v989 = vmul.u32 %v944, %v935
        %v990 = vadd.s32 %v966, %v985
        %vm991 = vc.u32 %v966, %v985
        %v992 = vadd.s32 %v988, 1
        %v993 = vsel %vm991, %v992, %v988
        %v994 = vadd.s32 %v989, %v993
        %v995 = vadd.s32 %v994, 536870912
        %v996 = vshrl.u32 %v995, 30
        %v997 = vshll.u32 %v996, 30
        %v998 = vsub.s32 %v994, %v997
        %vm999 = vcmp.lt.s32.totalorder %v998, 0
        %v1000 = vsub.s32 0, %v998
        %v1001 = vsel %vm999, %v1000, %v998
        %v1002 = vclz %v1001
        %v1003 = vsub.s32 %v1002, 2
        %vm1004 = vcmp.gt.s32.totalorder 0, %v1003
        %v1005 = vsel %vm1004, 0, %v1003
        %v1006 = vsub.s32 32, %v1005
        %v1007 = vshll.u32 %v998, %v1005
        %v1008 = vshrl.u32 %v990, %v1006
        %v1009 = vor.u32 %v1007, %v1008
        %v1010 = vsub.s32 4294967266, %v1005
        %v1011 = vadd.s32 %v1010, 127
        %v1012 = vshll.u32 %v1011, 23
        %v1013 = vor.u32 4788187, %v1012
        %v1014 = vand.u32 2147483647, %v1013
        %v1016 = vcvt.s32.f32 %v1009
        %v1017 = vmul.f32 %v1016, %v1014
        %v1018 = vxor.u32 %v1017, 2147483648
        %v1019 = vsel %vm898, %v1018, %v1017
        %v1020 = vsub.s32 4, %v996
        %v1021 = vsel %vm898, %v1020, %v996
        %v1022 = vsel %vm897, %v414, %v1019
        %v1023 = vsel %vm897, 0, %v1021
        %v1024 = vmul.f32 %v1022, %v1022
        %v1025 = vmul.f32 %v1024, -0.001358992
        %v1026 = vadd.f32 %v1025, 0.041655596
        %v1027 = vmul.f32 %v1024, %v1026
        %v1028 = vadd.f32 %v1027, -0.4999988
        %v1029 = vmul.f32 %v1024, %v1028
        %v1030 = vadd.f32 1.0, %v1029
        %v1031 = vmul.f32 %v1022, %v1022
        %v1032 = vmul.f32 %v1031, -0.00019511016
        %v1033 = vadd.f32 %v1032, 0.008332121
        %v1034 = vmul.f32 %v1031, %v1033
        %v1035 = vadd.f32 %v1034, -0.16666654
        %v1036 = vmul.f32 %v1031, %v1035
        %v1037 = vadd.f32 %v1036, 1.0
        %v1038 = vmul.f32 %v1037, %v1022
        %vm1039 = vweird.f32 %v414
        %v1040 = vadd.s32 %v1023, 3
        %v1041 = vand.u32 %v1040, 3
        %vm1042 = vcmp.lt.s32.totalorder %v1041, 2
        %vm1043 = vcmp.eq.s32.totalorder %v1041, 0
        %v1044 = vxor.u32 %v1038, 2147483648
        %v1045 = vsel %vm1043, %v1030, %v1044
        %vm1046 = vcmp.eq.s32.totalorder %v1041, 2
        %v1047 = vxor.u32 %v1030, 2147483648
        %v1048 = vsel %vm1046, %v1047, %v1038
        %v1049 = vsel %vm1042, %v1045, %v1048
        %v1050 = vsel %vm1039, nan, %v1049
        %v1051 = vand.u32 2147483647, %v415
        %vm1052 = vcmp.le.f32.partialorder %v1051, 0.7853982
        %vm1053 = vcmp.lt.s32.totalorder %v415, 0
        %v1054 = vand.u32 %v415, 2139095040
        %v1055 = vshrl.u32 %v1054, 23
        %v1056 = vsub.s32 %v1055, 127
        %v1057 = vand.u32 2147483647, %v415
        %v1058 = vand.u32 %v1057, 8388607
        %v1059 = vor.u32 %v1058, 8388608
        %v1060 = vsub.s32 0, %v1059
        %v1061 = vadd.s32 %v1056, 1
        %vm1062 = vcmp.gt.s32.totalorder %v1061, 0
        %v1063 = vsel %vm1062, %v1061, 0
        %v1064 = vshrl.u32 %v1063, 5
        %v1065 = vand.u32 %v1063, 31
        %v1066 = vsub.s32 32, %v1065
        %v1067 = vshrl.u32 683565275, %v1066
        %v1068 = vshll.u32 683565275, %v1065
        %v1069 = vshrl.u32 2475754826, %v1066
        %v1070 = vor.u32 %v1068, %v1069
        %v1071 = vshll.u32 2475754826, %v1065
        %v1072 = vshrl.u32 2131351028, %v1066
        %v1073 = vor.u32 %v1071, %v1072
        %v1074 = vshll.u32 2131351028, %v1065
        %v1075 = vshrl.u32 2102212464, %v1066
        %v1076 = vor.u32 %v1074, %v1075
        %v1077 = vshll.u32 2102212464, %v1065
        %v1078 = vshrl.u32 920167782, %v1066
        %v1079 = vor.u32 %v1077, %v1078
        %v1080 = vshll.u32 920167782, %v1065
        %v1081 = vshrl.u32 1326507024, %v1066
        %v1082 = vor.u32 %v1080, %v1081
        %vm1083 = vcmp.lt.s32.totalorder %v1064, 1
        %vm1084 = vcmp.lt.s32.totalorder %v1064, 2
        %vm1085 = vcmp.lt.s32.totalorder %v1064, 3
        %vm1086 = vcmp.lt.s32.totalorder %v1064, 4
        %v1087 = vsel %vm1083, %v1067, %v1070
        %v1088 = vsel %vm1086, %v1076, 2102212464
        %v1089 = vsel %vm1085, %v1073, %v1088
        %v1090 = vsel %vm1084, %v1087, %v1089
        %v1091 = vsel %vm1083, %v1070, %v1073
        %v1092 = vsel %vm1086, %v1079, 920167782
        %v1093 = vsel %vm1085, %v1076, %v1092
        %v1094 = vsel %vm1084, %v1091, %v1093
        %v1095 = vsel %vm1083, %v1073, %v1076
        %v1096 = vsel %vm1086, %v1082, 1326507024
        %v1097 = vsel %vm1085, %v1079, %v1096
        %v1098 = vsel %vm1084, %v1095, %v1097
        %v1099 = vshll.u32 %v1059, 8
        %v1100 = vand.u32 %v1099, 65535
        %v1101 = vshrl.u32 %v1099, 16
        %v1102 = vand.u32 %v1098, 65535
        %v1103 = vshrl.u32 %v1098, 16
        %v1104 = vmul.u32 %v1100, %v1102
        %v1105 = vmul.u32 %v1100, %v1103
        %v1106 = vmul.u32 %v1101, %v1102
        %v1107 = vmul.u32 %v1101, %v1103
        %v1108 = vshll.u32 %v1105, 16
        %v1109 = vshrl.u32 %v1105, 16
        %v1110 = vshll.u32 %v1106, 16
        %v1111 = vshrl.u32 %v1106, 16
        %vm1112 = vc.u32 %v1104, %v1108
        %v1113 = vsel %vm1112, 1, 0
        %v1114 = vadd.s32 %v1104, %v1108
        %v1115 = vadd.s32 %v1107, %v1113
        %vm1116 = vc.u32 %v1114, %v1110
        %v1117 = vsel %vm1116, 1, 0
        %v1118 = vadd.s32 %v1114, %v1110
        %v1119 = vadd.s32 %v1115, %v1117
        %v1120 = vadd.s32 %v1119, %v1109
        %v1121 = vadd.s32 %v1120, %v1111
        %v1122 = vand.u32 %v1099, 65535
        %v1123 = vshrl.u32 %v1099, 16
        %v1124 = vand.u32 %v1094, 65535
        %v1125 = vshrl.u32 %v1094, 16
        %v1126 = vmul.u32 %v1122, %v1124
        %v1127 = vmul.u32 %v1122, %v1125
        %v1128 = vmul.u32 %v1123, %v1124
        %v1129 = vmul.u32 %v1123, %v1125
        %v1130 = vshll.u32 %v1127, 16
        %v1131 = vshrl.u32 %v1127, 16
        %v1132 = vshll.u32 %v1128, 16
        %v1133 = vshrl.u32 %v1128, 16
        %vm1134 = vc.u32 %v1126, %v1130
        %v1135 = vsel %vm1134, 1, 0
        %v1136 = vadd.s32 %v1126, %v1130
        %v1137 = vadd.s32 %v1129, %v1135
        %vm1138 = vc.u32 %v1136, %v1132
        %v1139 = vsel %vm1138, 1, 0
        %v1140 = vadd.s32 %v1136, %v1132
        %v1141 = vadd.s32 %v1137, %v1139
        %v1142 = vadd.s32 %v1141, %v1131
        %v1143 = vadd.s32 %v1142, %v1133
        %v1144 = vmul.u32 %v1099, %v1090
        %v1145 = vadd.s32 %v1121, %v1140
        %vm1146 = vc.u32 %v1121, %v1140
        %v1147 = vadd.s32 %v1143, 1
        %v1148 = vsel %vm1146, %v1147, %v1143
        %v1149 = vadd.s32 %v1144, %v1148
        %v1150 = vadd.s32 %v1149, 536870912
        %v1151 = vshrl.u32 %v1150, 30
        %v1152 = vshll.u32 %v1151, 30
        %v1153 = vsub.s32 %v1149, %v1152
        %vm1154 = vcmp.lt.s32.totalorder %v1153, 0
        %v1155 = vsub.s32 0, %v1153
        %v1156 = vsel %vm1154, %v1155, %v1153
        %v1157 = vclz %v1156
        %v1158 = vsub.s32 %v1157, 2
        %vm1159 = vcmp.gt.s32.totalorder 0, %v1158
        %v1160 = vsel %vm1159, 0, %v1158
        %v1161 = vsub.s32 32, %v1160
        %v1162 = vshll.u32 %v1153, %v1160
        %v1163 = vshrl.u32 %v1145, %v1161
        %v1164 = vor.u32 %v1162, %v1163
        %v1165 = vsub.s32 4294967266, %v1160
        %v1166 = vadd.s32 %v1165, 127
        %v1167 = vshll.u32 %v1166, 23
        %v1168 = vor.u32 4788187, %v1167
        %v1169 = vand.u32 2147483647, %v1168
        %v1171 = vcvt.s32.f32 %v1164
        %v1172 = vmul.f32 %v1171, %v1169
        %v1173 = vxor.u32 %v1172, 2147483648
        %v1174 = vsel %vm1053, %v1173, %v1172
        %v1175 = vsub.s32 4, %v1151
        %v1176 = vsel %vm1053, %v1175, %v1151
        %v1177 = vsel %vm1052, %v415, %v1174
        %v1178 = vsel %vm1052, 0, %v1176
        %v1179 = vmul.f32 %v1177, %v1177
        %v1180 = vmul.f32 %v1179, -0.001358992
        %v1181 = vadd.f32 %v1180, 0.041655596
        %v1182 = vmul.f32 %v1179, %v1181
        %v1183 = vadd.f32 %v1182, -0.4999988
        %v1184 = vmul.f32 %v1179, %v1183
        %v1185 = vadd.f32 1.0, %v1184
        %v1186 = vmul.f32 %v1177, %v1177
        %v1187 = vmul.f32 %v1186, -0.00019511016
        %v1188 = vadd.f32 %v1187, 0.008332121
        %v1189 = vmul.f32 %v1186, %v1188
        %v1190 = vadd.f32 %v1189, -0.16666654
        %v1191 = vmul.f32 %v1186, %v1190
        %v1192 = vadd.f32 %v1191, 1.0
        %v1193 = vmul.f32 %v1192, %v1177
        %vm1194 = vweird.f32 %v415
        %v1195 = vadd.s32 %v1178, 3
        %v1196 = vand.u32 %v1195, 3
        %vm1197 = vcmp.lt.s32.totalorder %v1196, 2
        %vm1198 = vcmp.eq.s32.totalorder %v1196, 0
        %v1199 = vxor.u32 %v1193, 2147483648
        %v1200 = vsel %vm1198, %v1185, %v1199
        %vm1201 = vcmp.eq.s32.totalorder %v1196, 2
        %v1202 = vxor.u32 %v1185, 2147483648
        %v1203 = vsel %vm1201, %v1202, %v1193
        %v1204 = vsel %vm1197, %v1200, %v1203
        %v1205 = vsel %vm1194, nan, %v1204
        %v1206 = vand.u32 2147483647, %v416
        %vm1207 = vcmp.le.f32.partialorder %v1206, 0.7853982
        %vm1208 = vcmp.lt.s32.totalorder %v416, 0
        %v1209 = vand.u32 %v416, 2139095040
        %v1210 = vshrl.u32 %v1209, 23
        %v1211 = vsub.s32 %v1210, 127
        %v1212 = vand.u32 2147483647, %v416
        %v1213 = vand.u32 %v1212, 8388607
        %v1214 = vor.u32 %v1213, 8388608
        %v1215 = vsub.s32 0, %v1214
        %v1216 = vadd.s32 %v1211, 1
        %vm1217 = vcmp.gt.s32.totalorder %v1216, 0
        %v1218 = vsel %vm1217, %v1216, 0
        %v1219 = vshrl.u32 %v1218, 5
        %v1220 = vand.u32 %v1218, 31
        %v1221 = vsub.s32 32, %v1220
        %v1222 = vshrl.u32 683565275, %v1221
        %v1223 = vshll.u32 683565275, %v1220
        %v1224 = vshrl.u32 2475754826, %v1221
        %v1225 = vor.u32 %v1223, %v1224
        %v1226 = vshll.u32 2475754826, %v1220
        %v1227 = vshrl.u32 2131351028, %v1221
        %v1228 = vor.u32 %v1226, %v1227
        %v1229 = vshll.u32 2131351028, %v1220
        %v1230 = vshrl.u32 2102212464, %v1221
        %v1231 = vor.u32 %v1229, %v1230
        %v1232 = vshll.u32 2102212464, %v1220
        %v1233 = vshrl.u32 920167782, %v1221
        %v1234 = vor.u32 %v1232, %v1233
        %v1235 = vshll.u32 920167782, %v1220
        %v1236 = vshrl.u32 1326507024, %v1221
        %v1237 = vor.u32 %v1235, %v1236
        %vm1238 = vcmp.lt.s32.totalorder %v1219, 1
        %vm1239 = vcmp.lt.s32.totalorder %v1219, 2
        %vm1240 = vcmp.lt.s32.totalorder %v1219, 3
        %vm1241 = vcmp.lt.s32.totalorder %v1219, 4
        %v1242 = vsel %vm1238, %v1222, %v1225
        %v1243 = vsel %vm1241, %v1231, 2102212464
        %v1244 = vsel %vm1240, %v1228, %v1243
        %v1245 = vsel %vm1239, %v1242, %v1244
        %v1246 = vsel %vm1238, %v1225, %v1228
        %v1247 = vsel %vm1241, %v1234, 920167782
        %v1248 = vsel %vm1240, %v1231, %v1247
        %v1249 = vsel %vm1239, %v1246, %v1248
        %v1250 = vsel %vm1238, %v1228, %v1231
        %v1251 = vsel %vm1241, %v1237, 1326507024
        %v1252 = vsel %vm1240, %v1234, %v1251
        %v1253 = vsel %vm1239, %v1250, %v1252
        %v1254 = vshll.u32 %v1214, 8
        %v1255 = vand.u32 %v1254, 65535
        %v1256 = vshrl.u32 %v1254, 16
        %v1257 = vand.u32 %v1253, 65535
        %v1258 = vshrl.u32 %v1253, 16
        %v1259 = vmul.u32 %v1255, %v1257
        %v1260 = vmul.u32 %v1255, %v1258
        %v1261 = vmul.u32 %v1256, %v1257
        %v1262 = vmul.u32 %v1256, %v1258
        %v1263 = vshll.u32 %v1260, 16
        %v1264 = vshrl.u32 %v1260, 16
        %v1265 = vshll.u32 %v1261, 16
        %v1266 = vshrl.u32 %v1261, 16
        %vm1267 = vc.u32 %v1259, %v1263
        %v1268 = vsel %vm1267, 1, 0
        %v1269 = vadd.s32 %v1259, %v1263
        %v1270 = vadd.s32 %v1262, %v1268
        %vm1271 = vc.u32 %v1269, %v1265
        %v1272 = vsel %vm1271, 1, 0
        %v1273 = vadd.s32 %v1269, %v1265
        %v1274 = vadd.s32 %v1270, %v1272
        %v1275 = vadd.s32 %v1274, %v1264
        %v1276 = vadd.s32 %v1275, %v1266
        %v1277 = vand.u32 %v1254, 65535
        %v1278 = vshrl.u32 %v1254, 16
        %v1279 = vand.u32 %v1249, 65535
        %v1280 = vshrl.u32 %v1249, 16
        %v1281 = vmul.u32 %v1277, %v1279
        %v1282 = vmul.u32 %v1277, %v1280
        %v1283 = vmul.u32 %v1278, %v1279
        %v1284 = vmul.u32 %v1278, %v1280
        %v1285 = vshll.u32 %v1282, 16
        %v1286 = vshrl.u32 %v1282, 16
        %v1287 = vshll.u32 %v1283, 16
        %v1288 = vshrl.u32 %v1283, 16
        %vm1289 = vc.u32 %v1281, %v1285
        %v1290 = vsel %vm1289, 1, 0
        %v1291 = vadd.s32 %v1281, %v1285
        %v1292 = vadd.s32 %v1284, %v1290
        %vm1293 = vc.u32 %v1291, %v1287
        %v1294 = vsel %vm1293, 1, 0
        %v1295 = vadd.s32 %v1291, %v1287
        %v1296 = vadd.s32 %v1292, %v1294
        %v1297 = vadd.s32 %v1296, %v1286
        %v1298 = vadd.s32 %v1297, %v1288
        %v1299 = vmul.u32 %v1254, %v1245
        %v1300 = vadd.s32 %v1276, %v1295
        %vm1301 = vc.u32 %v1276, %v1295
        %v1302 = vadd.s32 %v1298, 1
        %v1303 = vsel %vm1301, %v1302, %v1298
        %v1304 = vadd.s32 %v1299, %v1303
        %v1305 = vadd.s32 %v1304, 536870912
        %v1306 = vshrl.u32 %v1305, 30
        %v1307 = vshll.u32 %v1306, 30
        %v1308 = vsub.s32 %v1304, %v1307
        %vm1309 = vcmp.lt.s32.totalorder %v1308, 0
        %v1310 = vsub.s32 0, %v1308
        %v1311 = vsel %vm1309, %v1310, %v1308
        %v1312 = vclz %v1311
        %v1313 = vsub.s32 %v1312, 2
        %vm1314 = vcmp.gt.s32.totalorder 0, %v1313
        %v1315 = vsel %vm1314, 0, %v1313
        %v1316 = vsub.s32 32, %v1315
        %v1317 = vshll.u32 %v1308, %v1315
        %v1318 = vshrl.u32 %v1300, %v1316
        %v1319 = vor.u32 %v1317, %v1318
        %v1320 = vsub.s32 4294967266, %v1315
        %v1321 = vadd.s32 %v1320, 127
        %v1322 = vshll.u32 %v1321, 23
        %v1323 = vor.u32 4788187, %v1322
        %v1324 = vand.u32 2147483647, %v1323
        %v1326 = vcvt.s32.f32 %v1319
        %v1327 = vmul.f32 %v1326, %v1324
        %v1328 = vxor.u32 %v1327, 2147483648
        %v1329 = vsel %vm1208, %v1328, %v1327
        %v1330 = vsub.s32 4, %v1306
        %v1331 = vsel %vm1208, %v1330, %v1306
        %v1332 = vsel %vm1207, %v416, %v1329
        %v1333 = vsel %vm1207, 0, %v1331
        %v1334 = vmul.f32 %v1332, %v1332
        %v1335 = vmul.f32 %v1334, -0.001358992
        %v1336 = vadd.f32 %v1335, 0.041655596
        %v1337 = vmul.f32 %v1334, %v1336
        %v1338 = vadd.f32 %v1337, -0.4999988
        %v1339 = vmul.f32 %v1334, %v1338
        %v1340 = vadd.f32 1.0, %v1339
        %v1341 = vmul.f32 %v1332, %v1332
        %v1342 = vmul.f32 %v1341, -0.00019511016
        %v1343 = vadd.f32 %v1342, 0.008332121
        %v1344 = vmul.f32 %v1341, %v1343
        %v1345 = vadd.f32 %v1344, -0.16666654
        %v1346 = vmul.f32 %v1341, %v1345
        %v1347 = vadd.f32 %v1346, 1.0
        %v1348 = vmul.f32 %v1347, %v1332
        %vm1349 = vweird.f32 %v416
        %v1350 = vadd.s32 %v1333, 3
        %v1351 = vand.u32 %v1350, 3
        %vm1352 = vcmp.lt.s32.totalorder %v1351, 2
        %vm1353 = vcmp.eq.s32.totalorder %v1351, 0
        %v1354 = vxor.u32 %v1348, 2147483648
        %v1355 = vsel %vm1353, %v1340, %v1354
        %vm1356 = vcmp.eq.s32.totalorder %v1351, 2
        %v1357 = vxor.u32 %v1340, 2147483648
        %v1358 = vsel %vm1356, %v1357, %v1348
        %v1359 = vsel %vm1352, %v1355, %v1358
        %v1360 = vsel %vm1349, nan, %v1359
        %v1361 = vand.u32 2147483647, %v417
        %vm1362 = vcmp.le.f32.partialorder %v1361, 0.7853982
        %vm1363 = vcmp.lt.s32.totalorder %v417, 0
        %v1364 = vand.u32 %v417, 2139095040
        %v1365 = vshrl.u32 %v1364, 23
        %v1366 = vsub.s32 %v1365, 127
        %v1367 = vand.u32 2147483647, %v417
        %v1368 = vand.u32 %v1367, 8388607
        %v1369 = vor.u32 %v1368, 8388608
        %v1370 = vsub.s32 0, %v1369
        %v1371 = vadd.s32 %v1366, 1
        %vm1372 = vcmp.gt.s32.totalorder %v1371, 0
        %v1373 = vsel %vm1372, %v1371, 0
        %v1374 = vshrl.u32 %v1373, 5
        %v1375 = vand.u32 %v1373, 31
        %v1376 = vsub.s32 32, %v1375
        %v1377 = vshrl.u32 683565275, %v1376
        %v1378 = vshll.u32 683565275, %v1375
        %v1379 = vshrl.u32 2475754826, %v1376
        %v1380 = vor.u32 %v1378, %v1379
        %v1381 = vshll.u32 2475754826, %v1375
        %v1382 = vshrl.u32 2131351028, %v1376
        %v1383 = vor.u32 %v1381, %v1382
        %v1384 = vshll.u32 2131351028, %v1375
        %v1385 = vshrl.u32 2102212464, %v1376
        %v1386 = vor.u32 %v1384, %v1385
        %v1387 = vshll.u32 2102212464, %v1375
        %v1388 = vshrl.u32 920167782, %v1376
        %v1389 = vor.u32 %v1387, %v1388
        %v1390 = vshll.u32 920167782, %v1375
        %v1391 = vshrl.u32 1326507024, %v1376
        %v1392 = vor.u32 %v1390, %v1391
        %vm1393 = vcmp.lt.s32.totalorder %v1374, 1
        %vm1394 = vcmp.lt.s32.totalorder %v1374, 2
        %vm1395 = vcmp.lt.s32.totalorder %v1374, 3
        %vm1396 = vcmp.lt.s32.totalorder %v1374, 4
        %v1397 = vsel %vm1393, %v1377, %v1380
        %v1398 = vsel %vm1396, %v1386, 2102212464
        %v1399 = vsel %vm1395, %v1383, %v1398
        %v1400 = vsel %vm1394, %v1397, %v1399
        %v1401 = vsel %vm1393, %v1380, %v1383
        %v1402 = vsel %vm1396, %v1389, 920167782
        %v1403 = vsel %vm1395, %v1386, %v1402
        %v1404 = vsel %vm1394, %v1401, %v1403
        %v1405 = vsel %vm1393, %v1383, %v1386
        %v1406 = vsel %vm1396, %v1392, 1326507024
        %v1407 = vsel %vm1395, %v1389, %v1406
        %v1408 = vsel %vm1394, %v1405, %v1407
        %v1409 = vshll.u32 %v1369, 8
        %v1410 = vand.u32 %v1409, 65535
        %v1411 = vshrl.u32 %v1409, 16
        %v1412 = vand.u32 %v1408, 65535
        %v1413 = vshrl.u32 %v1408, 16
        %v1414 = vmul.u32 %v1410, %v1412
        %v1415 = vmul.u32 %v1410, %v1413
        %v1416 = vmul.u32 %v1411, %v1412
        %v1417 = vmul.u32 %v1411, %v1413
        %v1418 = vshll.u32 %v1415, 16
        %v1419 = vshrl.u32 %v1415, 16
        %v1420 = vshll.u32 %v1416, 16
        %v1421 = vshrl.u32 %v1416, 16
        %vm1422 = vc.u32 %v1414, %v1418
        %v1423 = vsel %vm1422, 1, 0
        %v1424 = vadd.s32 %v1414, %v1418
        %v1425 = vadd.s32 %v1417, %v1423
        %vm1426 = vc.u32 %v1424, %v1420
        %v1427 = vsel %vm1426, 1, 0
        %v1428 = vadd.s32 %v1424, %v1420
        %v1429 = vadd.s32 %v1425, %v1427
        %v1430 = vadd.s32 %v1429, %v1419
        %v1431 = vadd.s32 %v1430, %v1421
        %v1432 = vand.u32 %v1409, 65535
        %v1433 = vshrl.u32 %v1409, 16
        %v1434 = vand.u32 %v1404, 65535
        %v1435 = vshrl.u32 %v1404, 16
        %v1436 = vmul.u32 %v1432, %v1434
        %v1437 = vmul.u32 %v1432, %v1435
        %v1438 = vmul.u32 %v1433, %v1434
        %v1439 = vmul.u32 %v1433, %v1435
        %v1440 = vshll.u32 %v1437, 16
        %v1441 = vshrl.u32 %v1437, 16
        %v1442 = vshll.u32 %v1438, 16
        %v1443 = vshrl.u32 %v1438, 16
        %vm1444 = vc.u32 %v1436, %v1440
        %v1445 = vsel %vm1444, 1, 0
        %v1446 = vadd.s32 %v1436, %v1440
        %v1447 = vadd.s32 %v1439, %v1445
        %vm1448 = vc.u32 %v1446, %v1442
        %v1449 = vsel %vm1448, 1, 0
        %v1450 = vadd.s32 %v1446, %v1442
        %v1451 = vadd.s32 %v1447, %v1449
        %v1452 = vadd.s32 %v1451, %v1441
        %v1453 = vadd.s32 %v1452, %v1443
        %v1454 = vmul.u32 %v1409, %v1400
        %v1455 = vadd.s32 %v1431, %v1450
        %vm1456 = vc.u32 %v1431, %v1450
        %v1457 = vadd.s32 %v1453, 1
        %v1458 = vsel %vm1456, %v1457, %v1453
        %v1459 = vadd.s32 %v1454, %v1458
        %v1460 = vadd.s32 %v1459, 536870912
        %v1461 = vshrl.u32 %v1460, 30
        %v1462 = vshll.u32 %v1461, 30
        %v1463 = vsub.s32 %v1459, %v1462
        %vm1464 = vcmp.lt.s32.totalorder %v1463, 0
        %v1465 = vsub.s32 0, %v1463
        %v1466 = vsel %vm1464, %v1465, %v1463
        %v1467 = vclz %v1466
        %v1468 = vsub.s32 %v1467, 2
        %vm1469 = vcmp.gt.s32.totalorder 0, %v1468
        %v1470 = vsel %vm1469, 0, %v1468
        %v1471 = vsub.s32 32, %v1470
        %v1472 = vshll.u32 %v1463, %v1470
        %v1473 = vshrl.u32 %v1455, %v1471
        %v1474 = vor.u32 %v1472, %v1473
        %v1475 = vsub.s32 4294967266, %v1470
        %v1476 = vadd.s32 %v1475, 127
        %v1477 = vshll.u32 %v1476, 23
        %v1478 = vor.u32 4788187, %v1477
        %v1479 = vand.u32 2147483647, %v1478
        %v1481 = vcvt.s32.f32 %v1474
        %v1482 = vmul.f32 %v1481, %v1479
        %v1483 = vxor.u32 %v1482, 2147483648
        %v1484 = vsel %vm1363, %v1483, %v1482
        %v1485 = vsub.s32 4, %v1461
        %v1486 = vsel %vm1363, %v1485, %v1461
        %v1487 = vsel %vm1362, %v417, %v1484
        %v1488 = vsel %vm1362, 0, %v1486
        %v1489 = vmul.f32 %v1487, %v1487
        %v1490 = vmul.f32 %v1489, -0.001358992
        %v1491 = vadd.f32 %v1490, 0.041655596
        %v1492 = vmul.f32 %v1489, %v1491
        %v1493 = vadd.f32 %v1492, -0.4999988
        %v1494 = vmul.f32 %v1489, %v1493
        %v1495 = vadd.f32 1.0, %v1494
        %v1496 = vmul.f32 %v1487, %v1487
        %v1497 = vmul.f32 %v1496, -0.00019511016
        %v1498 = vadd.f32 %v1497, 0.008332121
        %v1499 = vmul.f32 %v1496, %v1498
        %v1500 = vadd.f32 %v1499, -0.16666654
        %v1501 = vmul.f32 %v1496, %v1500
        %v1502 = vadd.f32 %v1501, 1.0
        %v1503 = vmul.f32 %v1502, %v1487
        %vm1504 = vweird.f32 %v417
        %v1505 = vadd.s32 %v1488, 3
        %v1506 = vand.u32 %v1505, 3
        %vm1507 = vcmp.lt.s32.totalorder %v1506, 2
        %vm1508 = vcmp.eq.s32.totalorder %v1506, 0
        %v1509 = vxor.u32 %v1503, 2147483648
        %v1510 = vsel %vm1508, %v1495, %v1509
        %vm1511 = vcmp.eq.s32.totalorder %v1506, 2
        %v1512 = vxor.u32 %v1495, 2147483648
        %v1513 = vsel %vm1511, %v1512, %v1503
        %v1514 = vsel %vm1507, %v1510, %v1513
        %v1515 = vsel %vm1504, nan, %v1514
        %v1516 = vand.u32 2147483647, %v418
        %vm1517 = vcmp.le.f32.partialorder %v1516, 0.7853982
        %vm1518 = vcmp.lt.s32.totalorder %v418, 0
        %v1519 = vand.u32 %v418, 2139095040
        %v1520 = vshrl.u32 %v1519, 23
        %v1521 = vsub.s32 %v1520, 127
        %v1522 = vand.u32 2147483647, %v418
        %v1523 = vand.u32 %v1522, 8388607
        %v1524 = vor.u32 %v1523, 8388608
        %v1525 = vsub.s32 0, %v1524
        %v1526 = vadd.s32 %v1521, 1
        %vm1527 = vcmp.gt.s32.totalorder %v1526, 0
        %v1528 = vsel %vm1527, %v1526, 0
        %v1529 = vshrl.u32 %v1528, 5
        %v1530 = vand.u32 %v1528, 31
        %v1531 = vsub.s32 32, %v1530
        %v1532 = vshrl.u32 683565275, %v1531
        %v1533 = vshll.u32 683565275, %v1530
        %v1534 = vshrl.u32 2475754826, %v1531
        %v1535 = vor.u32 %v1533, %v1534
        %v1536 = vshll.u32 2475754826, %v1530
        %v1537 = vshrl.u32 2131351028, %v1531
        %v1538 = vor.u32 %v1536, %v1537
        %v1539 = vshll.u32 2131351028, %v1530
        %v1540 = vshrl.u32 2102212464, %v1531
        %v1541 = vor.u32 %v1539, %v1540
        %v1542 = vshll.u32 2102212464, %v1530
        %v1543 = vshrl.u32 920167782, %v1531
        %v1544 = vor.u32 %v1542, %v1543
        %v1545 = vshll.u32 920167782, %v1530
        %v1546 = vshrl.u32 1326507024, %v1531
        %v1547 = vor.u32 %v1545, %v1546
        %vm1548 = vcmp.lt.s32.totalorder %v1529, 1
        %vm1549 = vcmp.lt.s32.totalorder %v1529, 2
        %vm1550 = vcmp.lt.s32.totalorder %v1529, 3
        %vm1551 = vcmp.lt.s32.totalorder %v1529, 4
        %v1552 = vsel %vm1548, %v1532, %v1535
        %v1553 = vsel %vm1551, %v1541, 2102212464
        %v1554 = vsel %vm1550, %v1538, %v1553
        %v1555 = vsel %vm1549, %v1552, %v1554
        %v1556 = vsel %vm1548, %v1535, %v1538
        %v1557 = vsel %vm1551, %v1544, 920167782
        %v1558 = vsel %vm1550, %v1541, %v1557
        %v1559 = vsel %vm1549, %v1556, %v1558
        %v1560 = vsel %vm1548, %v1538, %v1541
        %v1561 = vsel %vm1551, %v1547, 1326507024
        %v1562 = vsel %vm1550, %v1544, %v1561
        %v1563 = vsel %vm1549, %v1560, %v1562
        %v1564 = vshll.u32 %v1524, 8
        %v1565 = vand.u32 %v1564, 65535
        %v1566 = vshrl.u32 %v1564, 16
        %v1567 = vand.u32 %v1563, 65535
        %v1568 = vshrl.u32 %v1563, 16
        %v1569 = vmul.u32 %v1565, %v1567
        %v1570 = vmul.u32 %v1565, %v1568
        %v1571 = vmul.u32 %v1566, %v1567
        %v1572 = vmul.u32 %v1566, %v1568
        %v1573 = vshll.u32 %v1570, 16
        %v1574 = vshrl.u32 %v1570, 16
        %v1575 = vshll.u32 %v1571, 16
        %v1576 = vshrl.u32 %v1571, 16
        %vm1577 = vc.u32 %v1569, %v1573
        %v1578 = vsel %vm1577, 1, 0
        %v1579 = vadd.s32 %v1569, %v1573
        %v1580 = vadd.s32 %v1572, %v1578
        %vm1581 = vc.u32 %v1579, %v1575
        %v1582 = vsel %vm1581, 1, 0
        %v1583 = vadd.s32 %v1579, %v1575
        %v1584 = vadd.s32 %v1580, %v1582
        %v1585 = vadd.s32 %v1584, %v1574
        %v1586 = vadd.s32 %v1585, %v1576
        %v1587 = vand.u32 %v1564, 65535
        %v1588 = vshrl.u32 %v1564, 16
        %v1589 = vand.u32 %v1559, 65535
        %v1590 = vshrl.u32 %v1559, 16
        %v1591 = vmul.u32 %v1587, %v1589
        %v1592 = vmul.u32 %v1587, %v1590
        %v1593 = vmul.u32 %v1588, %v1589
        %v1594 = vmul.u32 %v1588, %v1590
        %v1595 = vshll.u32 %v1592, 16
        %v1596 = vshrl.u32 %v1592, 16
        %v1597 = vshll.u32 %v1593, 16
        %v1598 = vshrl.u32 %v1593, 16
        %vm1599 = vc.u32 %v1591, %v1595
        %v1600 = vsel %vm1599, 1, 0
        %v1601 = vadd.s32 %v1591, %v1595
        %v1602 = vadd.s32 %v1594, %v1600
        %vm1603 = vc.u32 %v1601, %v1597
        %v1604 = vsel %vm1603, 1, 0
        %v1605 = vadd.s32 %v1601, %v1597
        %v1606 = vadd.s32 %v1602, %v1604
        %v1607 = vadd.s32 %v1606, %v1596
        %v1608 = vadd.s32 %v1607, %v1598
        %v1609 = vmul.u32 %v1564, %v1555
        %v1610 = vadd.s32 %v1586, %v1605
        %vm1611 = vc.u32 %v1586, %v1605
        %v1612 = vadd.s32 %v1608, 1
        %v1613 = vsel %vm1611, %v1612, %v1608
        %v1614 = vadd.s32 %v1609, %v1613
        %v1615 = vadd.s32 %v1614, 536870912
        %v1616 = vshrl.u32 %v1615, 30
        %v1617 = vshll.u32 %v1616, 30
        %v1618 = vsub.s32 %v1614, %v1617
        %vm1619 = vcmp.lt.s32.totalorder %v1618, 0
        %v1620 = vsub.s32 0, %v1618
        %v1621 = vsel %vm1619, %v1620, %v1618
        %v1622 = vclz %v1621
        %v1623 = vsub.s32 %v1622, 2
        %vm1624 = vcmp.gt.s32.totalorder 0, %v1623
        %v1625 = vsel %vm1624, 0, %v1623
        %v1626 = vsub.s32 32, %v1625
        %v1627 = vshll.u32 %v1618, %v1625
        %v1628 = vshrl.u32 %v1610, %v1626
        %v1629 = vor.u32 %v1627, %v1628
        %v1630 = vsub.s32 4294967266, %v1625
        %v1631 = vadd.s32 %v1630, 127
        %v1632 = vshll.u32 %v1631, 23
        %v1633 = vor.u32 4788187, %v1632
        %v1634 = vand.u32 2147483647, %v1633
        %v1636 = vcvt.s32.f32 %v1629
        %v1637 = vmul.f32 %v1636, %v1634
        %v1638 = vxor.u32 %v1637, 2147483648
        %v1639 = vsel %vm1518, %v1638, %v1637
        %v1640 = vsub.s32 4, %v1616
        %v1641 = vsel %vm1518, %v1640, %v1616
        %v1642 = vsel %vm1517, %v418, %v1639
        %v1643 = vsel %vm1517, 0, %v1641
        %v1644 = vmul.f32 %v1642, %v1642
        %v1645 = vmul.f32 %v1644, -0.001358992
        %v1646 = vadd.f32 %v1645, 0.041655596
        %v1647 = vmul.f32 %v1644, %v1646
        %v1648 = vadd.f32 %v1647, -0.4999988
        %v1649 = vmul.f32 %v1644, %v1648
        %v1650 = vadd.f32 1.0, %v1649
        %v1651 = vmul.f32 %v1642, %v1642
        %v1652 = vmul.f32 %v1651, -0.00019511016
        %v1653 = vadd.f32 %v1652, 0.008332121
        %v1654 = vmul.f32 %v1651, %v1653
        %v1655 = vadd.f32 %v1654, -0.16666654
        %v1656 = vmul.f32 %v1651, %v1655
        %v1657 = vadd.f32 %v1656, 1.0
        %v1658 = vmul.f32 %v1657, %v1642
        %vm1659 = vweird.f32 %v418
        %v1660 = vadd.s32 %v1643, 3
        %v1661 = vand.u32 %v1660, 3
        %vm1662 = vcmp.lt.s32.totalorder %v1661, 2
        %vm1663 = vcmp.eq.s32.totalorder %v1661, 0
        %v1664 = vxor.u32 %v1658, 2147483648
        %v1665 = vsel %vm1663, %v1650, %v1664
        %vm1666 = vcmp.eq.s32.totalorder %v1661, 2
        %v1667 = vxor.u32 %v1650, 2147483648
        %v1668 = vsel %vm1666, %v1667, %v1658
        %v1669 = vsel %vm1662, %v1665, %v1668
        %v1670 = vsel %vm1659, nan, %v1669
        %v1671 = vand.u32 2147483647, %v419
        %vm1672 = vcmp.le.f32.partialorder %v1671, 0.7853982
        %vm1673 = vcmp.lt.s32.totalorder %v419, 0
        %v1674 = vand.u32 %v419, 2139095040
        %v1675 = vshrl.u32 %v1674, 23
        %v1676 = vsub.s32 %v1675, 127
        %v1677 = vand.u32 2147483647, %v419
        %v1678 = vand.u32 %v1677, 8388607
        %v1679 = vor.u32 %v1678, 8388608
        %v1680 = vsub.s32 0, %v1679
        %v1681 = vadd.s32 %v1676, 1
        %vm1682 = vcmp.gt.s32.totalorder %v1681, 0
        %v1683 = vsel %vm1682, %v1681, 0
        %v1684 = vshrl.u32 %v1683, 5
        %v1685 = vand.u32 %v1683, 31
        %v1686 = vsub.s32 32, %v1685
        %v1687 = vshrl.u32 683565275, %v1686
        %v1688 = vshll.u32 683565275, %v1685
        %v1689 = vshrl.u32 2475754826, %v1686
        %v1690 = vor.u32 %v1688, %v1689
        %v1691 = vshll.u32 2475754826, %v1685
        %v1692 = vshrl.u32 2131351028, %v1686
        %v1693 = vor.u32 %v1691, %v1692
        %v1694 = vshll.u32 2131351028, %v1685
        %v1695 = vshrl.u32 2102212464, %v1686
        %v1696 = vor.u32 %v1694, %v1695
        %v1697 = vshll.u32 2102212464, %v1685
        %v1698 = vshrl.u32 920167782, %v1686
        %v1699 = vor.u32 %v1697, %v1698
        %v1700 = vshll.u32 920167782, %v1685
        %v1701 = vshrl.u32 1326507024, %v1686
        %v1702 = vor.u32 %v1700, %v1701
        %vm1703 = vcmp.lt.s32.totalorder %v1684, 1
        %vm1704 = vcmp.lt.s32.totalorder %v1684, 2
        %vm1705 = vcmp.lt.s32.totalorder %v1684, 3
        %vm1706 = vcmp.lt.s32.totalorder %v1684, 4
        %v1707 = vsel %vm1703, %v1687, %v1690
        %v1708 = vsel %vm1706, %v1696, 2102212464
        %v1709 = vsel %vm1705, %v1693, %v1708
        %v1710 = vsel %vm1704, %v1707, %v1709
        %v1711 = vsel %vm1703, %v1690, %v1693
        %v1712 = vsel %vm1706, %v1699, 920167782
        %v1713 = vsel %vm1705, %v1696, %v1712
        %v1714 = vsel %vm1704, %v1711, %v1713
        %v1715 = vsel %vm1703, %v1693, %v1696
        %v1716 = vsel %vm1706, %v1702, 1326507024
        %v1717 = vsel %vm1705, %v1699, %v1716
        %v1718 = vsel %vm1704, %v1715, %v1717
        %v1719 = vshll.u32 %v1679, 8
        %v1720 = vand.u32 %v1719, 65535
        %v1721 = vshrl.u32 %v1719, 16
        %v1722 = vand.u32 %v1718, 65535
        %v1723 = vshrl.u32 %v1718, 16
        %v1724 = vmul.u32 %v1720, %v1722
        %v1725 = vmul.u32 %v1720, %v1723
        %v1726 = vmul.u32 %v1721, %v1722
        %v1727 = vmul.u32 %v1721, %v1723
        %v1728 = vshll.u32 %v1725, 16
        %v1729 = vshrl.u32 %v1725, 16
        %v1730 = vshll.u32 %v1726, 16
        %v1731 = vshrl.u32 %v1726, 16
        %vm1732 = vc.u32 %v1724, %v1728
        %v1733 = vsel %vm1732, 1, 0
        %v1734 = vadd.s32 %v1724, %v1728
        %v1735 = vadd.s32 %v1727, %v1733
        %vm1736 = vc.u32 %v1734, %v1730
        %v1737 = vsel %vm1736, 1, 0
        %v1738 = vadd.s32 %v1734, %v1730
        %v1739 = vadd.s32 %v1735, %v1737
        %v1740 = vadd.s32 %v1739, %v1729
        %v1741 = vadd.s32 %v1740, %v1731
        %v1742 = vand.u32 %v1719, 65535
        %v1743 = vshrl.u32 %v1719, 16
        %v1744 = vand.u32 %v1714, 65535
        %v1745 = vshrl.u32 %v1714, 16
        %v1746 = vmul.u32 %v1742, %v1744
        %v1747 = vmul.u32 %v1742, %v1745
        %v1748 = vmul.u32 %v1743, %v1744
        %v1749 = vmul.u32 %v1743, %v1745
        %v1750 = vshll.u32 %v1747, 16
        %v1751 = vshrl.u32 %v1747, 16
        %v1752 = vshll.u32 %v1748, 16
        %v1753 = vshrl.u32 %v1748, 16
        %vm1754 = vc.u32 %v1746, %v1750
        %v1755 = vsel %vm1754, 1, 0
        %v1756 = vadd.s32 %v1746, %v1750
        %v1757 = vadd.s32 %v1749, %v1755
        %vm1758 = vc.u32 %v1756, %v1752
        %v1759 = vsel %vm1758, 1, 0
        %v1760 = vadd.s32 %v1756, %v1752
        %v1761 = vadd.s32 %v1757, %v1759
        %v1762 = vadd.s32 %v1761, %v1751
        %v1763 = vadd.s32 %v1762, %v1753
        %v1764 = vmul.u32 %v1719, %v1710
        %v1765 = vadd.s32 %v1741, %v1760
        %vm1766 = vc.u32 %v1741, %v1760
        %v1767 = vadd.s32 %v1763, 1
        %v1768 = vsel %vm1766, %v1767, %v1763
        %v1769 = vadd.s32 %v1764, %v1768
        %v1770 = vadd.s32 %v1769, 536870912
        %v1771 = vshrl.u32 %v1770, 30
        %v1772 = vshll.u32 %v1771, 30
        %v1773 = vsub.s32 %v1769, %v1772
        %vm1774 = vcmp.lt.s32.totalorder %v1773, 0
        %v1775 = vsub.s32 0, %v1773
        %v1776 = vsel %vm1774, %v1775, %v1773
        %v1777 = vclz %v1776
        %v1778 = vsub.s32 %v1777, 2
        %vm1779 = vcmp.gt.s32.totalorder 0, %v1778
        %v1780 = vsel %vm1779, 0, %v1778
        %v1781 = vsub.s32 32, %v1780
        %v1782 = vshll.u32 %v1773, %v1780
        %v1783 = vshrl.u32 %v1765, %v1781
        %v1784 = vor.u32 %v1782, %v1783
        %v1785 = vsub.s32 4294967266, %v1780
        %v1786 = vadd.s32 %v1785, 127
        %v1787 = vshll.u32 %v1786, 23
        %v1788 = vor.u32 4788187, %v1787
        %v1789 = vand.u32 2147483647, %v1788
        %v1791 = vcvt.s32.f32 %v1784
        %v1792 = vmul.f32 %v1791, %v1789
        %v1793 = vxor.u32 %v1792, 2147483648
        %v1794 = vsel %vm1673, %v1793, %v1792
        %v1795 = vsub.s32 4, %v1771
        %v1796 = vsel %vm1673, %v1795, %v1771
        %v1797 = vsel %vm1672, %v419, %v1794
        %v1798 = vsel %vm1672, 0, %v1796
        %v1799 = vmul.f32 %v1797, %v1797
        %v1800 = vmul.f32 %v1799, -0.001358992
        %v1801 = vadd.f32 %v1800, 0.041655596
        %v1802 = vmul.f32 %v1799, %v1801
        %v1803 = vadd.f32 %v1802, -0.4999988
        %v1804 = vmul.f32 %v1799, %v1803
        %v1805 = vadd.f32 1.0, %v1804
        %v1806 = vmul.f32 %v1797, %v1797
        %v1807 = vmul.f32 %v1806, -0.00019511016
        %v1808 = vadd.f32 %v1807, 0.008332121
        %v1809 = vmul.f32 %v1806, %v1808
        %v1810 = vadd.f32 %v1809, -0.16666654
        %v1811 = vmul.f32 %v1806, %v1810
        %v1812 = vadd.f32 %v1811, 1.0
        %v1813 = vmul.f32 %v1812, %v1797
        %vm1814 = vweird.f32 %v419
        %v1815 = vadd.s32 %v1798, 3
        %v1816 = vand.u32 %v1815, 3
        %vm1817 = vcmp.lt.s32.totalorder %v1816, 2
        %vm1818 = vcmp.eq.s32.totalorder %v1816, 0
        %v1819 = vxor.u32 %v1813, 2147483648
        %v1820 = vsel %vm1818, %v1805, %v1819
        %vm1821 = vcmp.eq.s32.totalorder %v1816, 2
        %v1822 = vxor.u32 %v1805, 2147483648
        %v1823 = vsel %vm1821, %v1822, %v1813
        %v1824 = vsel %vm1817, %v1820, %v1823
        %v1825 = vsel %vm1814, nan, %v1824
        %v1826 = vand.u32 2147483647, %v420
        %vm1827 = vcmp.le.f32.partialorder %v1826, 0.7853982
        %vm1828 = vcmp.lt.s32.totalorder %v420, 0
        %v1829 = vand.u32 %v420, 2139095040
        %v1830 = vshrl.u32 %v1829, 23
        %v1831 = vsub.s32 %v1830, 127
        %v1832 = vand.u32 2147483647, %v420
        %v1833 = vand.u32 %v1832, 8388607
        %v1834 = vor.u32 %v1833, 8388608
        %v1835 = vsub.s32 0, %v1834
        %v1836 = vadd.s32 %v1831, 1
        %vm1837 = vcmp.gt.s32.totalorder %v1836, 0
        %v1838 = vsel %vm1837, %v1836, 0
        %v1839 = vshrl.u32 %v1838, 5
        %v1840 = vand.u32 %v1838, 31
        %v1841 = vsub.s32 32, %v1840
        %v1842 = vshrl.u32 683565275, %v1841
        %v1843 = vshll.u32 683565275, %v1840
        %v1844 = vshrl.u32 2475754826, %v1841
        %v1845 = vor.u32 %v1843, %v1844
        %v1846 = vshll.u32 2475754826, %v1840
        %v1847 = vshrl.u32 2131351028, %v1841
        %v1848 = vor.u32 %v1846, %v1847
        %v1849 = vshll.u32 2131351028, %v1840
        %v1850 = vshrl.u32 2102212464, %v1841
        %v1851 = vor.u32 %v1849, %v1850
        %v1852 = vshll.u32 2102212464, %v1840
        %v1853 = vshrl.u32 920167782, %v1841
        %v1854 = vor.u32 %v1852, %v1853
        %v1855 = vshll.u32 920167782, %v1840
        %v1856 = vshrl.u32 1326507024, %v1841
        %v1857 = vor.u32 %v1855, %v1856
        %vm1858 = vcmp.lt.s32.totalorder %v1839, 1
        %vm1859 = vcmp.lt.s32.totalorder %v1839, 2
        %vm1860 = vcmp.lt.s32.totalorder %v1839, 3
        %vm1861 = vcmp.lt.s32.totalorder %v1839, 4
        %v1862 = vsel %vm1858, %v1842, %v1845
        %v1863 = vsel %vm1861, %v1851, 2102212464
        %v1864 = vsel %vm1860, %v1848, %v1863
        %v1865 = vsel %vm1859, %v1862, %v1864
        %v1866 = vsel %vm1858, %v1845, %v1848
        %v1867 = vsel %vm1861, %v1854, 920167782
        %v1868 = vsel %vm1860, %v1851, %v1867
        %v1869 = vsel %vm1859, %v1866, %v1868
        %v1870 = vsel %vm1858, %v1848, %v1851
        %v1871 = vsel %vm1861, %v1857, 1326507024
        %v1872 = vsel %vm1860, %v1854, %v1871
        %v1873 = vsel %vm1859, %v1870, %v1872
        %v1874 = vshll.u32 %v1834, 8
        %v1875 = vand.u32 %v1874, 65535
        %v1876 = vshrl.u32 %v1874, 16
        %v1877 = vand.u32 %v1873, 65535
        %v1878 = vshrl.u32 %v1873, 16
        %v1879 = vmul.u32 %v1875, %v1877
        %v1880 = vmul.u32 %v1875, %v1878
        %v1881 = vmul.u32 %v1876, %v1877
        %v1882 = vmul.u32 %v1876, %v1878
        %v1883 = vshll.u32 %v1880, 16
        %v1884 = vshrl.u32 %v1880, 16
        %v1885 = vshll.u32 %v1881, 16
        %v1886 = vshrl.u32 %v1881, 16
        %vm1887 = vc.u32 %v1879, %v1883
        %v1888 = vsel %vm1887, 1, 0
        %v1889 = vadd.s32 %v1879, %v1883
        %v1890 = vadd.s32 %v1882, %v1888
        %vm1891 = vc.u32 %v1889, %v1885
        %v1892 = vsel %vm1891, 1, 0
        %v1893 = vadd.s32 %v1889, %v1885
        %v1894 = vadd.s32 %v1890, %v1892
        %v1895 = vadd.s32 %v1894, %v1884
        %v1896 = vadd.s32 %v1895, %v1886
        %v1897 = vand.u32 %v1874, 65535
        %v1898 = vshrl.u32 %v1874, 16
        %v1899 = vand.u32 %v1869, 65535
        %v1900 = vshrl.u32 %v1869, 16
        %v1901 = vmul.u32 %v1897, %v1899
        %v1902 = vmul.u32 %v1897, %v1900
        %v1903 = vmul.u32 %v1898, %v1899
        %v1904 = vmul.u32 %v1898, %v1900
        %v1905 = vshll.u32 %v1902, 16
        %v1906 = vshrl.u32 %v1902, 16
        %v1907 = vshll.u32 %v1903, 16
        %v1908 = vshrl.u32 %v1903, 16
        %vm1909 = vc.u32 %v1901, %v1905
        %v1910 = vsel %vm1909, 1, 0
        %v1911 = vadd.s32 %v1901, %v1905
        %v1912 = vadd.s32 %v1904, %v1910
        %vm1913 = vc.u32 %v1911, %v1907
        %v1914 = vsel %vm1913, 1, 0
        %v1915 = vadd.s32 %v1911, %v1907
        %v1916 = vadd.s32 %v1912, %v1914
        %v1917 = vadd.s32 %v1916, %v1906
        %v1918 = vadd.s32 %v1917, %v1908
        %v1919 = vmul.u32 %v1874, %v1865
        %v1920 = vadd.s32 %v1896, %v1915
        %vm1921 = vc.u32 %v1896, %v1915
        %v1922 = vadd.s32 %v1918, 1
        %v1923 = vsel %vm1921, %v1922, %v1918
        %v1924 = vadd.s32 %v1919, %v1923
        %v1925 = vadd.s32 %v1924, 536870912
        %v1926 = vshrl.u32 %v1925, 30
        %v1927 = vshll.u32 %v1926, 30
        %v1928 = vsub.s32 %v1924, %v1927
        %vm1929 = vcmp.lt.s32.totalorder %v1928, 0
        %v1930 = vsub.s32 0, %v1928
        %v1931 = vsel %vm1929, %v1930, %v1928
        %v1932 = vclz %v1931
        %v1933 = vsub.s32 %v1932, 2
        %vm1934 = vcmp.gt.s32.totalorder 0, %v1933
        %v1935 = vsel %vm1934, 0, %v1933
        %v1936 = vsub.s32 32, %v1935
        %v1937 = vshll.u32 %v1928, %v1935
        %v1938 = vshrl.u32 %v1920, %v1936
        %v1939 = vor.u32 %v1937, %v1938
        %v1940 = vsub.s32 4294967266, %v1935
        %v1941 = vadd.s32 %v1940, 127
        %v1942 = vshll.u32 %v1941, 23
        %v1943 = vor.u32 4788187, %v1942
        %v1944 = vand.u32 2147483647, %v1943
        %v1946 = vcvt.s32.f32 %v1939
        %v1947 = vmul.f32 %v1946, %v1944
        %v1948 = vxor.u32 %v1947, 2147483648
        %v1949 = vsel %vm1828, %v1948, %v1947
        %v1950 = vsub.s32 4, %v1926
        %v1951 = vsel %vm1828, %v1950, %v1926
        %v1952 = vsel %vm1827, %v420, %v1949
        %v1953 = vsel %vm1827, 0, %v1951
        %v1954 = vmul.f32 %v1952, %v1952
        %v1955 = vmul.f32 %v1954, -0.001358992
        %v1956 = vadd.f32 %v1955, 0.041655596
        %v1957 = vmul.f32 %v1954, %v1956
        %v1958 = vadd.f32 %v1957, -0.4999988
        %v1959 = vmul.f32 %v1954, %v1958
        %v1960 = vadd.f32 1.0, %v1959
        %v1961 = vmul.f32 %v1952, %v1952
        %v1962 = vmul.f32 %v1961, -0.00019511016
        %v1963 = vadd.f32 %v1962, 0.008332121
        %v1964 = vmul.f32 %v1961, %v1963
        %v1965 = vadd.f32 %v1964, -0.16666654
        %v1966 = vmul.f32 %v1961, %v1965
        %v1967 = vadd.f32 %v1966, 1.0
        %v1968 = vmul.f32 %v1967, %v1952
        %vm1969 = vweird.f32 %v420
        %v1970 = vadd.s32 %v1953, 3
        %v1971 = vand.u32 %v1970, 3
        %vm1972 = vcmp.lt.s32.totalorder %v1971, 2
        %vm1973 = vcmp.eq.s32.totalorder %v1971, 0
        %v1974 = vxor.u32 %v1968, 2147483648
        %v1975 = vsel %vm1973, %v1960, %v1974
        %vm1976 = vcmp.eq.s32.totalorder %v1971, 2
        %v1977 = vxor.u32 %v1960, 2147483648
        %v1978 = vsel %vm1976, %v1977, %v1968
        %v1979 = vsel %vm1972, %v1975, %v1978
        %v1980 = vsel %vm1969, nan, %v1979
        %v1981 = vand.u32 2147483647, %v421
        %vm1982 = vcmp.le.f32.partialorder %v1981, 0.7853982
        %vm1983 = vcmp.lt.s32.totalorder %v421, 0
        %v1984 = vand.u32 %v421, 2139095040
        %v1985 = vshrl.u32 %v1984, 23
        %v1986 = vsub.s32 %v1985, 127
        %v1987 = vand.u32 2147483647, %v421
        %v1988 = vand.u32 %v1987, 8388607
        %v1989 = vor.u32 %v1988, 8388608
        %v1990 = vsub.s32 0, %v1989
        %v1991 = vadd.s32 %v1986, 1
        %vm1992 = vcmp.gt.s32.totalorder %v1991, 0
        %v1993 = vsel %vm1992, %v1991, 0
        %v1994 = vshrl.u32 %v1993, 5
        %v1995 = vand.u32 %v1993, 31
        %v1996 = vsub.s32 32, %v1995
        %v1997 = vshrl.u32 683565275, %v1996
        %v1998 = vshll.u32 683565275, %v1995
        %v1999 = vshrl.u32 2475754826, %v1996
        %v2000 = vor.u32 %v1998, %v1999
        %v2001 = vshll.u32 2475754826, %v1995
        %v2002 = vshrl.u32 2131351028, %v1996
        %v2003 = vor.u32 %v2001, %v2002
        %v2004 = vshll.u32 2131351028, %v1995
        %v2005 = vshrl.u32 2102212464, %v1996
        %v2006 = vor.u32 %v2004, %v2005
        %v2007 = vshll.u32 2102212464, %v1995
        %v2008 = vshrl.u32 920167782, %v1996
        %v2009 = vor.u32 %v2007, %v2008
        %v2010 = vshll.u32 920167782, %v1995
        %v2011 = vshrl.u32 1326507024, %v1996
        %v2012 = vor.u32 %v2010, %v2011
        %vm2013 = vcmp.lt.s32.totalorder %v1994, 1
        %vm2014 = vcmp.lt.s32.totalorder %v1994, 2
        %vm2015 = vcmp.lt.s32.totalorder %v1994, 3
        %vm2016 = vcmp.lt.s32.totalorder %v1994, 4
        %v2017 = vsel %vm2013, %v1997, %v2000
        %v2018 = vsel %vm2016, %v2006, 2102212464
        %v2019 = vsel %vm2015, %v2003, %v2018
        %v2020 = vsel %vm2014, %v2017, %v2019
        %v2021 = vsel %vm2013, %v2000, %v2003
        %v2022 = vsel %vm2016, %v2009, 920167782
        %v2023 = vsel %vm2015, %v2006, %v2022
        %v2024 = vsel %vm2014, %v2021, %v2023
        %v2025 = vsel %vm2013, %v2003, %v2006
        %v2026 = vsel %vm2016, %v2012, 1326507024
        %v2027 = vsel %vm2015, %v2009, %v2026
        %v2028 = vsel %vm2014, %v2025, %v2027
        %v2029 = vshll.u32 %v1989, 8
        %v2030 = vand.u32 %v2029, 65535
        %v2031 = vshrl.u32 %v2029, 16
        %v2032 = vand.u32 %v2028, 65535
        %v2033 = vshrl.u32 %v2028, 16
        %v2034 = vmul.u32 %v2030, %v2032
        %v2035 = vmul.u32 %v2030, %v2033
        %v2036 = vmul.u32 %v2031, %v2032
        %v2037 = vmul.u32 %v2031, %v2033
        %v2038 = vshll.u32 %v2035, 16
        %v2039 = vshrl.u32 %v2035, 16
        %v2040 = vshll.u32 %v2036, 16
        %v2041 = vshrl.u32 %v2036, 16
        %vm2042 = vc.u32 %v2034, %v2038
        %v2043 = vsel %vm2042, 1, 0
        %v2044 = vadd.s32 %v2034, %v2038
        %v2045 = vadd.s32 %v2037, %v2043
        %vm2046 = vc.u32 %v2044, %v2040
        %v2047 = vsel %vm2046, 1, 0
        %v2048 = vadd.s32 %v2044, %v2040
        %v2049 = vadd.s32 %v2045, %v2047
        %v2050 = vadd.s32 %v2049, %v2039
        %v2051 = vadd.s32 %v2050, %v2041
        %v2052 = vand.u32 %v2029, 65535
        %v2053 = vshrl.u32 %v2029, 16
        %v2054 = vand.u32 %v2024, 65535
        %v2055 = vshrl.u32 %v2024, 16
        %v2056 = vmul.u32 %v2052, %v2054
        %v2057 = vmul.u32 %v2052, %v2055
        %v2058 = vmul.u32 %v2053, %v2054
        %v2059 = vmul.u32 %v2053, %v2055
        %v2060 = vshll.u32 %v2057, 16
        %v2061 = vshrl.u32 %v2057, 16
        %v2062 = vshll.u32 %v2058, 16
        %v2063 = vshrl.u32 %v2058, 16
        %vm2064 = vc.u32 %v2056, %v2060
        %v2065 = vsel %vm2064, 1, 0
        %v2066 = vadd.s32 %v2056, %v2060
        %v2067 = vadd.s32 %v2059, %v2065
        %vm2068 = vc.u32 %v2066, %v2062
        %v2069 = vsel %vm2068, 1, 0
        %v2070 = vadd.s32 %v2066, %v2062
        %v2071 = vadd.s32 %v2067, %v2069
        %v2072 = vadd.s32 %v2071, %v2061
        %v2073 = vadd.s32 %v2072, %v2063
        %v2074 = vmul.u32 %v2029, %v2020
        %v2075 = vadd.s32 %v2051, %v2070
        %vm2076 = vc.u32 %v2051, %v2070
        %v2077 = vadd.s32 %v2073, 1
        %v2078 = vsel %vm2076, %v2077, %v2073
        %v2079 = vadd.s32 %v2074, %v2078
        %v2080 = vadd.s32 %v2079, 536870912
        %v2081 = vshrl.u32 %v2080, 30
        %v2082 = vshll.u32 %v2081, 30
        %v2083 = vsub.s32 %v2079, %v2082
        %vm2084 = vcmp.lt.s32.totalorder %v2083, 0
        %v2085 = vsub.s32 0, %v2083
        %v2086 = vsel %vm2084, %v2085, %v2083
        %v2087 = vclz %v2086
        %v2088 = vsub.s32 %v2087, 2
        %vm2089 = vcmp.gt.s32.totalorder 0, %v2088
        %v2090 = vsel %vm2089, 0, %v2088
        %v2091 = vsub.s32 32, %v2090
        %v2092 = vshll.u32 %v2083, %v2090
        %v2093 = vshrl.u32 %v2075, %v2091
        %v2094 = vor.u32 %v2092, %v2093
        %v2095 = vsub.s32 4294967266, %v2090
        %v2096 = vadd.s32 %v2095, 127
        %v2097 = vshll.u32 %v2096, 23
        %v2098 = vor.u32 4788187, %v2097
        %v2099 = vand.u32 2147483647, %v2098
        %v2101 = vcvt.s32.f32 %v2094
        %v2102 = vmul.f32 %v2101, %v2099
        %v2103 = vxor.u32 %v2102, 2147483648
        %v2104 = vsel %vm1983, %v2103, %v2102
        %v2105 = vsub.s32 4, %v2081
        %v2106 = vsel %vm1983, %v2105, %v2081
        %v2107 = vsel %vm1982, %v421, %v2104
        %v2108 = vsel %vm1982, 0, %v2106
        %v2109 = vmul.f32 %v2107, %v2107
        %v2110 = vmul.f32 %v2109, -0.001358992
        %v2111 = vadd.f32 %v2110, 0.041655596
        %v2112 = vmul.f32 %v2109, %v2111
        %v2113 = vadd.f32 %v2112, -0.4999988
        %v2114 = vmul.f32 %v2109, %v2113
        %v2115 = vadd.f32 1.0, %v2114
        %v2116 = vmul.f32 %v2107, %v2107
        %v2117 = vmul.f32 %v2116, -0.00019511016
        %v2118 = vadd.f32 %v2117, 0.008332121
        %v2119 = vmul.f32 %v2116, %v2118
        %v2120 = vadd.f32 %v2119, -0.16666654
        %v2121 = vmul.f32 %v2116, %v2120
        %v2122 = vadd.f32 %v2121, 1.0
        %v2123 = vmul.f32 %v2122, %v2107
        %vm2124 = vweird.f32 %v421
        %v2125 = vadd.s32 %v2108, 3
        %v2126 = vand.u32 %v2125, 3
        %vm2127 = vcmp.lt.s32.totalorder %v2126, 2
        %vm2128 = vcmp.eq.s32.totalorder %v2126, 0
        %v2129 = vxor.u32 %v2123, 2147483648
        %v2130 = vsel %vm2128, %v2115, %v2129
        %vm2131 = vcmp.eq.s32.totalorder %v2126, 2
        %v2132 = vxor.u32 %v2115, 2147483648
        %v2133 = vsel %vm2131, %v2132, %v2123
        %v2134 = vsel %vm2127, %v2130, %v2133
        %v2135 = vsel %vm2124, nan, %v2134
        %v2136 = vand.u32 2147483647, %v422
        %vm2137 = vcmp.le.f32.partialorder %v2136, 0.7853982
        %vm2138 = vcmp.lt.s32.totalorder %v422, 0
        %v2139 = vand.u32 %v422, 2139095040
        %v2140 = vshrl.u32 %v2139, 23
        %v2141 = vsub.s32 %v2140, 127
        %v2142 = vand.u32 2147483647, %v422
        %v2143 = vand.u32 %v2142, 8388607
        %v2144 = vor.u32 %v2143, 8388608
        %v2145 = vsub.s32 0, %v2144
        %v2146 = vadd.s32 %v2141, 1
        %vm2147 = vcmp.gt.s32.totalorder %v2146, 0
        %v2148 = vsel %vm2147, %v2146, 0
        %v2149 = vshrl.u32 %v2148, 5
        %v2150 = vand.u32 %v2148, 31
        %v2151 = vsub.s32 32, %v2150
        %v2152 = vshrl.u32 683565275, %v2151
        %v2153 = vshll.u32 683565275, %v2150
        %v2154 = vshrl.u32 2475754826, %v2151
        %v2155 = vor.u32 %v2153, %v2154
        %v2156 = vshll.u32 2475754826, %v2150
        %v2157 = vshrl.u32 2131351028, %v2151
        %v2158 = vor.u32 %v2156, %v2157
        %v2159 = vshll.u32 2131351028, %v2150
        %v2160 = vshrl.u32 2102212464, %v2151
        %v2161 = vor.u32 %v2159, %v2160
        %v2162 = vshll.u32 2102212464, %v2150
        %v2163 = vshrl.u32 920167782, %v2151
        %v2164 = vor.u32 %v2162, %v2163
        %v2165 = vshll.u32 920167782, %v2150
        %v2166 = vshrl.u32 1326507024, %v2151
        %v2167 = vor.u32 %v2165, %v2166
        %vm2168 = vcmp.lt.s32.totalorder %v2149, 1
        %vm2169 = vcmp.lt.s32.totalorder %v2149, 2
        %vm2170 = vcmp.lt.s32.totalorder %v2149, 3
        %vm2171 = vcmp.lt.s32.totalorder %v2149, 4
        %v2172 = vsel %vm2168, %v2152, %v2155
        %v2173 = vsel %vm2171, %v2161, 2102212464
        %v2174 = vsel %vm2170, %v2158, %v2173
        %v2175 = vsel %vm2169, %v2172, %v2174
        %v2176 = vsel %vm2168, %v2155, %v2158
        %v2177 = vsel %vm2171, %v2164, 920167782
        %v2178 = vsel %vm2170, %v2161, %v2177
        %v2179 = vsel %vm2169, %v2176, %v2178
        %v2180 = vsel %vm2168, %v2158, %v2161
        %v2181 = vsel %vm2171, %v2167, 1326507024
        %v2182 = vsel %vm2170, %v2164, %v2181
        %v2183 = vsel %vm2169, %v2180, %v2182
        %v2184 = vshll.u32 %v2144, 8
        %v2185 = vand.u32 %v2184, 65535
        %v2186 = vshrl.u32 %v2184, 16
        %v2187 = vand.u32 %v2183, 65535
        %v2188 = vshrl.u32 %v2183, 16
        %v2189 = vmul.u32 %v2185, %v2187
        %v2190 = vmul.u32 %v2185, %v2188
        %v2191 = vmul.u32 %v2186, %v2187
        %v2192 = vmul.u32 %v2186, %v2188
        %v2193 = vshll.u32 %v2190, 16
        %v2194 = vshrl.u32 %v2190, 16
        %v2195 = vshll.u32 %v2191, 16
        %v2196 = vshrl.u32 %v2191, 16
        %vm2197 = vc.u32 %v2189, %v2193
        %v2198 = vsel %vm2197, 1, 0
        %v2199 = vadd.s32 %v2189, %v2193
        %v2200 = vadd.s32 %v2192, %v2198
        %vm2201 = vc.u32 %v2199, %v2195
        %v2202 = vsel %vm2201, 1, 0
        %v2203 = vadd.s32 %v2199, %v2195
        %v2204 = vadd.s32 %v2200, %v2202
        %v2205 = vadd.s32 %v2204, %v2194
        %v2206 = vadd.s32 %v2205, %v2196
        %v2207 = vand.u32 %v2184, 65535
        %v2208 = vshrl.u32 %v2184, 16
        %v2209 = vand.u32 %v2179, 65535
        %v2210 = vshrl.u32 %v2179, 16
        %v2211 = vmul.u32 %v2207, %v2209
        %v2212 = vmul.u32 %v2207, %v2210
        %v2213 = vmul.u32 %v2208, %v2209
        %v2214 = vmul.u32 %v2208, %v2210
        %v2215 = vshll.u32 %v2212, 16
        %v2216 = vshrl.u32 %v2212, 16
        %v2217 = vshll.u32 %v2213, 16
        %v2218 = vshrl.u32 %v2213, 16
        %vm2219 = vc.u32 %v2211, %v2215
        %v2220 = vsel %vm2219, 1, 0
        %v2221 = vadd.s32 %v2211, %v2215
        %v2222 = vadd.s32 %v2214, %v2220
        %vm2223 = vc.u32 %v2221, %v2217
        %v2224 = vsel %vm2223, 1, 0
        %v2225 = vadd.s32 %v2221, %v2217
        %v2226 = vadd.s32 %v2222, %v2224
        %v2227 = vadd.s32 %v2226, %v2216
        %v2228 = vadd.s32 %v2227, %v2218
        %v2229 = vmul.u32 %v2184, %v2175
        %v2230 = vadd.s32 %v2206, %v2225
        %vm2231 = vc.u32 %v2206, %v2225
        %v2232 = vadd.s32 %v2228, 1
        %v2233 = vsel %vm2231, %v2232, %v2228
        %v2234 = vadd.s32 %v2229, %v2233
        %v2235 = vadd.s32 %v2234, 536870912
        %v2236 = vshrl.u32 %v2235, 30
        %v2237 = vshll.u32 %v2236, 30
        %v2238 = vsub.s32 %v2234, %v2237
        %vm2239 = vcmp.lt.s32.totalorder %v2238, 0
        %v2240 = vsub.s32 0, %v2238
        %v2241 = vsel %vm2239, %v2240, %v2238
        %v2242 = vclz %v2241
        %v2243 = vsub.s32 %v2242, 2
        %vm2244 = vcmp.gt.s32.totalorder 0, %v2243
        %v2245 = vsel %vm2244, 0, %v2243
        %v2246 = vsub.s32 32, %v2245
        %v2247 = vshll.u32 %v2238, %v2245
        %v2248 = vshrl.u32 %v2230, %v2246
        %v2249 = vor.u32 %v2247, %v2248
        %v2250 = vsub.s32 4294967266, %v2245
        %v2251 = vadd.s32 %v2250, 127
        %v2252 = vshll.u32 %v2251, 23
        %v2253 = vor.u32 4788187, %v2252
        %v2254 = vand.u32 2147483647, %v2253
        %v2256 = vcvt.s32.f32 %v2249
        %v2257 = vmul.f32 %v2256, %v2254
        %v2258 = vxor.u32 %v2257, 2147483648
        %v2259 = vsel %vm2138, %v2258, %v2257
        %v2260 = vsub.s32 4, %v2236
        %v2261 = vsel %vm2138, %v2260, %v2236
        %v2262 = vsel %vm2137, %v422, %v2259
        %v2263 = vsel %vm2137, 0, %v2261
        %v2264 = vmul.f32 %v2262, %v2262
        %v2265 = vmul.f32 %v2264, -0.001358992
        %v2266 = vadd.f32 %v2265, 0.041655596
        %v2267 = vmul.f32 %v2264, %v2266
        %v2268 = vadd.f32 %v2267, -0.4999988
        %v2269 = vmul.f32 %v2264, %v2268
        %v2270 = vadd.f32 1.0, %v2269
        %v2271 = vmul.f32 %v2262, %v2262
        %v2272 = vmul.f32 %v2271, -0.00019511016
        %v2273 = vadd.f32 %v2272, 0.008332121
        %v2274 = vmul.f32 %v2271, %v2273
        %v2275 = vadd.f32 %v2274, -0.16666654
        %v2276 = vmul.f32 %v2271, %v2275
        %v2277 = vadd.f32 %v2276, 1.0
        %v2278 = vmul.f32 %v2277, %v2262
        %vm2279 = vweird.f32 %v422
        %v2280 = vadd.s32 %v2263, 3
        %v2281 = vand.u32 %v2280, 3
        %vm2282 = vcmp.lt.s32.totalorder %v2281, 2
        %vm2283 = vcmp.eq.s32.totalorder %v2281, 0
        %v2284 = vxor.u32 %v2278, 2147483648
        %v2285 = vsel %vm2283, %v2270, %v2284
        %vm2286 = vcmp.eq.s32.totalorder %v2281, 2
        %v2287 = vxor.u32 %v2270, 2147483648
        %v2288 = vsel %vm2286, %v2287, %v2278
        %v2289 = vsel %vm2282, %v2285, %v2288
        %v2290 = vsel %vm2279, nan, %v2289
        %v2291 = vand.u32 2147483647, %v423
        %vm2292 = vcmp.le.f32.partialorder %v2291, 0.7853982
        %vm2293 = vcmp.lt.s32.totalorder %v423, 0
        %v2294 = vand.u32 %v423, 2139095040
        %v2295 = vshrl.u32 %v2294, 23
        %v2296 = vsub.s32 %v2295, 127
        %v2297 = vand.u32 2147483647, %v423
        %v2298 = vand.u32 %v2297, 8388607
        %v2299 = vor.u32 %v2298, 8388608
        %v2300 = vsub.s32 0, %v2299
        %v2301 = vadd.s32 %v2296, 1
        %vm2302 = vcmp.gt.s32.totalorder %v2301, 0
        %v2303 = vsel %vm2302, %v2301, 0
        %v2304 = vshrl.u32 %v2303, 5
        %v2305 = vand.u32 %v2303, 31
        %v2306 = vsub.s32 32, %v2305
        %v2307 = vshrl.u32 683565275, %v2306
        %v2308 = vshll.u32 683565275, %v2305
        %v2309 = vshrl.u32 2475754826, %v2306
        %v2310 = vor.u32 %v2308, %v2309
        %v2311 = vshll.u32 2475754826, %v2305
        %v2312 = vshrl.u32 2131351028, %v2306
        %v2313 = vor.u32 %v2311, %v2312
        %v2314 = vshll.u32 2131351028, %v2305
        %v2315 = vshrl.u32 2102212464, %v2306
        %v2316 = vor.u32 %v2314, %v2315
        %v2317 = vshll.u32 2102212464, %v2305
        %v2318 = vshrl.u32 920167782, %v2306
        %v2319 = vor.u32 %v2317, %v2318
        %v2320 = vshll.u32 920167782, %v2305
        %v2321 = vshrl.u32 1326507024, %v2306
        %v2322 = vor.u32 %v2320, %v2321
        %vm2323 = vcmp.lt.s32.totalorder %v2304, 1
        %vm2324 = vcmp.lt.s32.totalorder %v2304, 2
        %vm2325 = vcmp.lt.s32.totalorder %v2304, 3
        %vm2326 = vcmp.lt.s32.totalorder %v2304, 4
        %v2327 = vsel %vm2323, %v2307, %v2310
        %v2328 = vsel %vm2326, %v2316, 2102212464
        %v2329 = vsel %vm2325, %v2313, %v2328
        %v2330 = vsel %vm2324, %v2327, %v2329
        %v2331 = vsel %vm2323, %v2310, %v2313
        %v2332 = vsel %vm2326, %v2319, 920167782
        %v2333 = vsel %vm2325, %v2316, %v2332
        %v2334 = vsel %vm2324, %v2331, %v2333
        %v2335 = vsel %vm2323, %v2313, %v2316
        %v2336 = vsel %vm2326, %v2322, 1326507024
        %v2337 = vsel %vm2325, %v2319, %v2336
        %v2338 = vsel %vm2324, %v2335, %v2337
        %v2339 = vshll.u32 %v2299, 8
        %v2340 = vand.u32 %v2339, 65535
        %v2341 = vshrl.u32 %v2339, 16
        %v2342 = vand.u32 %v2338, 65535
        %v2343 = vshrl.u32 %v2338, 16
        %v2344 = vmul.u32 %v2340, %v2342
        %v2345 = vmul.u32 %v2340, %v2343
        %v2346 = vmul.u32 %v2341, %v2342
        %v2347 = vmul.u32 %v2341, %v2343
        %v2348 = vshll.u32 %v2345, 16
        %v2349 = vshrl.u32 %v2345, 16
        %v2350 = vshll.u32 %v2346, 16
        %v2351 = vshrl.u32 %v2346, 16
        %vm2352 = vc.u32 %v2344, %v2348
        %v2353 = vsel %vm2352, 1, 0
        %v2354 = vadd.s32 %v2344, %v2348
        %v2355 = vadd.s32 %v2347, %v2353
        %vm2356 = vc.u32 %v2354, %v2350
        %v2357 = vsel %vm2356, 1, 0
        %v2358 = vadd.s32 %v2354, %v2350
        %v2359 = vadd.s32 %v2355, %v2357
        %v2360 = vadd.s32 %v2359, %v2349
        %v2361 = vadd.s32 %v2360, %v2351
        %v2362 = vand.u32 %v2339, 65535
        %v2363 = vshrl.u32 %v2339, 16
        %v2364 = vand.u32 %v2334, 65535
        %v2365 = vshrl.u32 %v2334, 16
        %v2366 = vmul.u32 %v2362, %v2364
        %v2367 = vmul.u32 %v2362, %v2365
        %v2368 = vmul.u32 %v2363, %v2364
        %v2369 = vmul.u32 %v2363, %v2365
        %v2370 = vshll.u32 %v2367, 16
        %v2371 = vshrl.u32 %v2367, 16
        %v2372 = vshll.u32 %v2368, 16
        %v2373 = vshrl.u32 %v2368, 16
        %vm2374 = vc.u32 %v2366, %v2370
        %v2375 = vsel %vm2374, 1, 0
        %v2376 = vadd.s32 %v2366, %v2370
        %v2377 = vadd.s32 %v2369, %v2375
        %vm2378 = vc.u32 %v2376, %v2372
        %v2379 = vsel %vm2378, 1, 0
        %v2380 = vadd.s32 %v2376, %v2372
        %v2381 = vadd.s32 %v2377, %v2379
        %v2382 = vadd.s32 %v2381, %v2371
        %v2383 = vadd.s32 %v2382, %v2373
        %v2384 = vmul.u32 %v2339, %v2330
        %v2385 = vadd.s32 %v2361, %v2380
        %vm2386 = vc.u32 %v2361, %v2380
        %v2387 = vadd.s32 %v2383, 1
        %v2388 = vsel %vm2386, %v2387, %v2383
        %v2389 = vadd.s32 %v2384, %v2388
        %v2390 = vadd.s32 %v2389, 536870912
        %v2391 = vshrl.u32 %v2390, 30
        %v2392 = vshll.u32 %v2391, 30
        %v2393 = vsub.s32 %v2389, %v2392
        %vm2394 = vcmp.lt.s32.totalorder %v2393, 0
        %v2395 = vsub.s32 0, %v2393
        %v2396 = vsel %vm2394, %v2395, %v2393
        %v2397 = vclz %v2396
        %v2398 = vsub.s32 %v2397, 2
        %vm2399 = vcmp.gt.s32.totalorder 0, %v2398
        %v2400 = vsel %vm2399, 0, %v2398
        %v2401 = vsub.s32 32, %v2400
        %v2402 = vshll.u32 %v2393, %v2400
        %v2403 = vshrl.u32 %v2385, %v2401
        %v2404 = vor.u32 %v2402, %v2403
        %v2405 = vsub.s32 4294967266, %v2400
        %v2406 = vadd.s32 %v2405, 127
        %v2407 = vshll.u32 %v2406, 23
        %v2408 = vor.u32 4788187, %v2407
        %v2409 = vand.u32 2147483647, %v2408
        %v2411 = vcvt.s32.f32 %v2404
        %v2412 = vmul.f32 %v2411, %v2409
        %v2413 = vxor.u32 %v2412, 2147483648
        %v2414 = vsel %vm2293, %v2413, %v2412
        %v2415 = vsub.s32 4, %v2391
        %v2416 = vsel %vm2293, %v2415, %v2391
        %v2417 = vsel %vm2292, %v423, %v2414
        %v2418 = vsel %vm2292, 0, %v2416
        %v2419 = vmul.f32 %v2417, %v2417
        %v2420 = vmul.f32 %v2419, -0.001358992
        %v2421 = vadd.f32 %v2420, 0.041655596
        %v2422 = vmul.f32 %v2419, %v2421
        %v2423 = vadd.f32 %v2422, -0.4999988
        %v2424 = vmul.f32 %v2419, %v2423
        %v2425 = vadd.f32 1.0, %v2424
        %v2426 = vmul.f32 %v2417, %v2417
        %v2427 = vmul.f32 %v2426, -0.00019511016
        %v2428 = vadd.f32 %v2427, 0.008332121
        %v2429 = vmul.f32 %v2426, %v2428
        %v2430 = vadd.f32 %v2429, -0.16666654
        %v2431 = vmul.f32 %v2426, %v2430
        %v2432 = vadd.f32 %v2431, 1.0
        %v2433 = vmul.f32 %v2432, %v2417
        %vm2434 = vweird.f32 %v423
        %v2435 = vadd.s32 %v2418, 3
        %v2436 = vand.u32 %v2435, 3
        %vm2437 = vcmp.lt.s32.totalorder %v2436, 2
        %vm2438 = vcmp.eq.s32.totalorder %v2436, 0
        %v2439 = vxor.u32 %v2433, 2147483648
        %v2440 = vsel %vm2438, %v2425, %v2439
        %vm2441 = vcmp.eq.s32.totalorder %v2436, 2
        %v2442 = vxor.u32 %v2425, 2147483648
        %v2443 = vsel %vm2441, %v2442, %v2433
        %v2444 = vsel %vm2437, %v2440, %v2443
        %v2445 = vsel %vm2434, nan, %v2444
        %v2446 = vand.u32 2147483647, %v424
        %vm2447 = vcmp.le.f32.partialorder %v2446, 0.7853982
        %vm2448 = vcmp.lt.s32.totalorder %v424, 0
        %v2449 = vand.u32 %v424, 2139095040
        %v2450 = vshrl.u32 %v2449, 23
        %v2451 = vsub.s32 %v2450, 127
        %v2452 = vand.u32 2147483647, %v424
        %v2453 = vand.u32 %v2452, 8388607
        %v2454 = vor.u32 %v2453, 8388608
        %v2455 = vsub.s32 0, %v2454
        %v2456 = vadd.s32 %v2451, 1
        %vm2457 = vcmp.gt.s32.totalorder %v2456, 0
        %v2458 = vsel %vm2457, %v2456, 0
        %v2459 = vshrl.u32 %v2458, 5
        %v2460 = vand.u32 %v2458, 31
        %v2461 = vsub.s32 32, %v2460
        %v2462 = vshrl.u32 683565275, %v2461
        %v2463 = vshll.u32 683565275, %v2460
        %v2464 = vshrl.u32 2475754826, %v2461
        %v2465 = vor.u32 %v2463, %v2464
        %v2466 = vshll.u32 2475754826, %v2460
        %v2467 = vshrl.u32 2131351028, %v2461
        %v2468 = vor.u32 %v2466, %v2467
        %v2469 = vshll.u32 2131351028, %v2460
        %v2470 = vshrl.u32 2102212464, %v2461
        %v2471 = vor.u32 %v2469, %v2470
        %v2472 = vshll.u32 2102212464, %v2460
        %v2473 = vshrl.u32 920167782, %v2461
        %v2474 = vor.u32 %v2472, %v2473
        %v2475 = vshll.u32 920167782, %v2460
        %v2476 = vshrl.u32 1326507024, %v2461
        %v2477 = vor.u32 %v2475, %v2476
        %vm2478 = vcmp.lt.s32.totalorder %v2459, 1
        %vm2479 = vcmp.lt.s32.totalorder %v2459, 2
        %vm2480 = vcmp.lt.s32.totalorder %v2459, 3
        %vm2481 = vcmp.lt.s32.totalorder %v2459, 4
        %v2482 = vsel %vm2478, %v2462, %v2465
        %v2483 = vsel %vm2481, %v2471, 2102212464
        %v2484 = vsel %vm2480, %v2468, %v2483
        %v2485 = vsel %vm2479, %v2482, %v2484
        %v2486 = vsel %vm2478, %v2465, %v2468
        %v2487 = vsel %vm2481, %v2474, 920167782
        %v2488 = vsel %vm2480, %v2471, %v2487
        %v2489 = vsel %vm2479, %v2486, %v2488
        %v2490 = vsel %vm2478, %v2468, %v2471
        %v2491 = vsel %vm2481, %v2477, 1326507024
        %v2492 = vsel %vm2480, %v2474, %v2491
        %v2493 = vsel %vm2479, %v2490, %v2492
        %v2494 = vshll.u32 %v2454, 8
        %v2495 = vand.u32 %v2494, 65535
        %v2496 = vshrl.u32 %v2494, 16
        %v2497 = vand.u32 %v2493, 65535
        %v2498 = vshrl.u32 %v2493, 16
        %v2499 = vmul.u32 %v2495, %v2497
        %v2500 = vmul.u32 %v2495, %v2498
        %v2501 = vmul.u32 %v2496, %v2497
        %v2502 = vmul.u32 %v2496, %v2498
        %v2503 = vshll.u32 %v2500, 16
        %v2504 = vshrl.u32 %v2500, 16
        %v2505 = vshll.u32 %v2501, 16
        %v2506 = vshrl.u32 %v2501, 16
        %vm2507 = vc.u32 %v2499, %v2503
        %v2508 = vsel %vm2507, 1, 0
        %v2509 = vadd.s32 %v2499, %v2503
        %v2510 = vadd.s32 %v2502, %v2508
        %vm2511 = vc.u32 %v2509, %v2505
        %v2512 = vsel %vm2511, 1, 0
        %v2513 = vadd.s32 %v2509, %v2505
        %v2514 = vadd.s32 %v2510, %v2512
        %v2515 = vadd.s32 %v2514, %v2504
        %v2516 = vadd.s32 %v2515, %v2506
        %v2517 = vand.u32 %v2494, 65535
        %v2518 = vshrl.u32 %v2494, 16
        %v2519 = vand.u32 %v2489, 65535
        %v2520 = vshrl.u32 %v2489, 16
        %v2521 = vmul.u32 %v2517, %v2519
        %v2522 = vmul.u32 %v2517, %v2520
        %v2523 = vmul.u32 %v2518, %v2519
        %v2524 = vmul.u32 %v2518, %v2520
        %v2525 = vshll.u32 %v2522, 16
        %v2526 = vshrl.u32 %v2522, 16
        %v2527 = vshll.u32 %v2523, 16
        %v2528 = vshrl.u32 %v2523, 16
        %vm2529 = vc.u32 %v2521, %v2525
        %v2530 = vsel %vm2529, 1, 0
        %v2531 = vadd.s32 %v2521, %v2525
        %v2532 = vadd.s32 %v2524, %v2530
        %vm2533 = vc.u32 %v2531, %v2527
        %v2534 = vsel %vm2533, 1, 0
        %v2535 = vadd.s32 %v2531, %v2527
        %v2536 = vadd.s32 %v2532, %v2534
        %v2537 = vadd.s32 %v2536, %v2526
        %v2538 = vadd.s32 %v2537, %v2528
        %v2539 = vmul.u32 %v2494, %v2485
        %v2540 = vadd.s32 %v2516, %v2535
        %vm2541 = vc.u32 %v2516, %v2535
        %v2542 = vadd.s32 %v2538, 1
        %v2543 = vsel %vm2541, %v2542, %v2538
        %v2544 = vadd.s32 %v2539, %v2543
        %v2545 = vadd.s32 %v2544, 536870912
        %v2546 = vshrl.u32 %v2545, 30
        %v2547 = vshll.u32 %v2546, 30
        %v2548 = vsub.s32 %v2544, %v2547
        %vm2549 = vcmp.lt.s32.totalorder %v2548, 0
        %v2550 = vsub.s32 0, %v2548
        %v2551 = vsel %vm2549, %v2550, %v2548
        %v2552 = vclz %v2551
        %v2553 = vsub.s32 %v2552, 2
        %vm2554 = vcmp.gt.s32.totalorder 0, %v2553
        %v2555 = vsel %vm2554, 0, %v2553
        %v2556 = vsub.s32 32, %v2555
        %v2557 = vshll.u32 %v2548, %v2555
        %v2558 = vshrl.u32 %v2540, %v2556
        %v2559 = vor.u32 %v2557, %v2558
        %v2560 = vsub.s32 4294967266, %v2555
        %v2561 = vadd.s32 %v2560, 127
        %v2562 = vshll.u32 %v2561, 23
        %v2563 = vor.u32 4788187, %v2562
        %v2564 = vand.u32 2147483647, %v2563
        %v2566 = vcvt.s32.f32 %v2559
        %v2567 = vmul.f32 %v2566, %v2564
        %v2568 = vxor.u32 %v2567, 2147483648
        %v2569 = vsel %vm2448, %v2568, %v2567
        %v2570 = vsub.s32 4, %v2546
        %v2571 = vsel %vm2448, %v2570, %v2546
        %v2572 = vsel %vm2447, %v424, %v2569
        %v2573 = vsel %vm2447, 0, %v2571
        %v2574 = vmul.f32 %v2572, %v2572
        %v2575 = vmul.f32 %v2574, -0.001358992
        %v2576 = vadd.f32 %v2575, 0.041655596
        %v2577 = vmul.f32 %v2574, %v2576
        %v2578 = vadd.f32 %v2577, -0.4999988
        %v2579 = vmul.f32 %v2574, %v2578
        %v2580 = vadd.f32 1.0, %v2579
        %v2581 = vmul.f32 %v2572, %v2572
        %v2582 = vmul.f32 %v2581, -0.00019511016
        %v2583 = vadd.f32 %v2582, 0.008332121
        %v2584 = vmul.f32 %v2581, %v2583
        %v2585 = vadd.f32 %v2584, -0.16666654
        %v2586 = vmul.f32 %v2581, %v2585
        %v2587 = vadd.f32 %v2586, 1.0
        %v2588 = vmul.f32 %v2587, %v2572
        %vm2589 = vweird.f32 %v424
        %v2590 = vadd.s32 %v2573, 3
        %v2591 = vand.u32 %v2590, 3
        %vm2592 = vcmp.lt.s32.totalorder %v2591, 2
        %vm2593 = vcmp.eq.s32.totalorder %v2591, 0
        %v2594 = vxor.u32 %v2588, 2147483648
        %v2595 = vsel %vm2593, %v2580, %v2594
        %vm2596 = vcmp.eq.s32.totalorder %v2591, 2
        %v2597 = vxor.u32 %v2580, 2147483648
        %v2598 = vsel %vm2596, %v2597, %v2588
        %v2599 = vsel %vm2592, %v2595, %v2598
        %v2600 = vsel %vm2589, nan, %v2599
        %v2601 = vand.u32 2147483647, %v425
        %vm2602 = vcmp.le.f32.partialorder %v2601, 0.7853982
        %vm2603 = vcmp.lt.s32.totalorder %v425, 0
        %v2604 = vand.u32 %v425, 2139095040
        %v2605 = vshrl.u32 %v2604, 23
        %v2606 = vsub.s32 %v2605, 127
        %v2607 = vand.u32 2147483647, %v425
        %v2608 = vand.u32 %v2607, 8388607
        %v2609 = vor.u32 %v2608, 8388608
        %v2610 = vsub.s32 0, %v2609
        %v2611 = vadd.s32 %v2606, 1
        %vm2612 = vcmp.gt.s32.totalorder %v2611, 0
        %v2613 = vsel %vm2612, %v2611, 0
        %v2614 = vshrl.u32 %v2613, 5
        %v2615 = vand.u32 %v2613, 31
        %v2616 = vsub.s32 32, %v2615
        %v2617 = vshrl.u32 683565275, %v2616
        %v2618 = vshll.u32 683565275, %v2615
        %v2619 = vshrl.u32 2475754826, %v2616
        %v2620 = vor.u32 %v2618, %v2619
        %v2621 = vshll.u32 2475754826, %v2615
        %v2622 = vshrl.u32 2131351028, %v2616
        %v2623 = vor.u32 %v2621, %v2622
        %v2624 = vshll.u32 2131351028, %v2615
        %v2625 = vshrl.u32 2102212464, %v2616
        %v2626 = vor.u32 %v2624, %v2625
        %v2627 = vshll.u32 2102212464, %v2615
        %v2628 = vshrl.u32 920167782, %v2616
        %v2629 = vor.u32 %v2627, %v2628
        %v2630 = vshll.u32 920167782, %v2615
        %v2631 = vshrl.u32 1326507024, %v2616
        %v2632 = vor.u32 %v2630, %v2631
        %vm2633 = vcmp.lt.s32.totalorder %v2614, 1
        %vm2634 = vcmp.lt.s32.totalorder %v2614, 2
        %vm2635 = vcmp.lt.s32.totalorder %v2614, 3
        %vm2636 = vcmp.lt.s32.totalorder %v2614, 4
        %v2637 = vsel %vm2633, %v2617, %v2620
        %v2638 = vsel %vm2636, %v2626, 2102212464
        %v2639 = vsel %vm2635, %v2623, %v2638
        %v2640 = vsel %vm2634, %v2637, %v2639
        %v2641 = vsel %vm2633, %v2620, %v2623
        %v2642 = vsel %vm2636, %v2629, 920167782
        %v2643 = vsel %vm2635, %v2626, %v2642
        %v2644 = vsel %vm2634, %v2641, %v2643
        %v2645 = vsel %vm2633, %v2623, %v2626
        %v2646 = vsel %vm2636, %v2632, 1326507024
        %v2647 = vsel %vm2635, %v2629, %v2646
        %v2648 = vsel %vm2634, %v2645, %v2647
        %v2649 = vshll.u32 %v2609, 8
        %v2650 = vand.u32 %v2649, 65535
        %v2651 = vshrl.u32 %v2649, 16
        %v2652 = vand.u32 %v2648, 65535
        %v2653 = vshrl.u32 %v2648, 16
        %v2654 = vmul.u32 %v2650, %v2652
        %v2655 = vmul.u32 %v2650, %v2653
        %v2656 = vmul.u32 %v2651, %v2652
        %v2657 = vmul.u32 %v2651, %v2653
        %v2658 = vshll.u32 %v2655, 16
        %v2659 = vshrl.u32 %v2655, 16
        %v2660 = vshll.u32 %v2656, 16
        %v2661 = vshrl.u32 %v2656, 16
        %vm2662 = vc.u32 %v2654, %v2658
        %v2663 = vsel %vm2662, 1, 0
        %v2664 = vadd.s32 %v2654, %v2658
        %v2665 = vadd.s32 %v2657, %v2663
        %vm2666 = vc.u32 %v2664, %v2660
        %v2667 = vsel %vm2666, 1, 0
        %v2668 = vadd.s32 %v2664, %v2660
        %v2669 = vadd.s32 %v2665, %v2667
        %v2670 = vadd.s32 %v2669, %v2659
        %v2671 = vadd.s32 %v2670, %v2661
        %v2672 = vand.u32 %v2649, 65535
        %v2673 = vshrl.u32 %v2649, 16
        %v2674 = vand.u32 %v2644, 65535
        %v2675 = vshrl.u32 %v2644, 16
        %v2676 = vmul.u32 %v2672, %v2674
        %v2677 = vmul.u32 %v2672, %v2675
        %v2678 = vmul.u32 %v2673, %v2674
        %v2679 = vmul.u32 %v2673, %v2675
        %v2680 = vshll.u32 %v2677, 16
        %v2681 = vshrl.u32 %v2677, 16
        %v2682 = vshll.u32 %v2678, 16
        %v2683 = vshrl.u32 %v2678, 16
        %vm2684 = vc.u32 %v2676, %v2680
        %v2685 = vsel %vm2684, 1, 0
        %v2686 = vadd.s32 %v2676, %v2680
        %v2687 = vadd.s32 %v2679, %v2685
        %vm2688 = vc.u32 %v2686, %v2682
        %v2689 = vsel %vm2688, 1, 0
        %v2690 = vadd.s32 %v2686, %v2682
        %v2691 = vadd.s32 %v2687, %v2689
        %v2692 = vadd.s32 %v2691, %v2681
        %v2693 = vadd.s32 %v2692, %v2683
        %v2694 = vmul.u32 %v2649, %v2640
        %v2695 = vadd.s32 %v2671, %v2690
        %vm2696 = vc.u32 %v2671, %v2690
        %v2697 = vadd.s32 %v2693, 1
        %v2698 = vsel %vm2696, %v2697, %v2693
        %v2699 = vadd.s32 %v2694, %v2698
        %v2700 = vadd.s32 %v2699, 536870912
        %v2701 = vshrl.u32 %v2700, 30
        %v2702 = vshll.u32 %v2701, 30
        %v2703 = vsub.s32 %v2699, %v2702
        %vm2704 = vcmp.lt.s32.totalorder %v2703, 0
        %v2705 = vsub.s32 0, %v2703
        %v2706 = vsel %vm2704, %v2705, %v2703
        %v2707 = vclz %v2706
        %v2708 = vsub.s32 %v2707, 2
        %vm2709 = vcmp.gt.s32.totalorder 0, %v2708
        %v2710 = vsel %vm2709, 0, %v2708
        %v2711 = vsub.s32 32, %v2710
        %v2712 = vshll.u32 %v2703, %v2710
        %v2713 = vshrl.u32 %v2695, %v2711
        %v2714 = vor.u32 %v2712, %v2713
        %v2715 = vsub.s32 4294967266, %v2710
        %v2716 = vadd.s32 %v2715, 127
        %v2717 = vshll.u32 %v2716, 23
        %v2718 = vor.u32 4788187, %v2717
        %v2719 = vand.u32 2147483647, %v2718
        %v2721 = vcvt.s32.f32 %v2714
        %v2722 = vmul.f32 %v2721, %v2719
        %v2723 = vxor.u32 %v2722, 2147483648
        %v2724 = vsel %vm2603, %v2723, %v2722
        %v2725 = vsub.s32 4, %v2701
        %v2726 = vsel %vm2603, %v2725, %v2701
        %v2727 = vsel %vm2602, %v425, %v2724
        %v2728 = vsel %vm2602, 0, %v2726
        %v2729 = vmul.f32 %v2727, %v2727
        %v2730 = vmul.f32 %v2729, -0.001358992
        %v2731 = vadd.f32 %v2730, 0.041655596
        %v2732 = vmul.f32 %v2729, %v2731
        %v2733 = vadd.f32 %v2732, -0.4999988
        %v2734 = vmul.f32 %v2729, %v2733
        %v2735 = vadd.f32 1.0, %v2734
        %v2736 = vmul.f32 %v2727, %v2727
        %v2737 = vmul.f32 %v2736, -0.00019511016
        %v2738 = vadd.f32 %v2737, 0.008332121
        %v2739 = vmul.f32 %v2736, %v2738
        %v2740 = vadd.f32 %v2739, -0.16666654
        %v2741 = vmul.f32 %v2736, %v2740
        %v2742 = vadd.f32 %v2741, 1.0
        %v2743 = vmul.f32 %v2742, %v2727
        %vm2744 = vweird.f32 %v425
        %v2745 = vadd.s32 %v2728, 3
        %v2746 = vand.u32 %v2745, 3
        %vm2747 = vcmp.lt.s32.totalorder %v2746, 2
        %vm2748 = vcmp.eq.s32.totalorder %v2746, 0
        %v2749 = vxor.u32 %v2743, 2147483648
        %v2750 = vsel %vm2748, %v2735, %v2749
        %vm2751 = vcmp.eq.s32.totalorder %v2746, 2
        %v2752 = vxor.u32 %v2735, 2147483648
        %v2753 = vsel %vm2751, %v2752, %v2743
        %v2754 = vsel %vm2747, %v2750, %v2753
        %v2755 = vsel %vm2744, nan, %v2754
        %v2756 = vand.u32 2147483647, %v426
        %vm2757 = vcmp.le.f32.partialorder %v2756, 0.7853982
        %vm2758 = vcmp.lt.s32.totalorder %v426, 0
        %v2759 = vand.u32 %v426, 2139095040
        %v2760 = vshrl.u32 %v2759, 23
        %v2761 = vsub.s32 %v2760, 127
        %v2762 = vand.u32 2147483647, %v426
        %v2763 = vand.u32 %v2762, 8388607
        %v2764 = vor.u32 %v2763, 8388608
        %v2765 = vsub.s32 0, %v2764
        %v2766 = vadd.s32 %v2761, 1
        %vm2767 = vcmp.gt.s32.totalorder %v2766, 0
        %v2768 = vsel %vm2767, %v2766, 0
        %v2769 = vshrl.u32 %v2768, 5
        %v2770 = vand.u32 %v2768, 31
        %v2771 = vsub.s32 32, %v2770
        %v2772 = vshrl.u32 683565275, %v2771
        %v2773 = vshll.u32 683565275, %v2770
        %v2774 = vshrl.u32 2475754826, %v2771
        %v2775 = vor.u32 %v2773, %v2774
        %v2776 = vshll.u32 2475754826, %v2770
        %v2777 = vshrl.u32 2131351028, %v2771
        %v2778 = vor.u32 %v2776, %v2777
        %v2779 = vshll.u32 2131351028, %v2770
        %v2780 = vshrl.u32 2102212464, %v2771
        %v2781 = vor.u32 %v2779, %v2780
        %v2782 = vshll.u32 2102212464, %v2770
        %v2783 = vshrl.u32 920167782, %v2771
        %v2784 = vor.u32 %v2782, %v2783
        %v2785 = vshll.u32 920167782, %v2770
        %v2786 = vshrl.u32 1326507024, %v2771
        %v2787 = vor.u32 %v2785, %v2786
        %vm2788 = vcmp.lt.s32.totalorder %v2769, 1
        %vm2789 = vcmp.lt.s32.totalorder %v2769, 2
        %vm2790 = vcmp.lt.s32.totalorder %v2769, 3
        %vm2791 = vcmp.lt.s32.totalorder %v2769, 4
        %v2792 = vsel %vm2788, %v2772, %v2775
        %v2793 = vsel %vm2791, %v2781, 2102212464
        %v2794 = vsel %vm2790, %v2778, %v2793
        %v2795 = vsel %vm2789, %v2792, %v2794
        %v2796 = vsel %vm2788, %v2775, %v2778
        %v2797 = vsel %vm2791, %v2784, 920167782
        %v2798 = vsel %vm2790, %v2781, %v2797
        %v2799 = vsel %vm2789, %v2796, %v2798
        %v2800 = vsel %vm2788, %v2778, %v2781
        %v2801 = vsel %vm2791, %v2787, 1326507024
        %v2802 = vsel %vm2790, %v2784, %v2801
        %v2803 = vsel %vm2789, %v2800, %v2802
        %v2804 = vshll.u32 %v2764, 8
        %v2805 = vand.u32 %v2804, 65535
        %v2806 = vshrl.u32 %v2804, 16
        %v2807 = vand.u32 %v2803, 65535
        %v2808 = vshrl.u32 %v2803, 16
        %v2809 = vmul.u32 %v2805, %v2807
        %v2810 = vmul.u32 %v2805, %v2808
        %v2811 = vmul.u32 %v2806, %v2807
        %v2812 = vmul.u32 %v2806, %v2808
        %v2813 = vshll.u32 %v2810, 16
        %v2814 = vshrl.u32 %v2810, 16
        %v2815 = vshll.u32 %v2811, 16
        %v2816 = vshrl.u32 %v2811, 16
        %vm2817 = vc.u32 %v2809, %v2813
        %v2818 = vsel %vm2817, 1, 0
        %v2819 = vadd.s32 %v2809, %v2813
        %v2820 = vadd.s32 %v2812, %v2818
        %vm2821 = vc.u32 %v2819, %v2815
        %v2822 = vsel %vm2821, 1, 0
        %v2823 = vadd.s32 %v2819, %v2815
        %v2824 = vadd.s32 %v2820, %v2822
        %v2825 = vadd.s32 %v2824, %v2814
        %v2826 = vadd.s32 %v2825, %v2816
        %v2827 = vand.u32 %v2804, 65535
        %v2828 = vshrl.u32 %v2804, 16
        %v2829 = vand.u32 %v2799, 65535
        %v2830 = vshrl.u32 %v2799, 16
        %v2831 = vmul.u32 %v2827, %v2829
        %v2832 = vmul.u32 %v2827, %v2830
        %v2833 = vmul.u32 %v2828, %v2829
        %v2834 = vmul.u32 %v2828, %v2830
        %v2835 = vshll.u32 %v2832, 16
        %v2836 = vshrl.u32 %v2832, 16
        %v2837 = vshll.u32 %v2833, 16
        %v2838 = vshrl.u32 %v2833, 16
        %vm2839 = vc.u32 %v2831, %v2835
        %v2840 = vsel %vm2839, 1, 0
        %v2841 = vadd.s32 %v2831, %v2835
        %v2842 = vadd.s32 %v2834, %v2840
        %vm2843 = vc.u32 %v2841, %v2837
        %v2844 = vsel %vm2843, 1, 0
        %v2845 = vadd.s32 %v2841, %v2837
        %v2846 = vadd.s32 %v2842, %v2844
        %v2847 = vadd.s32 %v2846, %v2836
        %v2848 = vadd.s32 %v2847, %v2838
        %v2849 = vmul.u32 %v2804, %v2795
        %v2850 = vadd.s32 %v2826, %v2845
        %vm2851 = vc.u32 %v2826, %v2845
        %v2852 = vadd.s32 %v2848, 1
        %v2853 = vsel %vm2851, %v2852, %v2848
        %v2854 = vadd.s32 %v2849, %v2853
        %v2855 = vadd.s32 %v2854, 536870912
        %v2856 = vshrl.u32 %v2855, 30
        %v2857 = vshll.u32 %v2856, 30
        %v2858 = vsub.s32 %v2854, %v2857
        %vm2859 = vcmp.lt.s32.totalorder %v2858, 0
        %v2860 = vsub.s32 0, %v2858
        %v2861 = vsel %vm2859, %v2860, %v2858
        %v2862 = vclz %v2861
        %v2863 = vsub.s32 %v2862, 2
        %vm2864 = vcmp.gt.s32.totalorder 0, %v2863
        %v2865 = vsel %vm2864, 0, %v2863
        %v2866 = vsub.s32 32, %v2865
        %v2867 = vshll.u32 %v2858, %v2865
        %v2868 = vshrl.u32 %v2850, %v2866
        %v2869 = vor.u32 %v2867, %v2868
        %v2870 = vsub.s32 4294967266, %v2865
        %v2871 = vadd.s32 %v2870, 127
        %v2872 = vshll.u32 %v2871, 23
        %v2873 = vor.u32 4788187, %v2872
        %v2874 = vand.u32 2147483647, %v2873
        %v2876 = vcvt.s32.f32 %v2869
        %v2877 = vmul.f32 %v2876, %v2874
        %v2878 = vxor.u32 %v2877, 2147483648
        %v2879 = vsel %vm2758, %v2878, %v2877
        %v2880 = vsub.s32 4, %v2856
        %v2881 = vsel %vm2758, %v2880, %v2856
        %v2882 = vsel %vm2757, %v426, %v2879
        %v2883 = vsel %vm2757, 0, %v2881
        %v2884 = vmul.f32 %v2882, %v2882
        %v2885 = vmul.f32 %v2884, -0.001358992
        %v2886 = vadd.f32 %v2885, 0.041655596
        %v2887 = vmul.f32 %v2884, %v2886
        %v2888 = vadd.f32 %v2887, -0.4999988
        %v2889 = vmul.f32 %v2884, %v2888
        %v2890 = vadd.f32 1.0, %v2889
        %v2891 = vmul.f32 %v2882, %v2882
        %v2892 = vmul.f32 %v2891, -0.00019511016
        %v2893 = vadd.f32 %v2892, 0.008332121
        %v2894 = vmul.f32 %v2891, %v2893
        %v2895 = vadd.f32 %v2894, -0.16666654
        %v2896 = vmul.f32 %v2891, %v2895
        %v2897 = vadd.f32 %v2896, 1.0
        %v2898 = vmul.f32 %v2897, %v2882
        %vm2899 = vweird.f32 %v426
        %v2900 = vadd.s32 %v2883, 3
        %v2901 = vand.u32 %v2900, 3
        %vm2902 = vcmp.lt.s32.totalorder %v2901, 2
        %vm2903 = vcmp.eq.s32.totalorder %v2901, 0
        %v2904 = vxor.u32 %v2898, 2147483648
        %v2905 = vsel %vm2903, %v2890, %v2904
        %vm2906 = vcmp.eq.s32.totalorder %v2901, 2
        %v2907 = vxor.u32 %v2890, 2147483648
        %v2908 = vsel %vm2906, %v2907, %v2898
        %v2909 = vsel %vm2902, %v2905, %v2908
        %v2910 = vsel %vm2899, nan, %v2909
        %v2911 = vand.u32 2147483647, %v427
        %vm2912 = vcmp.le.f32.partialorder %v2911, 0.7853982
        %vm2913 = vcmp.lt.s32.totalorder %v427, 0
        %v2914 = vand.u32 %v427, 2139095040
        %v2915 = vshrl.u32 %v2914, 23
        %v2916 = vsub.s32 %v2915, 127
        %v2917 = vand.u32 2147483647, %v427
        %v2918 = vand.u32 %v2917, 8388607
        %v2919 = vor.u32 %v2918, 8388608
        %v2920 = vsub.s32 0, %v2919
        %v2921 = vadd.s32 %v2916, 1
        %vm2922 = vcmp.gt.s32.totalorder %v2921, 0
        %v2923 = vsel %vm2922, %v2921, 0
        %v2924 = vshrl.u32 %v2923, 5
        %v2925 = vand.u32 %v2923, 31
        %v2926 = vsub.s32 32, %v2925
        %v2927 = vshrl.u32 683565275, %v2926
        %v2928 = vshll.u32 683565275, %v2925
        %v2929 = vshrl.u32 2475754826, %v2926
        %v2930 = vor.u32 %v2928, %v2929
        %v2931 = vshll.u32 2475754826, %v2925
        %v2932 = vshrl.u32 2131351028, %v2926
        %v2933 = vor.u32 %v2931, %v2932
        %v2934 = vshll.u32 2131351028, %v2925
        %v2935 = vshrl.u32 2102212464, %v2926
        %v2936 = vor.u32 %v2934, %v2935
        %v2937 = vshll.u32 2102212464, %v2925
        %v2938 = vshrl.u32 920167782, %v2926
        %v2939 = vor.u32 %v2937, %v2938
        %v2940 = vshll.u32 920167782, %v2925
        %v2941 = vshrl.u32 1326507024, %v2926
        %v2942 = vor.u32 %v2940, %v2941
        %vm2943 = vcmp.lt.s32.totalorder %v2924, 1
        %vm2944 = vcmp.lt.s32.totalorder %v2924, 2
        %vm2945 = vcmp.lt.s32.totalorder %v2924, 3
        %vm2946 = vcmp.lt.s32.totalorder %v2924, 4
        %v2947 = vsel %vm2943, %v2927, %v2930
        %v2948 = vsel %vm2946, %v2936, 2102212464
        %v2949 = vsel %vm2945, %v2933, %v2948
        %v2950 = vsel %vm2944, %v2947, %v2949
        %v2951 = vsel %vm2943, %v2930, %v2933
        %v2952 = vsel %vm2946, %v2939, 920167782
        %v2953 = vsel %vm2945, %v2936, %v2952
        %v2954 = vsel %vm2944, %v2951, %v2953
        %v2955 = vsel %vm2943, %v2933, %v2936
        %v2956 = vsel %vm2946, %v2942, 1326507024
        %v2957 = vsel %vm2945, %v2939, %v2956
        %v2958 = vsel %vm2944, %v2955, %v2957
        %v2959 = vshll.u32 %v2919, 8
        %v2960 = vand.u32 %v2959, 65535
        %v2961 = vshrl.u32 %v2959, 16
        %v2962 = vand.u32 %v2958, 65535
        %v2963 = vshrl.u32 %v2958, 16
        %v2964 = vmul.u32 %v2960, %v2962
        %v2965 = vmul.u32 %v2960, %v2963
        %v2966 = vmul.u32 %v2961, %v2962
        %v2967 = vmul.u32 %v2961, %v2963
        %v2968 = vshll.u32 %v2965, 16
        %v2969 = vshrl.u32 %v2965, 16
        %v2970 = vshll.u32 %v2966, 16
        %v2971 = vshrl.u32 %v2966, 16
        %vm2972 = vc.u32 %v2964, %v2968
        %v2973 = vsel %vm2972, 1, 0
        %v2974 = vadd.s32 %v2964, %v2968
        %v2975 = vadd.s32 %v2967, %v2973
        %vm2976 = vc.u32 %v2974, %v2970
        %v2977 = vsel %vm2976, 1, 0
        %v2978 = vadd.s32 %v2974, %v2970
        %v2979 = vadd.s32 %v2975, %v2977
        %v2980 = vadd.s32 %v2979, %v2969
        %v2981 = vadd.s32 %v2980, %v2971
        %v2982 = vand.u32 %v2959, 65535
        %v2983 = vshrl.u32 %v2959, 16
        %v2984 = vand.u32 %v2954, 65535
        %v2985 = vshrl.u32 %v2954, 16
        %v2986 = vmul.u32 %v2982, %v2984
        %v2987 = vmul.u32 %v2982, %v2985
        %v2988 = vmul.u32 %v2983, %v2984
        %v2989 = vmul.u32 %v2983, %v2985
        %v2990 = vshll.u32 %v2987, 16
        %v2991 = vshrl.u32 %v2987, 16
        %v2992 = vshll.u32 %v2988, 16
        %v2993 = vshrl.u32 %v2988, 16
        %vm2994 = vc.u32 %v2986, %v2990
        %v2995 = vsel %vm2994, 1, 0
        %v2996 = vadd.s32 %v2986, %v2990
        %v2997 = vadd.s32 %v2989, %v2995
        %vm2998 = vc.u32 %v2996, %v2992
        %v2999 = vsel %vm2998, 1, 0
        %v3000 = vadd.s32 %v2996, %v2992
        %v3001 = vadd.s32 %v2997, %v2999
        %v3002 = vadd.s32 %v3001, %v2991
        %v3003 = vadd.s32 %v3002, %v2993
        %v3004 = vmul.u32 %v2959, %v2950
        %v3005 = vadd.s32 %v2981, %v3000
        %vm3006 = vc.u32 %v2981, %v3000
        %v3007 = vadd.s32 %v3003, 1
        %v3008 = vsel %vm3006, %v3007, %v3003
        %v3009 = vadd.s32 %v3004, %v3008
        %v3010 = vadd.s32 %v3009, 536870912
        %v3011 = vshrl.u32 %v3010, 30
        %v3012 = vshll.u32 %v3011, 30
        %v3013 = vsub.s32 %v3009, %v3012
        %vm3014 = vcmp.lt.s32.totalorder %v3013, 0
        %v3015 = vsub.s32 0, %v3013
        %v3016 = vsel %vm3014, %v3015, %v3013
        %v3017 = vclz %v3016
        %v3018 = vsub.s32 %v3017, 2
        %vm3019 = vcmp.gt.s32.totalorder 0, %v3018
        %v3020 = vsel %vm3019, 0, %v3018
        %v3021 = vsub.s32 32, %v3020
        %v3022 = vshll.u32 %v3013, %v3020
        %v3023 = vshrl.u32 %v3005, %v3021
        %v3024 = vor.u32 %v3022, %v3023
        %v3025 = vsub.s32 4294967266, %v3020
        %v3026 = vadd.s32 %v3025, 127
        %v3027 = vshll.u32 %v3026, 23
        %v3028 = vor.u32 4788187, %v3027
        %v3029 = vand.u32 2147483647, %v3028
        %v3031 = vcvt.s32.f32 %v3024
        %v3032 = vmul.f32 %v3031, %v3029
        %v3033 = vxor.u32 %v3032, 2147483648
        %v3034 = vsel %vm2913, %v3033, %v3032
        %v3035 = vsub.s32 4, %v3011
        %v3036 = vsel %vm2913, %v3035, %v3011
        %v3037 = vsel %vm2912, %v427, %v3034
        %v3038 = vsel %vm2912, 0, %v3036
        %v3039 = vmul.f32 %v3037, %v3037
        %v3040 = vmul.f32 %v3039, -0.001358992
        %v3041 = vadd.f32 %v3040, 0.041655596
        %v3042 = vmul.f32 %v3039, %v3041
        %v3043 = vadd.f32 %v3042, -0.4999988
        %v3044 = vmul.f32 %v3039, %v3043
        %v3045 = vadd.f32 1.0, %v3044
        %v3046 = vmul.f32 %v3037, %v3037
        %v3047 = vmul.f32 %v3046, -0.00019511016
        %v3048 = vadd.f32 %v3047, 0.008332121
        %v3049 = vmul.f32 %v3046, %v3048
        %v3050 = vadd.f32 %v3049, -0.16666654
        %v3051 = vmul.f32 %v3046, %v3050
        %v3052 = vadd.f32 %v3051, 1.0
        %v3053 = vmul.f32 %v3052, %v3037
        %vm3054 = vweird.f32 %v427
        %v3055 = vadd.s32 %v3038, 3
        %v3056 = vand.u32 %v3055, 3
        %vm3057 = vcmp.lt.s32.totalorder %v3056, 2
        %vm3058 = vcmp.eq.s32.totalorder %v3056, 0
        %v3059 = vxor.u32 %v3053, 2147483648
        %v3060 = vsel %vm3058, %v3045, %v3059
        %vm3061 = vcmp.eq.s32.totalorder %v3056, 2
        %v3062 = vxor.u32 %v3045, 2147483648
        %v3063 = vsel %vm3061, %v3062, %v3053
        %v3064 = vsel %vm3057, %v3060, %v3063
        %v3065 = vsel %vm3054, nan, %v3064
        %v3066 = vand.u32 2147483647, %v428
        %vm3067 = vcmp.le.f32.partialorder %v3066, 0.7853982
        %vm3068 = vcmp.lt.s32.totalorder %v428, 0
        %v3069 = vand.u32 %v428, 2139095040
        %v3070 = vshrl.u32 %v3069, 23
        %v3071 = vsub.s32 %v3070, 127
        %v3072 = vand.u32 2147483647, %v428
        %v3073 = vand.u32 %v3072, 8388607
        %v3074 = vor.u32 %v3073, 8388608
        %v3075 = vsub.s32 0, %v3074
        %v3076 = vadd.s32 %v3071, 1
        %vm3077 = vcmp.gt.s32.totalorder %v3076, 0
        %v3078 = vsel %vm3077, %v3076, 0
        %v3079 = vshrl.u32 %v3078, 5
        %v3080 = vand.u32 %v3078, 31
        %v3081 = vsub.s32 32, %v3080
        %v3082 = vshrl.u32 683565275, %v3081
        %v3083 = vshll.u32 683565275, %v3080
        %v3084 = vshrl.u32 2475754826, %v3081
        %v3085 = vor.u32 %v3083, %v3084
        %v3086 = vshll.u32 2475754826, %v3080
        %v3087 = vshrl.u32 2131351028, %v3081
        %v3088 = vor.u32 %v3086, %v3087
        %v3089 = vshll.u32 2131351028, %v3080
        %v3090 = vshrl.u32 2102212464, %v3081
        %v3091 = vor.u32 %v3089, %v3090
        %v3092 = vshll.u32 2102212464, %v3080
        %v3093 = vshrl.u32 920167782, %v3081
        %v3094 = vor.u32 %v3092, %v3093
        %v3095 = vshll.u32 920167782, %v3080
        %v3096 = vshrl.u32 1326507024, %v3081
        %v3097 = vor.u32 %v3095, %v3096
        %vm3098 = vcmp.lt.s32.totalorder %v3079, 1
        %vm3099 = vcmp.lt.s32.totalorder %v3079, 2
        %vm3100 = vcmp.lt.s32.totalorder %v3079, 3
        %vm3101 = vcmp.lt.s32.totalorder %v3079, 4
        %v3102 = vsel %vm3098, %v3082, %v3085
        %v3103 = vsel %vm3101, %v3091, 2102212464
        %v3104 = vsel %vm3100, %v3088, %v3103
        %v3105 = vsel %vm3099, %v3102, %v3104
        %v3106 = vsel %vm3098, %v3085, %v3088
        %v3107 = vsel %vm3101, %v3094, 920167782
        %v3108 = vsel %vm3100, %v3091, %v3107
        %v3109 = vsel %vm3099, %v3106, %v3108
        %v3110 = vsel %vm3098, %v3088, %v3091
        %v3111 = vsel %vm3101, %v3097, 1326507024
        %v3112 = vsel %vm3100, %v3094, %v3111
        %v3113 = vsel %vm3099, %v3110, %v3112
        %v3114 = vshll.u32 %v3074, 8
        %v3115 = vand.u32 %v3114, 65535
        %v3116 = vshrl.u32 %v3114, 16
        %v3117 = vand.u32 %v3113, 65535
        %v3118 = vshrl.u32 %v3113, 16
        %v3119 = vmul.u32 %v3115, %v3117
        %v3120 = vmul.u32 %v3115, %v3118
        %v3121 = vmul.u32 %v3116, %v3117
        %v3122 = vmul.u32 %v3116, %v3118
        %v3123 = vshll.u32 %v3120, 16
        %v3124 = vshrl.u32 %v3120, 16
        %v3125 = vshll.u32 %v3121, 16
        %v3126 = vshrl.u32 %v3121, 16
        %vm3127 = vc.u32 %v3119, %v3123
        %v3128 = vsel %vm3127, 1, 0
        %v3129 = vadd.s32 %v3119, %v3123
        %v3130 = vadd.s32 %v3122, %v3128
        %vm3131 = vc.u32 %v3129, %v3125
        %v3132 = vsel %vm3131, 1, 0
        %v3133 = vadd.s32 %v3129, %v3125
        %v3134 = vadd.s32 %v3130, %v3132
        %v3135 = vadd.s32 %v3134, %v3124
        %v3136 = vadd.s32 %v3135, %v3126
        %v3137 = vand.u32 %v3114, 65535
        %v3138 = vshrl.u32 %v3114, 16
        %v3139 = vand.u32 %v3109, 65535
        %v3140 = vshrl.u32 %v3109, 16
        %v3141 = vmul.u32 %v3137, %v3139
        %v3142 = vmul.u32 %v3137, %v3140
        %v3143 = vmul.u32 %v3138, %v3139
        %v3144 = vmul.u32 %v3138, %v3140
        %v3145 = vshll.u32 %v3142, 16
        %v3146 = vshrl.u32 %v3142, 16
        %v3147 = vshll.u32 %v3143, 16
        %v3148 = vshrl.u32 %v3143, 16
        %vm3149 = vc.u32 %v3141, %v3145
        %v3150 = vsel %vm3149, 1, 0
        %v3151 = vadd.s32 %v3141, %v3145
        %v3152 = vadd.s32 %v3144, %v3150
        %vm3153 = vc.u32 %v3151, %v3147
        %v3154 = vsel %vm3153, 1, 0
        %v3155 = vadd.s32 %v3151, %v3147
        %v3156 = vadd.s32 %v3152, %v3154
        %v3157 = vadd.s32 %v3156, %v3146
        %v3158 = vadd.s32 %v3157, %v3148
        %v3159 = vmul.u32 %v3114, %v3105
        %v3160 = vadd.s32 %v3136, %v3155
        %vm3161 = vc.u32 %v3136, %v3155
        %v3162 = vadd.s32 %v3158, 1
        %v3163 = vsel %vm3161, %v3162, %v3158
        %v3164 = vadd.s32 %v3159, %v3163
        %v3165 = vadd.s32 %v3164, 536870912
        %v3166 = vshrl.u32 %v3165, 30
        %v3167 = vshll.u32 %v3166, 30
        %v3168 = vsub.s32 %v3164, %v3167
        %vm3169 = vcmp.lt.s32.totalorder %v3168, 0
        %v3170 = vsub.s32 0, %v3168
        %v3171 = vsel %vm3169, %v3170, %v3168
        %v3172 = vclz %v3171
        %v3173 = vsub.s32 %v3172, 2
        %vm3174 = vcmp.gt.s32.totalorder 0, %v3173
        %v3175 = vsel %vm3174, 0, %v3173
        %v3176 = vsub.s32 32, %v3175
        %v3177 = vshll.u32 %v3168, %v3175
        %v3178 = vshrl.u32 %v3160, %v3176
        %v3179 = vor.u32 %v3177, %v3178
        %v3180 = vsub.s32 4294967266, %v3175
        %v3181 = vadd.s32 %v3180, 127
        %v3182 = vshll.u32 %v3181, 23
        %v3183 = vor.u32 4788187, %v3182
        %v3184 = vand.u32 2147483647, %v3183
        %v3186 = vcvt.s32.f32 %v3179
        %v3187 = vmul.f32 %v3186, %v3184
        %v3188 = vxor.u32 %v3187, 2147483648
        %v3189 = vsel %vm3068, %v3188, %v3187
        %v3190 = vsub.s32 4, %v3166
        %v3191 = vsel %vm3068, %v3190, %v3166
        %v3192 = vsel %vm3067, %v428, %v3189
        %v3193 = vsel %vm3067, 0, %v3191
        %v3194 = vmul.f32 %v3192, %v3192
        %v3195 = vmul.f32 %v3194, -0.001358992
        %v3196 = vadd.f32 %v3195, 0.041655596
        %v3197 = vmul.f32 %v3194, %v3196
        %v3198 = vadd.f32 %v3197, -0.4999988
        %v3199 = vmul.f32 %v3194, %v3198
        %v3200 = vadd.f32 1.0, %v3199
        %v3201 = vmul.f32 %v3192, %v3192
        %v3202 = vmul.f32 %v3201, -0.00019511016
        %v3203 = vadd.f32 %v3202, 0.008332121
        %v3204 = vmul.f32 %v3201, %v3203
        %v3205 = vadd.f32 %v3204, -0.16666654
        %v3206 = vmul.f32 %v3201, %v3205
        %v3207 = vadd.f32 %v3206, 1.0
        %v3208 = vmul.f32 %v3207, %v3192
        %vm3209 = vweird.f32 %v428
        %v3210 = vadd.s32 %v3193, 3
        %v3211 = vand.u32 %v3210, 3
        %vm3212 = vcmp.lt.s32.totalorder %v3211, 2
        %vm3213 = vcmp.eq.s32.totalorder %v3211, 0
        %v3214 = vxor.u32 %v3208, 2147483648
        %v3215 = vsel %vm3213, %v3200, %v3214
        %vm3216 = vcmp.eq.s32.totalorder %v3211, 2
        %v3217 = vxor.u32 %v3200, 2147483648
        %v3218 = vsel %vm3216, %v3217, %v3208
        %v3219 = vsel %vm3212, %v3215, %v3218
        %v3220 = vsel %vm3209, nan, %v3219
        %v3221 = vand.u32 2147483647, %v429
        %vm3222 = vcmp.le.f32.partialorder %v3221, 0.7853982
        %vm3223 = vcmp.lt.s32.totalorder %v429, 0
        %v3224 = vand.u32 %v429, 2139095040
        %v3225 = vshrl.u32 %v3224, 23
        %v3226 = vsub.s32 %v3225, 127
        %v3227 = vand.u32 2147483647, %v429
        %v3228 = vand.u32 %v3227, 8388607
        %v3229 = vor.u32 %v3228, 8388608
        %v3230 = vsub.s32 0, %v3229
        %v3231 = vadd.s32 %v3226, 1
        %vm3232 = vcmp.gt.s32.totalorder %v3231, 0
        %v3233 = vsel %vm3232, %v3231, 0
        %v3234 = vshrl.u32 %v3233, 5
        %v3235 = vand.u32 %v3233, 31
        %v3236 = vsub.s32 32, %v3235
        %v3237 = vshrl.u32 683565275, %v3236
        %v3238 = vshll.u32 683565275, %v3235
        %v3239 = vshrl.u32 2475754826, %v3236
        %v3240 = vor.u32 %v3238, %v3239
        %v3241 = vshll.u32 2475754826, %v3235
        %v3242 = vshrl.u32 2131351028, %v3236
        %v3243 = vor.u32 %v3241, %v3242
        %v3244 = vshll.u32 2131351028, %v3235
        %v3245 = vshrl.u32 2102212464, %v3236
        %v3246 = vor.u32 %v3244, %v3245
        %v3247 = vshll.u32 2102212464, %v3235
        %v3248 = vshrl.u32 920167782, %v3236
        %v3249 = vor.u32 %v3247, %v3248
        %v3250 = vshll.u32 920167782, %v3235
        %v3251 = vshrl.u32 1326507024, %v3236
        %v3252 = vor.u32 %v3250, %v3251
        %vm3253 = vcmp.lt.s32.totalorder %v3234, 1
        %vm3254 = vcmp.lt.s32.totalorder %v3234, 2
        %vm3255 = vcmp.lt.s32.totalorder %v3234, 3
        %vm3256 = vcmp.lt.s32.totalorder %v3234, 4
        %v3257 = vsel %vm3253, %v3237, %v3240
        %v3258 = vsel %vm3256, %v3246, 2102212464
        %v3259 = vsel %vm3255, %v3243, %v3258
        %v3260 = vsel %vm3254, %v3257, %v3259
        %v3261 = vsel %vm3253, %v3240, %v3243
        %v3262 = vsel %vm3256, %v3249, 920167782
        %v3263 = vsel %vm3255, %v3246, %v3262
        %v3264 = vsel %vm3254, %v3261, %v3263
        %v3265 = vsel %vm3253, %v3243, %v3246
        %v3266 = vsel %vm3256, %v3252, 1326507024
        %v3267 = vsel %vm3255, %v3249, %v3266
        %v3268 = vsel %vm3254, %v3265, %v3267
        %v3269 = vshll.u32 %v3229, 8
        %v3270 = vand.u32 %v3269, 65535
        %v3271 = vshrl.u32 %v3269, 16
        %v3272 = vand.u32 %v3268, 65535
        %v3273 = vshrl.u32 %v3268, 16
        %v3274 = vmul.u32 %v3270, %v3272
        %v3275 = vmul.u32 %v3270, %v3273
        %v3276 = vmul.u32 %v3271, %v3272
        %v3277 = vmul.u32 %v3271, %v3273
        %v3278 = vshll.u32 %v3275, 16
        %v3279 = vshrl.u32 %v3275, 16
        %v3280 = vshll.u32 %v3276, 16
        %v3281 = vshrl.u32 %v3276, 16
        %vm3282 = vc.u32 %v3274, %v3278
        %v3283 = vsel %vm3282, 1, 0
        %v3284 = vadd.s32 %v3274, %v3278
        %v3285 = vadd.s32 %v3277, %v3283
        %vm3286 = vc.u32 %v3284, %v3280
        %v3287 = vsel %vm3286, 1, 0
        %v3288 = vadd.s32 %v3284, %v3280
        %v3289 = vadd.s32 %v3285, %v3287
        %v3290 = vadd.s32 %v3289, %v3279
        %v3291 = vadd.s32 %v3290, %v3281
        %v3292 = vand.u32 %v3269, 65535
        %v3293 = vshrl.u32 %v3269, 16
        %v3294 = vand.u32 %v3264, 65535
        %v3295 = vshrl.u32 %v3264, 16
        %v3296 = vmul.u32 %v3292, %v3294
        %v3297 = vmul.u32 %v3292, %v3295
        %v3298 = vmul.u32 %v3293, %v3294
        %v3299 = vmul.u32 %v3293, %v3295
        %v3300 = vshll.u32 %v3297, 16
        %v3301 = vshrl.u32 %v3297, 16
        %v3302 = vshll.u32 %v3298, 16
        %v3303 = vshrl.u32 %v3298, 16
        %vm3304 = vc.u32 %v3296, %v3300
        %v3305 = vsel %vm3304, 1, 0
        %v3306 = vadd.s32 %v3296, %v3300
        %v3307 = vadd.s32 %v3299, %v3305
        %vm3308 = vc.u32 %v3306, %v3302
        %v3309 = vsel %vm3308, 1, 0
        %v3310 = vadd.s32 %v3306, %v3302
        %v3311 = vadd.s32 %v3307, %v3309
        %v3312 = vadd.s32 %v3311, %v3301
        %v3313 = vadd.s32 %v3312, %v3303
        %v3314 = vmul.u32 %v3269, %v3260
        %v3315 = vadd.s32 %v3291, %v3310
        %vm3316 = vc.u32 %v3291, %v3310
        %v3317 = vadd.s32 %v3313, 1
        %v3318 = vsel %vm3316, %v3317, %v3313
        %v3319 = vadd.s32 %v3314, %v3318
        %v3320 = vadd.s32 %v3319, 536870912
        %v3321 = vshrl.u32 %v3320, 30
        %v3322 = vshll.u32 %v3321, 30
        %v3323 = vsub.s32 %v3319, %v3322
        %vm3324 = vcmp.lt.s32.totalorder %v3323, 0
        %v3325 = vsub.s32 0, %v3323
        %v3326 = vsel %vm3324, %v3325, %v3323
        %v3327 = vclz %v3326
        %v3328 = vsub.s32 %v3327, 2
        %vm3329 = vcmp.gt.s32.totalorder 0, %v3328
        %v3330 = vsel %vm3329, 0, %v3328
        %v3331 = vsub.s32 32, %v3330
        %v3332 = vshll.u32 %v3323, %v3330
        %v3333 = vshrl.u32 %v3315, %v3331
        %v3334 = vor.u32 %v3332, %v3333
        %v3335 = vsub.s32 4294967266, %v3330
        %v3336 = vadd.s32 %v3335, 127
        %v3337 = vshll.u32 %v3336, 23
        %v3338 = vor.u32 4788187, %v3337
        %v3339 = vand.u32 2147483647, %v3338
        %v3341 = vcvt.s32.f32 %v3334
        %v3342 = vmul.f32 %v3341, %v3339
        %v3343 = vxor.u32 %v3342, 2147483648
        %v3344 = vsel %vm3223, %v3343, %v3342
        %v3345 = vsub.s32 4, %v3321
        %v3346 = vsel %vm3223, %v3345, %v3321
        %v3347 = vsel %vm3222, %v429, %v3344
        %v3348 = vsel %vm3222, 0, %v3346
        %v3349 = vmul.f32 %v3347, %v3347
        %v3350 = vmul.f32 %v3349, -0.001358992
        %v3351 = vadd.f32 %v3350, 0.041655596
        %v3352 = vmul.f32 %v3349, %v3351
        %v3353 = vadd.f32 %v3352, -0.4999988
        %v3354 = vmul.f32 %v3349, %v3353
        %v3355 = vadd.f32 1.0, %v3354
        %v3356 = vmul.f32 %v3347, %v3347
        %v3357 = vmul.f32 %v3356, -0.00019511016
        %v3358 = vadd.f32 %v3357, 0.008332121
        %v3359 = vmul.f32 %v3356, %v3358
        %v3360 = vadd.f32 %v3359, -0.16666654
        %v3361 = vmul.f32 %v3356, %v3360
        %v3362 = vadd.f32 %v3361, 1.0
        %v3363 = vmul.f32 %v3362, %v3347
        %vm3364 = vweird.f32 %v429
        %v3365 = vadd.s32 %v3348, 3
        %v3366 = vand.u32 %v3365, 3
        %vm3367 = vcmp.lt.s32.totalorder %v3366, 2
        %vm3368 = vcmp.eq.s32.totalorder %v3366, 0
        %v3369 = vxor.u32 %v3363, 2147483648
        %v3370 = vsel %vm3368, %v3355, %v3369
        %vm3371 = vcmp.eq.s32.totalorder %v3366, 2
        %v3372 = vxor.u32 %v3355, 2147483648
        %v3373 = vsel %vm3371, %v3372, %v3363
        %v3374 = vsel %vm3367, %v3370, %v3373
        %v3375 = vsel %vm3364, nan, %v3374
        %v3376 = vand.u32 2147483647, %v430
        %vm3377 = vcmp.le.f32.partialorder %v3376, 0.7853982
        %vm3378 = vcmp.lt.s32.totalorder %v430, 0
        %v3379 = vand.u32 %v430, 2139095040
        %v3380 = vshrl.u32 %v3379, 23
        %v3381 = vsub.s32 %v3380, 127
        %v3382 = vand.u32 2147483647, %v430
        %v3383 = vand.u32 %v3382, 8388607
        %v3384 = vor.u32 %v3383, 8388608
        %v3385 = vsub.s32 0, %v3384
        %v3386 = vadd.s32 %v3381, 1
        %vm3387 = vcmp.gt.s32.totalorder %v3386, 0
        %v3388 = vsel %vm3387, %v3386, 0
        %v3389 = vshrl.u32 %v3388, 5
        %v3390 = vand.u32 %v3388, 31
        %v3391 = vsub.s32 32, %v3390
        %v3392 = vshrl.u32 683565275, %v3391
        %v3393 = vshll.u32 683565275, %v3390
        %v3394 = vshrl.u32 2475754826, %v3391
        %v3395 = vor.u32 %v3393, %v3394
        %v3396 = vshll.u32 2475754826, %v3390
        %v3397 = vshrl.u32 2131351028, %v3391
        %v3398 = vor.u32 %v3396, %v3397
        %v3399 = vshll.u32 2131351028, %v3390
        %v3400 = vshrl.u32 2102212464, %v3391
        %v3401 = vor.u32 %v3399, %v3400
        %v3402 = vshll.u32 2102212464, %v3390
        %v3403 = vshrl.u32 920167782, %v3391
        %v3404 = vor.u32 %v3402, %v3403
        %v3405 = vshll.u32 920167782, %v3390
        %v3406 = vshrl.u32 1326507024, %v3391
        %v3407 = vor.u32 %v3405, %v3406
        %vm3408 = vcmp.lt.s32.totalorder %v3389, 1
        %vm3409 = vcmp.lt.s32.totalorder %v3389, 2
        %vm3410 = vcmp.lt.s32.totalorder %v3389, 3
        %vm3411 = vcmp.lt.s32.totalorder %v3389, 4
        %v3412 = vsel %vm3408, %v3392, %v3395
        %v3413 = vsel %vm3411, %v3401, 2102212464
        %v3414 = vsel %vm3410, %v3398, %v3413
        %v3415 = vsel %vm3409, %v3412, %v3414
        %v3416 = vsel %vm3408, %v3395, %v3398
        %v3417 = vsel %vm3411, %v3404, 920167782
        %v3418 = vsel %vm3410, %v3401, %v3417
        %v3419 = vsel %vm3409, %v3416, %v3418
        %v3420 = vsel %vm3408, %v3398, %v3401
        %v3421 = vsel %vm3411, %v3407, 1326507024
        %v3422 = vsel %vm3410, %v3404, %v3421
        %v3423 = vsel %vm3409, %v3420, %v3422
        %v3424 = vshll.u32 %v3384, 8
        %v3425 = vand.u32 %v3424, 65535
        %v3426 = vshrl.u32 %v3424, 16
        %v3427 = vand.u32 %v3423, 65535
        %v3428 = vshrl.u32 %v3423, 16
        %v3429 = vmul.u32 %v3425, %v3427
        %v3430 = vmul.u32 %v3425, %v3428
        %v3431 = vmul.u32 %v3426, %v3427
        %v3432 = vmul.u32 %v3426, %v3428
        %v3433 = vshll.u32 %v3430, 16
        %v3434 = vshrl.u32 %v3430, 16
        %v3435 = vshll.u32 %v3431, 16
        %v3436 = vshrl.u32 %v3431, 16
        %vm3437 = vc.u32 %v3429, %v3433
        %v3438 = vsel %vm3437, 1, 0
        %v3439 = vadd.s32 %v3429, %v3433
        %v3440 = vadd.s32 %v3432, %v3438
        %vm3441 = vc.u32 %v3439, %v3435
        %v3442 = vsel %vm3441, 1, 0
        %v3443 = vadd.s32 %v3439, %v3435
        %v3444 = vadd.s32 %v3440, %v3442
        %v3445 = vadd.s32 %v3444, %v3434
        %v3446 = vadd.s32 %v3445, %v3436
        %v3447 = vand.u32 %v3424, 65535
        %v3448 = vshrl.u32 %v3424, 16
        %v3449 = vand.u32 %v3419, 65535
        %v3450 = vshrl.u32 %v3419, 16
        %v3451 = vmul.u32 %v3447, %v3449
        %v3452 = vmul.u32 %v3447, %v3450
        %v3453 = vmul.u32 %v3448, %v3449
        %v3454 = vmul.u32 %v3448, %v3450
        %v3455 = vshll.u32 %v3452, 16
        %v3456 = vshrl.u32 %v3452, 16
        %v3457 = vshll.u32 %v3453, 16
        %v3458 = vshrl.u32 %v3453, 16
        %vm3459 = vc.u32 %v3451, %v3455
        %v3460 = vsel %vm3459, 1, 0
        %v3461 = vadd.s32 %v3451, %v3455
        %v3462 = vadd.s32 %v3454, %v3460
        %vm3463 = vc.u32 %v3461, %v3457
        %v3464 = vsel %vm3463, 1, 0
        %v3465 = vadd.s32 %v3461, %v3457
        %v3466 = vadd.s32 %v3462, %v3464
        %v3467 = vadd.s32 %v3466, %v3456
        %v3468 = vadd.s32 %v3467, %v3458
        %v3469 = vmul.u32 %v3424, %v3415
        %v3470 = vadd.s32 %v3446, %v3465
        %vm3471 = vc.u32 %v3446, %v3465
        %v3472 = vadd.s32 %v3468, 1
        %v3473 = vsel %vm3471, %v3472, %v3468
        %v3474 = vadd.s32 %v3469, %v3473
        %v3475 = vadd.s32 %v3474, 536870912
        %v3476 = vshrl.u32 %v3475, 30
        %v3477 = vshll.u32 %v3476, 30
        %v3478 = vsub.s32 %v3474, %v3477
        %vm3479 = vcmp.lt.s32.totalorder %v3478, 0
        %v3480 = vsub.s32 0, %v3478
        %v3481 = vsel %vm3479, %v3480, %v3478
        %v3482 = vclz %v3481
        %v3483 = vsub.s32 %v3482, 2
        %vm3484 = vcmp.gt.s32.totalorder 0, %v3483
        %v3485 = vsel %vm3484, 0, %v3483
        %v3486 = vsub.s32 32, %v3485
        %v3487 = vshll.u32 %v3478, %v3485
        %v3488 = vshrl.u32 %v3470, %v3486
        %v3489 = vor.u32 %v3487, %v3488
        %v3490 = vsub.s32 4294967266, %v3485
        %v3491 = vadd.s32 %v3490, 127
        %v3492 = vshll.u32 %v3491, 23
        %v3493 = vor.u32 4788187, %v3492
        %v3494 = vand.u32 2147483647, %v3493
        %v3496 = vcvt.s32.f32 %v3489
        %v3497 = vmul.f32 %v3496, %v3494
        %v3498 = vxor.u32 %v3497, 2147483648
        %v3499 = vsel %vm3378, %v3498, %v3497
        %v3500 = vsub.s32 4, %v3476
        %v3501 = vsel %vm3378, %v3500, %v3476
        %v3502 = vsel %vm3377, %v430, %v3499
        %v3503 = vsel %vm3377, 0, %v3501
        %v3504 = vmul.f32 %v3502, %v3502
        %v3505 = vmul.f32 %v3504, -0.001358992
        %v3506 = vadd.f32 %v3505, 0.041655596
        %v3507 = vmul.f32 %v3504, %v3506
        %v3508 = vadd.f32 %v3507, -0.4999988
        %v3509 = vmul.f32 %v3504, %v3508
        %v3510 = vadd.f32 1.0, %v3509
        %v3511 = vmul.f32 %v3502, %v3502
        %v3512 = vmul.f32 %v3511, -0.00019511016
        %v3513 = vadd.f32 %v3512, 0.008332121
        %v3514 = vmul.f32 %v3511, %v3513
        %v3515 = vadd.f32 %v3514, -0.16666654
        %v3516 = vmul.f32 %v3511, %v3515
        %v3517 = vadd.f32 %v3516, 1.0
        %v3518 = vmul.f32 %v3517, %v3502
        %vm3519 = vweird.f32 %v430
        %v3520 = vadd.s32 %v3503, 3
        %v3521 = vand.u32 %v3520, 3
        %vm3522 = vcmp.lt.s32.totalorder %v3521, 2
        %vm3523 = vcmp.eq.s32.totalorder %v3521, 0
        %v3524 = vxor.u32 %v3518, 2147483648
        %v3525 = vsel %vm3523, %v3510, %v3524
        %vm3526 = vcmp.eq.s32.totalorder %v3521, 2
        %v3527 = vxor.u32 %v3510, 2147483648
        %v3528 = vsel %vm3526, %v3527, %v3518
        %v3529 = vsel %vm3522, %v3525, %v3528
        %v3530 = vsel %vm3519, nan, %v3529
        %3531 = vst [vmem:[%s137] sm:$0xff] %v585
        %3532 = vst [vmem:[%s137 + $0x8] sm:$0xff] %v740
        %3533 = vst [vmem:[%s137 + $0x10] sm:$0xff] %v895
        %3534 = vst [vmem:[%s137 + $0x18] sm:$0xff] %v1050
        %3535 = vst [vmem:[%s137 + $0x20] sm:$0xff] %v1205
        %3536 = vst [vmem:[%s137 + $0x28] sm:$0xff] %v1360
        %3537 = vst [vmem:[%s137 + $0x30] sm:$0xff] %v1515
        %3538 = vst [vmem:[%s137 + $0x38] sm:$0xff] %v1670
        %3539 = vst [vmem:[%s137 + $0x40] sm:$0xff] %v1825
        %3540 = vst [vmem:[%s137 + $0x48] sm:$0xff] %v1980
        %3541 = vst [vmem:[%s137 + $0x50] sm:$0xff] %v2135
        %3542 = vst [vmem:[%s137 + $0x58] sm:$0xff] %v2290
        %3543 = vst [vmem:[%s137 + $0x60] sm:$0xff] %v2445
        %3544 = vst [vmem:[%s137 + $0x68] sm:$0xff] %v2600
        %3545 = vst [vmem:[%s137 + $0x70] sm:$0xff] %v2755
        %3546 = vst [vmem:[%s137 + $0x78] sm:$0xff] %v2910
        %3547 = vst [vmem:[%s137 + $0x80] sm:$0xff] %v3065
        %3548 = vst [vmem:[%s137 + $0x88] sm:$0xff] %v3220
        %3549 = vst [vmem:[%s137 + $0x90] sm:$0xff] %v3375
        %3550 = vst [vmem:[%s137 + $0x98] sm:$0xff] %v3530
        %s3551 = sand.u32 %s71, 1
        %s3552 = scalar_lea.sflag [#allocation3], %s3551
        %s3553 = sand.u32 %s71, 1
        %s3554 = smul.addr %s3553, 160
        %s3555 = scalar_lea.vmem [#allocation2], %s3554
        // Predicated region
        $region29: #{tpu_custom_call.1} parent=27 // pred_check
          %p3556 = pneg %p81
        $region30: #{tpu_custom_call.1} parent=27 // pred_check_branch
          %3558 = sbr.rel (%p3556) target = $region32
        $region31: #{tpu_custom_call.1} parent=27 // pred_region
          %s3559 = smul.u32 20, %s16
          %3561 = vsyncadd %s3552, 0
          %s3562 = smul.addr %s3559, 8
          %s3563 = scalar_lea.hbm %s2, %s3562
          %s3564 = sshll.u32 %s3555, 4
          %s3565 = int_to_ptr.vmem [resolvable:$true] %s3564
          %s3566 = sshll.u32 %s3563, 4
          %s3567 = int_to_ptr.hbm [resolvable:$true] %s3566
          %3572 = dma.vmem_to_hbm [thread:$0]  %s3565, 2560, %s3567, %s3552, 128, 128, 8
        $region32: #{tpu_custom_call.1} parent=27 // pred_fallthru
          _
      $region28: #{tpu_custom_call.1} parent=5 // pred_fallthru
        _
      %p3573 = scmp.le.s32.totalorder 2, %s11
      // Predicated region
      $region33: #{tpu_custom_call.1} parent=5 // pred_check
        %p3574 = pneg %p3573
      $region34: #{tpu_custom_call.1} parent=5 // pred_check_branch
        %3576 = sbr.rel (%p3574) target = $region36
      $region35: #{tpu_custom_call.1} parent=5 // pred_region
        %s3577 = ssub.s32 %s11, 2
        // Predicated region
        $region37: #{tpu_custom_call.1} parent=35 // pred_check
          %p3578 = pneg %p87
        $region38: #{tpu_custom_call.1} parent=35 // pred_check_branch
          %3580 = sbr.rel (%p3578) target = $region40
        $region39: #{tpu_custom_call.1} parent=35 // pred_region
          %s3581 = sand.u32 %s72, 1
          %s3582 = scalar_lea.sflag [#allocation3], %s3581
          %s3583 = sand.u32 %s72, 1
          %s3584 = smul.addr %s3583, 160
          %s3585 = scalar_lea.vmem [#allocation2], %s3584
          %3587 = dma.done %s3582, 2560
        $region40: #{tpu_custom_call.1} parent=35 // pred_fallthru
          _
      $region36: #{tpu_custom_call.1} parent=5 // pred_fallthru
        _
    $region6: #{tpu_custom_call.1} parent=1 // loop_footer
      %s15 = sadd.s32 1, %s11
    $region7: #{tpu_custom_call.1} parent=1 // loop_footer_branch
      %10 = sbr.rel target = $region3
    $region8: #{tpu_custom_call.1} parent=1 // loop_exit
      _
    %3588 = vsyncpa [#allocation3], 1
    %s3589 = scalar_lea.sflag [#allocation3], 1
    %3590 = vsyncpa %s3589, 1

</llo_original>
